<compile_context>
chip_gen: v5e
topology: v5e:2x2
jax: 0.10.0
libtpu: 0.0.40
codegen_flags: <defaults>
</compile_context>

<pallas_src>
import jax
import jax.numpy as jnp
from jax import lax
from jax.experimental import pallas as pl
from jax.experimental.pallas import tpu as pltpu


def _adown_kernel(x1_ref, x2_ref, w1_ref, w2_ref, bn_ref, y_ref,
                  s1_ref, s2_ref, col_ref):
    # x1_ref/x2_ref: (Bb, 4, Ho, Wo, Ci) bf16 input parity planes,
    #                plane p = 2*rp + cp holds x[2r+rp, 2c+cp, :]
    # w1_ref: (9*Ci, Co) bf16 im2col-ordered 3x3 conv ; w2_ref: (Ci, Co) bf16 1x1 conv
    # bn_ref: (2, 2*Co) f32 rows=[scale, bias] for [branch1 | branch2] (folded BN)
    # y_ref:  (Bb, Ho*Wo, 2*Co) bf16 fused output
    # s1_ref/s2_ref: (4, Ho+1, Wo+1, Ci) bf16 padded phase planes of the pooled map
    # col_ref: (Ho, Wo, 9*Ci) bf16 im2col staging buffer
    Bb = x1_ref.shape[0]
    Ci = x1_ref.shape[-1]
    Ho, Wo = x1_ref.shape[2], x1_ref.shape[3]
    HoWo = Ho * Wo
    f32 = jnp.float32
    sdt = s1_ref.dtype

    # ---- border init: once per grid step; interiors rewritten per image ----
    def init_borders(s_ref, val):
        s_ref[:, 0:1, :, :] = jnp.full((4, 1, Wo + 1, Ci), val, sdt)
        s_ref[:, Ho:Ho + 1, :, :] = jnp.full((4, 1, Wo + 1, Ci), val, sdt)
        s_ref[:, :, 0:1, :] = jnp.full((4, Ho + 1, 1, Ci), val, sdt)
        s_ref[:, :, Wo:Wo + 1, :] = jnp.full((4, Ho + 1, 1, Ci), val, sdt)

    init_borders(s1_ref, 0.0)        # zero padding  -> stride-2 conv branch
    init_borders(s2_ref, -jnp.inf)   # -inf padding  -> stride-2 max-pool branch

    def pool_into_planes(x_ref, b, s_ref):
        # AvgPool2d(k=2, s=1, p=0), written directly as the 2x2-decimated phase planes
        # of the padded pooled map: plane q = 2*qh+qw holds padded[2r+qh, 2c+qw].
        # All reads/writes below are contiguous (no strided access in the kernel).
        x_ee = x_ref[b, 0, :, :, :].astype(f32)   # x[2r,   2c  ]
        x_eo = x_ref[b, 1, :, :, :].astype(f32)   # x[2r,   2c+1]
        x_oe = x_ref[b, 2, :, :, :].astype(f32)   # x[2r+1, 2c  ]
        x_oo = x_ref[b, 3, :, :, :].astype(f32)   # x[2r+1, 2c+1]
        se = x_ee + x_oe                           # rows (2r, 2r+1), even cols
        so = x_eo + x_oo                           # rows (2r, 2r+1), odd cols
        ue = x_oe[0:Ho - 1] + x_ee[1:Ho]           # rows (2r+1, 2r+2), even cols
        uo = x_oo[0:Ho - 1] + x_eo[1:Ho]           # rows (2r+1, 2r+2), odd cols
        q = f32(0.25)
        # plane 3 = padded(odd , odd ): pooled(2r,   2c  )
        s_ref[3, 0:Ho, 0:Wo, :] = ((se + so) * q).astype(sdt)
        # plane 2 = padded(odd , even): pooled(2r,   2c-1), c >= 1
        s_ref[2, 0:Ho, 1:Wo, :] = ((so[:, 0:Wo - 1] + se[:, 1:Wo]) * q).astype(sdt)
        # plane 1 = padded(even, odd ): pooled(2r-1, 2c  ), r >= 1
        s_ref[1, 1:Ho, 0:Wo, :] = ((ue + uo) * q).astype(sdt)
        # plane 0 = padded(even, even): pooled(2r-1, 2c-1), r, c >= 1
        s_ref[0, 1:Ho, 1:Wo, :] = ((uo[:, 0:Wo - 1] + ue[:, 1:Wo]) * q).astype(sdt)

    def tap(s_ref, kh, kw):
        # 3x3 stride-2 tap (kh, kw) == contiguous window of exactly one phase plane
        p = (kh % 2) * 2 + (kw % 2)
        return s_ref[p, kh // 2:kh // 2 + Ho, kw // 2:kw // 2 + Wo, :]   # (Ho, Wo, Ci)

    # constant loads hoisted out of the (short, bounded) batch loop
    w1 = w1_ref[...]
    w2 = w2_ref[...]
    scale = bn_ref[0:1, :]
    bias = bn_ref[1:2, :]

    # Bb is hard-capped (<=4) by the wrapper, so this static unroll stays small
    # (bounded live ranges / code size) and fully visible to the scheduler.
    for b in range(Bb):
        pool_into_planes(x1_ref, b, s1_ref)
        pool_into_planes(x2_ref, b, s2_ref)

        # ---- branch 1: 3x3 s=2 conv == ONE bf16 im2col matmul, f32 accumulation ----
        for t in range(9):
            kh, kw = t // 3, t % 3
            col_ref[:, :, t * Ci:(t + 1) * Ci] = tap(s1_ref, kh, kw)
        acc1 = jnp.dot(col_ref[...].reshape(HoWo, 9 * Ci), w1,
                       preferred_element_type=f32)

        # ---- branch 2: 3x3 s=2 max pool + 1x1 conv (bf16 operands, f32 acc) ----
        mx = tap(s2_ref, 0, 0)
        for t in range(1, 9):
            mx = jnp.maximum(mx, tap(s2_ref, t // 3, t % 3))
        acc2 = jnp.dot(mx.reshape(HoWo, Ci), w2, preferred_element_type=f32)

        # ---- fused BN + SiLU epilogue, single lane-dense bf16 store ----
        z = jnp.concatenate([acc1, acc2], axis=-1)              # (HoWo, 2*Co) f32
        z = z * scale + bias
        z = z * pl.reciprocal(1.0 + jnp.exp(-z), approx=True)   # SiLU (EUP reciprocal)
        y_ref[b] = z.astype(y_ref.dtype)


def _ceil_to(v, m):
    return ((v + m - 1) // m) * m


def _vmem_tile_bytes(shape, dtype):
    # VMEM footprint of one buffer including (sublane, lane) tile padding.
    itemsize = jnp.dtype(dtype).itemsize
    dims = list(shape)
    if len(dims) >= 1:
        dims[-1] = _ceil_to(dims[-1], 128)
    if len(dims) >= 2:
        dims[-2] = _ceil_to(dims[-2], 32 // itemsize)
    n = 1
    for d in dims:
        n *= int(d)
    return n * itemsize


def _vmem_cap_bytes():
    # per-generation clamp (~96 MiB on 128-MiB parts, ~48 MiB on v7x)
    try:
        cap = int(pltpu.get_tpu_info().vmem_capacity_bytes)
    except Exception:
        cap = 128 * 1024 * 1024
    return (cap * 3) // 4


def adown_forward(x, w1, w2, bn1_scale, bn1_bias, bn2_scale, bn2_bias,
                  *, batch_block=None):
    """ADown forward.  x: (N, C, H, W) NCHW (PyTorch convention).  Returns bf16 NCHW."""
    N, C, H, W = x.shape
    assert C % 2 == 0 and H % 2 == 0 and W % 2 == 0 and H >= 4 and W >= 4
    Ci = C // 2
    Co = w1.shape[0]
    Ho, Wo = H // 2, W // 2

    # --- layout glue: the (mandatory) NCHW -> kernel-layout transpose also emits the
    #     2x2 spatial parity planes, so the kernel never needs strided reads.
    #     xp[n, p, r, c, ch] = x[n, ch, 2r + p//2, 2c + p%2]
    xp = x.reshape(N, C, Ho, 2, Wo, 2)
    xp = jnp.transpose(xp, (0, 3, 5, 2, 4, 1)).astype(jnp.bfloat16)
    xp = xp.reshape(N, 4, Ho, Wo, C)
    x1 = xp[..., :Ci]
    x2 = xp[..., Ci:]

    # conv weights: torch OIHW -> im2col layout (9*Ci, Co) / (Ci, Co), bf16 MXU operands
    w1_k = jnp.transpose(w1, (2, 3, 1, 0)).reshape(9 * Ci, Co).astype(jnp.bfloat16)
    w2_k = jnp.transpose(w2[:, :, 0, 0], (1, 0)).astype(jnp.bfloat16)
    # folded BatchNorm of both branches fused into a single (2, 2*Co) f32 constant block
    bn = jnp.stack([jnp.concatenate([bn1_scale, bn2_scale]),
                    jnp.concatenate([bn1_bias, bn2_bias])]).astype(jnp.float32)

    # --- batch blocking: small hard cap (bounded in-kernel unroll) and always keep
    #     >= 2 grid steps when N >= 2 so both v7x TensorCores get work.
    if batch_block is None:
        per_image_bytes = 4 * Ho * Wo * C * 2          # bf16 parity-plane slab
        batch_block = 4 if per_image_bytes <= (256 << 10) else 1
    batch_block = max(1, min(batch_block, 4, max(1, N // 2), N))
    while N % batch_block:
        batch_block -= 1
    Bb = batch_block
    grid = (N // Bb,)

    # --- accurate VMEM budget (tile-padding aware), 25% headroom, per-gen clamp ---
    bf16 = jnp.bfloat16
    est = 0
    est += 2 * 2 * _vmem_tile_bytes((Bb, 4, Ho, Wo, Ci), bf16)     # x1,x2 dbl-buffered
    est += 2 * _vmem_tile_bytes((Bb, Ho * Wo, 2 * Co), bf16)       # output dbl-buffered
    est += 2 * (_vmem_tile_bytes((9 * Ci, Co), bf16)
                + _vmem_tile_bytes((Ci, Co), bf16)
                + _vmem_tile_bytes((2, 2 * Co), jnp.float32))      # weights + bn
    est += 2 * _vmem_tile_bytes((4, Ho + 1, Wo + 1, Ci), bf16)     # phase-plane scratch
    est += _vmem_tile_bytes((Ho, Wo, 9 * Ci), bf16)                # im2col scratch
    est += 8 * _vmem_tile_bytes((Ho, Wo, Ci), jnp.float32)         # pooling temporaries
    est += 3 * _vmem_tile_bytes((Ho * Wo, 2 * Co), jnp.float32)    # epilogue temporaries
    est = int(est * 1.25) + (2 << 20)                              # headroom + internal
    vmem_limit = max(min(est, _vmem_cap_bytes()), 16 * 1024 * 1024)
    # TODO(synk): when est exceeds the v7x clamp, add a row-tiled grid axis with a
    # 1-row halo (and consider pl.Buffered(3) inputs on v5e/v6e after row-tiling).

    y = pl.pallas_call(
        _adown_kernel,
        out_shape=jax.ShapeDtypeStruct((N, Ho * Wo, 2 * Co), jnp.bfloat16),
        grid=grid,
        in_specs=[
            pl.BlockSpec((Bb, 4, Ho, Wo, Ci), lambda n: (n, 0, 0, 0, 0)),
            pl.BlockSpec((Bb, 4, Ho, Wo, Ci), lambda n: (n, 0, 0, 0, 0)),
            pl.BlockSpec((9 * Ci, Co), lambda n: (0, 0)),
            pl.BlockSpec((Ci, Co), lambda n: (0, 0)),
            pl.BlockSpec((2, 2 * Co), lambda n: (0, 0)),
        ],
        out_specs=pl.BlockSpec((Bb, Ho * Wo, 2 * Co), lambda n: (n, 0, 0)),
        scratch_shapes=[
            pltpu.VMEM((4, Ho + 1, Wo + 1, Ci), jnp.bfloat16),   # zero-padded planes
            pltpu.VMEM((4, Ho + 1, Wo + 1, Ci), jnp.bfloat16),   # -inf-padded planes
            pltpu.VMEM((Ho, Wo, 9 * Ci), jnp.bfloat16),          # im2col staging
        ],
        compiler_params=pltpu.CompilerParams(
            dimension_semantics=("parallel",),
            vmem_limit_bytes=vmem_limit,
        ),
    )(x1, x2, w1_k, w2_k, bn)

    # --- back to NCHW (channel order already [branch1 | branch2]); stays bf16.
    # TODO(synk): return NHWC (skip this transpose) when the consumer allows it.
    return jnp.transpose(y.reshape(N, Ho, Wo, 2 * Co), (0, 3, 1, 2))


def adown_reference(x, w1, w2, bn1_scale, bn1_bias, bn2_scale, bn2_bias,
                    *, match_kernel_precision=True):
    """Pure-JAX (XLA) reference mirroring the PyTorch forward, NCHW, f32."""
    C = x.shape[1]
    Ci = C // 2
    a = lax.reduce_window(x, 0.0, lax.add, (1, 1, 2, 2), (1, 1, 1, 1), 'VALID') / 4.0
    if match_kernel_precision:
        # mirror the kernel's bf16 storage of pooled activations / conv weights, so the
        # comparison only sees accumulation-order + output-rounding differences
        a = a.astype(jnp.bfloat16).astype(jnp.float32)
        w1 = w1.astype(jnp.bfloat16).astype(jnp.float32)
        w2 = w2.astype(jnp.bfloat16).astype(jnp.float32)
    a1, a2 = a[:, :Ci], a[:, Ci:]
    z1 = lax.conv_general_dilated(a1, w1, (2, 2), ((1, 1), (1, 1)),
                                  dimension_numbers=('NCHW', 'OIHW', 'NCHW'))
    z1 = z1 * bn1_scale[None, :, None, None] + bn1_bias[None, :, None, None]
    z1 = z1 * jax.nn.sigmoid(z1)
    m = lax.reduce_window(a2, -jnp.inf, lax.max, (1, 1, 3, 3), (1, 1, 2, 2),
                          ((0, 0), (0, 0), (1, 1), (1, 1)))
    z2 = lax.conv_general_dilated(m, w2, (1, 1), 'VALID',
                                  dimension_numbers=('NCHW', 'OIHW', 'NCHW'))
    z2 = z2 * bn2_scale[None, :, None, None] + bn2_bias[None, :, None, None]
    z2 = z2 * jax.nn.sigmoid(z2)
    return jnp.concatenate([z1, z2], axis=1)


if __name__ == "__main__":
    key = jax.random.PRNGKey(0)
    in_channels, out_channels = 4, 8
    N, H, W = 2, 16, 16
    Ci, Co = in_channels // 2, out_channels // 2
    eps = 0.001

    ks = jax.random.split(key, 11)
    x = jax.random.normal(ks[0], (N, in_channels, H, W), jnp.float32)
    w1 = jax.random.normal(ks[1], (Co, Ci, 3, 3), jnp.float32) * 0.2
    w2 = jax.random.normal(ks[2], (Co, Ci, 1, 1), jnp.float32) * 0.2
    g1 = jax.random.uniform(ks[3], (Co,), jnp.float32, 0.5, 1.5)
    b1 = jax.random.normal(ks[4], (Co,), jnp.float32) * 0.1
    m1 = jax.random.normal(ks[5], (Co,), jnp.float32) * 0.1
    v1 = jax.random.uniform(ks[6], (Co,), jnp.float32, 0.5, 1.5)
    g2 = jax.random.uniform(ks[7], (Co,), jnp.float32, 0.5, 1.5)
    b2 = jax.random.normal(ks[8], (Co,), jnp.float32) * 0.1
    m2 = jax.random.normal(ks[9], (Co,), jnp.float32) * 0.1
    v2 = jax.random.uniform(ks[10], (Co,), jnp.float32, 0.5, 1.5)

    # fold eval-mode BatchNorm (eps=0.001) into per-channel scale/bias
    bn1_scale = g1 / jnp.sqrt(v1 + eps)
    bn1_bias = b1 - m1 * bn1_scale
    bn2_scale = g2 / jnp.sqrt(v2 + eps)
    bn2_bias = b2 - m2 * bn2_scale

    # quantize activations to bf16 once so kernel and reference see identical inputs
    x_bf16 = x.astype(jnp.bfloat16)

    out = adown_forward(x_bf16, w1, w2, bn1_scale, bn1_bias, bn2_scale, bn2_bias)
    out = jax.block_until_ready(out)
    assert out.shape == (N, out_channels, H // 2, W // 2), out.shape

    ref = adown_reference(x_bf16.astype(jnp.float32), w1, w2,
                          bn1_scale, bn1_bias, bn2_scale, bn2_bias)
    err = float(jnp.max(jnp.abs(out.astype(jnp.float32) - ref)))
    # kernel keeps pooled maps / MXU operands / output in bf16 (f32 accumulation);
    # the reference mirrors operand quantization, so the residual is ~1 bf16 output ulp
    if err > 3e-2:
        raise AssertionError(f"Pallas result mismatch vs reference: max|err|={err}")

    print("KERNEL_OK")
</pallas_src>

<mosaic_0001>
module attributes {stable_mosaic.version = 11 : i64} {
  func.func @_adown_kernel(%arg0: i32, %arg1: memref<1x4x8x8x2xbf16, #tpu.memory_space<vmem>>, %arg2: memref<1x4x8x8x2xbf16, #tpu.memory_space<vmem>>, %arg3: memref<18x4xbf16, #tpu.memory_space<vmem>>, %arg4: memref<2x4xbf16, #tpu.memory_space<vmem>>, %arg5: memref<2x8xf32, #tpu.memory_space<vmem>>, %arg6: memref<1x64x8xbf16, #tpu.memory_space<vmem>>, %arg7: memref<4x9x9x2xbf16, #tpu.memory_space<vmem>>, %arg8: memref<4x9x9x2xbf16, #tpu.memory_space<vmem>>, %arg9: memref<8x8x18xbf16, #tpu.memory_space<vmem>>) attributes {dimension_semantics = [#tpu.dimension_semantics<parallel>], iteration_bounds = array<i64: 2>, scalar_prefetch = 0 : i64, scratch_operands = 3 : i64, tpu.core_type = #tpu.core_type<tc>, window_params = [{transform_indices = @transform_0, window_bounds = array<i64: 1, 4, 8, 8, 2>}, {transform_indices = @transform_1, window_bounds = array<i64: 1, 4, 8, 8, 2>}, {pipeline_mode = #tpu.pipeline_mode<synchronous>, transform_indices = @transform_2, window_bounds = array<i64: 18, 4>}, {pipeline_mode = #tpu.pipeline_mode<synchronous>, transform_indices = @transform_3, window_bounds = array<i64: 2, 4>}, {pipeline_mode = #tpu.pipeline_mode<synchronous>, transform_indices = @transform_4, window_bounds = array<i64: 2, 8>}, {transform_indices = @transform_5, window_bounds = array<i64: 1, 64, 8>}]} {
    %cst = arith.constant 0.000000e+00 : bf16
    %0 = vector.broadcast %cst : bf16 to vector<4x1x9x2xbf16>
    %c0 = arith.constant 0 : index
    %c0_0 = arith.constant 0 : index
    %c0_1 = arith.constant 0 : index
    %c0_2 = arith.constant 0 : index
    %1 = vector.load %arg7[%c0, %c0_0, %c0_1, %c0_2] : memref<4x9x9x2xbf16, #tpu.memory_space<vmem>>, vector<4x1x9x2xbf16>
    tpu.vector_store %arg7[%c0, %c0_0, %c0_1, %c0_2], %0 {strides = array<i32>} : memref<4x9x9x2xbf16, #tpu.memory_space<vmem>>, vector<4x1x9x2xbf16>,
    %cst_3 = arith.constant 0.000000e+00 : bf16
    %2 = vector.broadcast %cst_3 : bf16 to vector<4x1x9x2xbf16>
    %c0_4 = arith.constant 0 : index
    %c8 = arith.constant 8 : index
    %c0_5 = arith.constant 0 : index
    %c0_6 = arith.constant 0 : index
    %3 = vector.load %arg7[%c0_4, %c8, %c0_5, %c0_6] : memref<4x9x9x2xbf16, #tpu.memory_space<vmem>>, vector<4x1x9x2xbf16>
    tpu.vector_store %arg7[%c0_4, %c8, %c0_5, %c0_6], %2 {strides = array<i32>} : memref<4x9x9x2xbf16, #tpu.memory_space<vmem>>, vector<4x1x9x2xbf16>,
    %cst_7 = arith.constant 0.000000e+00 : bf16
    %4 = vector.broadcast %cst_7 : bf16 to vector<4x9x1x2xbf16>
    %c0_8 = arith.constant 0 : index
    %c0_9 = arith.constant 0 : index
    %c0_10 = arith.constant 0 : index
    %c0_11 = arith.constant 0 : index
    %5 = vector.load %arg7[%c0_8, %c0_9, %c0_10, %c0_11] : memref<4x9x9x2xbf16, #tpu.memory_space<vmem>>, vector<4x9x1x2xbf16>
    tpu.vector_store %arg7[%c0_8, %c0_9, %c0_10, %c0_11], %4 {strides = array<i32>} : memref<4x9x9x2xbf16, #tpu.memory_space<vmem>>, vector<4x9x1x2xbf16>,
    %cst_12 = arith.constant 0.000000e+00 : bf16
    %6 = vector.broadcast %cst_12 : bf16 to vector<4x9x1x2xbf16>
    %c0_13 = arith.constant 0 : index
    %c0_14 = arith.constant 0 : index
    %c8_15 = arith.constant 8 : index
    %c0_16 = arith.constant 0 : index
    %7 = vector.load %arg7[%c0_13, %c0_14, %c8_15, %c0_16] : memref<4x9x9x2xbf16, #tpu.memory_space<vmem>>, vector<4x9x1x2xbf16>
    tpu.vector_store %arg7[%c0_13, %c0_14, %c8_15, %c0_16], %6 {strides = array<i32>} : memref<4x9x9x2xbf16, #tpu.memory_space<vmem>>, vector<4x9x1x2xbf16>,
    %cst_17 = arith.constant 0xFF80 : bf16
    %8 = vector.broadcast %cst_17 : bf16 to vector<4x1x9x2xbf16>
    %c0_18 = arith.constant 0 : index
    %c0_19 = arith.constant 0 : index
    %c0_20 = arith.constant 0 : index
    %c0_21 = arith.constant 0 : index
    %9 = vector.load %arg8[%c0_18, %c0_19, %c0_20, %c0_21] : memref<4x9x9x2xbf16, #tpu.memory_space<vmem>>, vector<4x1x9x2xbf16>
    tpu.vector_store %arg8[%c0_18, %c0_19, %c0_20, %c0_21], %8 {strides = array<i32>} : memref<4x9x9x2xbf16, #tpu.memory_space<vmem>>, vector<4x1x9x2xbf16>,
    %cst_22 = arith.constant 0xFF80 : bf16
    %10 = vector.broadcast %cst_22 : bf16 to vector<4x1x9x2xbf16>
    %c0_23 = arith.constant 0 : index
    %c8_24 = arith.constant 8 : index
    %c0_25 = arith.constant 0 : index
    %c0_26 = arith.constant 0 : index
    %11 = vector.load %arg8[%c0_23, %c8_24, %c0_25, %c0_26] : memref<4x9x9x2xbf16, #tpu.memory_space<vmem>>, vector<4x1x9x2xbf16>
    tpu.vector_store %arg8[%c0_23, %c8_24, %c0_25, %c0_26], %10 {strides = array<i32>} : memref<4x9x9x2xbf16, #tpu.memory_space<vmem>>, vector<4x1x9x2xbf16>,
    %cst_27 = arith.constant 0xFF80 : bf16
    %12 = vector.broadcast %cst_27 : bf16 to vector<4x9x1x2xbf16>
    %c0_28 = arith.constant 0 : index
    %c0_29 = arith.constant 0 : index
    %c0_30 = arith.constant 0 : index
    %c0_31 = arith.constant 0 : index
    %13 = vector.load %arg8[%c0_28, %c0_29, %c0_30, %c0_31] : memref<4x9x9x2xbf16, #tpu.memory_space<vmem>>, vector<4x9x1x2xbf16>
    tpu.vector_store %arg8[%c0_28, %c0_29, %c0_30, %c0_31], %12 {strides = array<i32>} : memref<4x9x9x2xbf16, #tpu.memory_space<vmem>>, vector<4x9x1x2xbf16>,
    %cst_32 = arith.constant 0xFF80 : bf16
    %14 = vector.broadcast %cst_32 : bf16 to vector<4x9x1x2xbf16>
    %c0_33 = arith.constant 0 : index
    %c0_34 = arith.constant 0 : index
    %c8_35 = arith.constant 8 : index
    %c0_36 = arith.constant 0 : index
    %15 = vector.load %arg8[%c0_33, %c0_34, %c8_35, %c0_36] : memref<4x9x9x2xbf16, #tpu.memory_space<vmem>>, vector<4x9x1x2xbf16>
    tpu.vector_store %arg8[%c0_33, %c0_34, %c8_35, %c0_36], %14 {strides = array<i32>} : memref<4x9x9x2xbf16, #tpu.memory_space<vmem>>, vector<4x9x1x2xbf16>,
    %c0_37 = arith.constant 0 : index
    %c0_38 = arith.constant 0 : index
    %16 = vector.load %arg3[%c0_37, %c0_38] : memref<18x4xbf16, #tpu.memory_space<vmem>>, vector<18x4xbf16>
    %c0_39 = arith.constant 0 : index
    %c0_40 = arith.constant 0 : index
    %17 = vector.load %arg4[%c0_39, %c0_40] : memref<2x4xbf16, #tpu.memory_space<vmem>>, vector<2x4xbf16>
    %c0_41 = arith.constant 0 : index
    %c0_42 = arith.constant 0 : index
    %18 = vector.load %arg5[%c0_41, %c0_42] : memref<2x8xf32, #tpu.memory_space<vmem>>, vector<1x8xf32>
    %c1 = arith.constant 1 : index
    %c0_43 = arith.constant 0 : index
    %19 = vector.load %arg5[%c1, %c0_43] : memref<2x8xf32, #tpu.memory_space<vmem>>, vector<1x8xf32>
    %c0_44 = arith.constant 0 : index
    %c0_45 = arith.constant 0 : index
    %c0_46 = arith.constant 0 : index
    %c0_47 = arith.constant 0 : index
    %c0_48 = arith.constant 0 : index
    %20 = vector.load %arg1[%c0_44, %c0_45, %c0_46, %c0_47, %c0_48] : memref<1x4x8x8x2xbf16, #tpu.memory_space<vmem>>, vector<1x1x8x8x2xbf16>
    %21 = vector.shape_cast %20 : vector<1x1x8x8x2xbf16> to vector<8x8x2xbf16>
    %22 = arith.extf %21 : vector<8x8x2xbf16> to vector<8x8x2xf32>
    %c0_49 = arith.constant 0 : index
    %c1_50 = arith.constant 1 : index
    %c0_51 = arith.constant 0 : index
    %c0_52 = arith.constant 0 : index
    %c0_53 = arith.constant 0 : index
    %23 = vector.load %arg1[%c0_49, %c1_50, %c0_51, %c0_52, %c0_53] : memref<1x4x8x8x2xbf16, #tpu.memory_space<vmem>>, vector<1x1x8x8x2xbf16>
    %24 = vector.shape_cast %23 : vector<1x1x8x8x2xbf16> to vector<8x8x2xbf16>
    %25 = arith.extf %24 : vector<8x8x2xbf16> to vector<8x8x2xf32>
    %c0_54 = arith.constant 0 : index
    %c2 = arith.constant 2 : index
    %c0_55 = arith.constant 0 : index
    %c0_56 = arith.constant 0 : index
    %c0_57 = arith.constant 0 : index
    %26 = vector.load %arg1[%c0_54, %c2, %c0_55, %c0_56, %c0_57] : memref<1x4x8x8x2xbf16, #tpu.memory_space<vmem>>, vector<1x1x8x8x2xbf16>
    %27 = vector.shape_cast %26 : vector<1x1x8x8x2xbf16> to vector<8x8x2xbf16>
    %28 = arith.extf %27 : vector<8x8x2xbf16> to vector<8x8x2xf32>
    %c0_58 = arith.constant 0 : index
    %c3 = arith.constant 3 : index
    %c0_59 = arith.constant 0 : index
    %c0_60 = arith.constant 0 : index
    %c0_61 = arith.constant 0 : index
    %29 = vector.load %arg1[%c0_58, %c3, %c0_59, %c0_60, %c0_61] : memref<1x4x8x8x2xbf16, #tpu.memory_space<vmem>>, vector<1x1x8x8x2xbf16>
    %30 = vector.shape_cast %29 : vector<1x1x8x8x2xbf16> to vector<8x8x2xbf16>
    %31 = arith.extf %30 : vector<8x8x2xbf16> to vector<8x8x2xf32>
    %32 = arith.addf %22, %28 : vector<8x8x2xf32>
    %33 = arith.addf %25, %31 : vector<8x8x2xf32>
    %34 = vector.extract_strided_slice %28 {offsets = [0, 0, 0], sizes = [7, 8, 2], strides = [1, 1, 1]} : vector<8x8x2xf32> to vector<7x8x2xf32>
    %35 = vector.extract_strided_slice %22 {offsets = [1, 0, 0], sizes = [7, 8, 2], strides = [1, 1, 1]} : vector<8x8x2xf32> to vector<7x8x2xf32>
    %36 = arith.addf %34, %35 : vector<7x8x2xf32>
    %37 = vector.extract_strided_slice %31 {offsets = [0, 0, 0], sizes = [7, 8, 2], strides = [1, 1, 1]} : vector<8x8x2xf32> to vector<7x8x2xf32>
    %38 = vector.extract_strided_slice %25 {offsets = [1, 0, 0], sizes = [7, 8, 2], strides = [1, 1, 1]} : vector<8x8x2xf32> to vector<7x8x2xf32>
    %39 = arith.addf %37, %38 : vector<7x8x2xf32>
    %40 = arith.addf %32, %33 : vector<8x8x2xf32>
    %cst_62 = arith.constant 2.500000e-01 : f32
    %41 = vector.broadcast %cst_62 : f32 to vector<8x8x2xf32>
    %42 = arith.mulf %40, %41 : vector<8x8x2xf32>
    %43 = arith.truncf %42 : vector<8x8x2xf32> to vector<8x8x2xbf16>
    %c3_63 = arith.constant 3 : index
    %c0_64 = arith.constant 0 : index
    %c0_65 = arith.constant 0 : index
    %c0_66 = arith.constant 0 : index
    %44 = vector.load %arg7[%c3_63, %c0_64, %c0_65, %c0_66] : memref<4x9x9x2xbf16, #tpu.memory_space<vmem>>, vector<1x8x8x2xbf16>
    %45 = vector.shape_cast %44 : vector<1x8x8x2xbf16> to vector<8x8x2xbf16>
    %46 = vector.shape_cast %43 : vector<8x8x2xbf16> to vector<1x8x8x2xbf16>
    tpu.vector_store %arg7[%c3_63, %c0_64, %c0_65, %c0_66], %46 {strides = array<i32>} : memref<4x9x9x2xbf16, #tpu.memory_space<vmem>>, vector<1x8x8x2xbf16>,
    %47 = vector.extract_strided_slice %33 {offsets = [0, 0, 0], sizes = [8, 7, 2], strides = [1, 1, 1]} : vector<8x8x2xf32> to vector<8x7x2xf32>
    %48 = vector.extract_strided_slice %32 {offsets = [0, 1, 0], sizes = [8, 7, 2], strides = [1, 1, 1]} : vector<8x8x2xf32> to vector<8x7x2xf32>
    %49 = arith.addf %47, %48 : vector<8x7x2xf32>
    %cst_67 = arith.constant 2.500000e-01 : f32
    %50 = vector.broadcast %cst_67 : f32 to vector<8x7x2xf32>
    %51 = arith.mulf %49, %50 : vector<8x7x2xf32>
    %52 = arith.truncf %51 : vector<8x7x2xf32> to vector<8x7x2xbf16>
    %c2_68 = arith.constant 2 : index
    %c0_69 = arith.constant 0 : index
    %c1_70 = arith.constant 1 : index
    %c0_71 = arith.constant 0 : index
    %53 = vector.load %arg7[%c2_68, %c0_69, %c1_70, %c0_71] : memref<4x9x9x2xbf16, #tpu.memory_space<vmem>>, vector<1x8x7x2xbf16>
    %54 = vector.shape_cast %53 : vector<1x8x7x2xbf16> to vector<8x7x2xbf16>
    %55 = vector.shape_cast %52 : vector<8x7x2xbf16> to vector<1x8x7x2xbf16>
    tpu.vector_store %arg7[%c2_68, %c0_69, %c1_70, %c0_71], %55 {strides = array<i32>} : memref<4x9x9x2xbf16, #tpu.memory_space<vmem>>, vector<1x8x7x2xbf16>,
    %56 = arith.addf %36, %39 : vector<7x8x2xf32>
    %cst_72 = arith.constant 2.500000e-01 : f32
    %57 = vector.broadcast %cst_72 : f32 to vector<7x8x2xf32>
    %58 = arith.mulf %56, %57 : vector<7x8x2xf32>
    %59 = arith.truncf %58 : vector<7x8x2xf32> to vector<7x8x2xbf16>
    %c1_73 = arith.constant 1 : index
    %c1_74 = arith.constant 1 : index
    %c0_75 = arith.constant 0 : index
    %c0_76 = arith.constant 0 : index
    %60 = vector.load %arg7[%c1_73, %c1_74, %c0_75, %c0_76] : memref<4x9x9x2xbf16, #tpu.memory_space<vmem>>, vector<1x7x8x2xbf16>
    %61 = vector.shape_cast %60 : vector<1x7x8x2xbf16> to vector<7x8x2xbf16>
    %62 = vector.shape_cast %59 : vector<7x8x2xbf16> to vector<1x7x8x2xbf16>
    tpu.vector_store %arg7[%c1_73, %c1_74, %c0_75, %c0_76], %62 {strides = array<i32>} : memref<4x9x9x2xbf16, #tpu.memory_space<vmem>>, vector<1x7x8x2xbf16>,
    %63 = vector.extract_strided_slice %39 {offsets = [0, 0, 0], sizes = [7, 7, 2], strides = [1, 1, 1]} : vector<7x8x2xf32> to vector<7x7x2xf32>
    %64 = vector.extract_strided_slice %36 {offsets = [0, 1, 0], sizes = [7, 7, 2], strides = [1, 1, 1]} : vector<7x8x2xf32> to vector<7x7x2xf32>
    %65 = arith.addf %63, %64 : vector<7x7x2xf32>
    %cst_77 = arith.constant 2.500000e-01 : f32
    %66 = vector.broadcast %cst_77 : f32 to vector<7x7x2xf32>
    %67 = arith.mulf %65, %66 : vector<7x7x2xf32>
    %68 = arith.truncf %67 : vector<7x7x2xf32> to vector<7x7x2xbf16>
    %c0_78 = arith.constant 0 : index
    %c1_79 = arith.constant 1 : index
    %c1_80 = arith.constant 1 : index
    %c0_81 = arith.constant 0 : index
    %69 = vector.load %arg7[%c0_78, %c1_79, %c1_80, %c0_81] : memref<4x9x9x2xbf16, #tpu.memory_space<vmem>>, vector<1x7x7x2xbf16>
    %70 = vector.shape_cast %69 : vector<1x7x7x2xbf16> to vector<7x7x2xbf16>
    %71 = vector.shape_cast %68 : vector<7x7x2xbf16> to vector<1x7x7x2xbf16>
    tpu.vector_store %arg7[%c0_78, %c1_79, %c1_80, %c0_81], %71 {strides = array<i32>} : memref<4x9x9x2xbf16, #tpu.memory_space<vmem>>, vector<1x7x7x2xbf16>,
    %c0_82 = arith.constant 0 : index
    %c0_83 = arith.constant 0 : index
    %c0_84 = arith.constant 0 : index
    %c0_85 = arith.constant 0 : index
    %c0_86 = arith.constant 0 : index
    %72 = vector.load %arg2[%c0_82, %c0_83, %c0_84, %c0_85, %c0_86] : memref<1x4x8x8x2xbf16, #tpu.memory_space<vmem>>, vector<1x1x8x8x2xbf16>
    %73 = vector.shape_cast %72 : vector<1x1x8x8x2xbf16> to vector<8x8x2xbf16>
    %74 = arith.extf %73 : vector<8x8x2xbf16> to vector<8x8x2xf32>
    %c0_87 = arith.constant 0 : index
    %c1_88 = arith.constant 1 : index
    %c0_89 = arith.constant 0 : index
    %c0_90 = arith.constant 0 : index
    %c0_91 = arith.constant 0 : index
    %75 = vector.load %arg2[%c0_87, %c1_88, %c0_89, %c0_90, %c0_91] : memref<1x4x8x8x2xbf16, #tpu.memory_space<vmem>>, vector<1x1x8x8x2xbf16>
    %76 = vector.shape_cast %75 : vector<1x1x8x8x2xbf16> to vector<8x8x2xbf16>
    %77 = arith.extf %76 : vector<8x8x2xbf16> to vector<8x8x2xf32>
    %c0_92 = arith.constant 0 : index
    %c2_93 = arith.constant 2 : index
    %c0_94 = arith.constant 0 : index
    %c0_95 = arith.constant 0 : index
    %c0_96 = arith.constant 0 : index
    %78 = vector.load %arg2[%c0_92, %c2_93, %c0_94, %c0_95, %c0_96] : memref<1x4x8x8x2xbf16, #tpu.memory_space<vmem>>, vector<1x1x8x8x2xbf16>
    %79 = vector.shape_cast %78 : vector<1x1x8x8x2xbf16> to vector<8x8x2xbf16>
    %80 = arith.extf %79 : vector<8x8x2xbf16> to vector<8x8x2xf32>
    %c0_97 = arith.constant 0 : index
    %c3_98 = arith.constant 3 : index
    %c0_99 = arith.constant 0 : index
    %c0_100 = arith.constant 0 : index
    %c0_101 = arith.constant 0 : index
    %81 = vector.load %arg2[%c0_97, %c3_98, %c0_99, %c0_100, %c0_101] : memref<1x4x8x8x2xbf16, #tpu.memory_space<vmem>>, vector<1x1x8x8x2xbf16>
    %82 = vector.shape_cast %81 : vector<1x1x8x8x2xbf16> to vector<8x8x2xbf16>
    %83 = arith.extf %82 : vector<8x8x2xbf16> to vector<8x8x2xf32>
    %84 = arith.addf %74, %80 : vector<8x8x2xf32>
    %85 = arith.addf %77, %83 : vector<8x8x2xf32>
    %86 = vector.extract_strided_slice %80 {offsets = [0, 0, 0], sizes = [7, 8, 2], strides = [1, 1, 1]} : vector<8x8x2xf32> to vector<7x8x2xf32>
    %87 = vector.extract_strided_slice %74 {offsets = [1, 0, 0], sizes = [7, 8, 2], strides = [1, 1, 1]} : vector<8x8x2xf32> to vector<7x8x2xf32>
    %88 = arith.addf %86, %87 : vector<7x8x2xf32>
    %89 = vector.extract_strided_slice %83 {offsets = [0, 0, 0], sizes = [7, 8, 2], strides = [1, 1, 1]} : vector<8x8x2xf32> to vector<7x8x2xf32>
    %90 = vector.extract_strided_slice %77 {offsets = [1, 0, 0], sizes = [7, 8, 2], strides = [1, 1, 1]} : vector<8x8x2xf32> to vector<7x8x2xf32>
    %91 = arith.addf %89, %90 : vector<7x8x2xf32>
    %92 = arith.addf %84, %85 : vector<8x8x2xf32>
    %cst_102 = arith.constant 2.500000e-01 : f32
    %93 = vector.broadcast %cst_102 : f32 to vector<8x8x2xf32>
    %94 = arith.mulf %92, %93 : vector<8x8x2xf32>
    %95 = arith.truncf %94 : vector<8x8x2xf32> to vector<8x8x2xbf16>
    %c3_103 = arith.constant 3 : index
    %c0_104 = arith.constant 0 : index
    %c0_105 = arith.constant 0 : index
    %c0_106 = arith.constant 0 : index
    %96 = vector.load %arg8[%c3_103, %c0_104, %c0_105, %c0_106] : memref<4x9x9x2xbf16, #tpu.memory_space<vmem>>, vector<1x8x8x2xbf16>
    %97 = vector.shape_cast %96 : vector<1x8x8x2xbf16> to vector<8x8x2xbf16>
    %98 = vector.shape_cast %95 : vector<8x8x2xbf16> to vector<1x8x8x2xbf16>
    tpu.vector_store %arg8[%c3_103, %c0_104, %c0_105, %c0_106], %98 {strides = array<i32>} : memref<4x9x9x2xbf16, #tpu.memory_space<vmem>>, vector<1x8x8x2xbf16>,
    %99 = vector.extract_strided_slice %85 {offsets = [0, 0, 0], sizes = [8, 7, 2], strides = [1, 1, 1]} : vector<8x8x2xf32> to vector<8x7x2xf32>
    %100 = vector.extract_strided_slice %84 {offsets = [0, 1, 0], sizes = [8, 7, 2], strides = [1, 1, 1]} : vector<8x8x2xf32> to vector<8x7x2xf32>
    %101 = arith.addf %99, %100 : vector<8x7x2xf32>
    %cst_107 = arith.constant 2.500000e-01 : f32
    %102 = vector.broadcast %cst_107 : f32 to vector<8x7x2xf32>
    %103 = arith.mulf %101, %102 : vector<8x7x2xf32>
    %104 = arith.truncf %103 : vector<8x7x2xf32> to vector<8x7x2xbf16>
    %c2_108 = arith.constant 2 : index
    %c0_109 = arith.constant 0 : index
    %c1_110 = arith.constant 1 : index
    %c0_111 = arith.constant 0 : index
    %105 = vector.load %arg8[%c2_108, %c0_109, %c1_110, %c0_111] : memref<4x9x9x2xbf16, #tpu.memory_space<vmem>>, vector<1x8x7x2xbf16>
    %106 = vector.shape_cast %105 : vector<1x8x7x2xbf16> to vector<8x7x2xbf16>
    %107 = vector.shape_cast %104 : vector<8x7x2xbf16> to vector<1x8x7x2xbf16>
    tpu.vector_store %arg8[%c2_108, %c0_109, %c1_110, %c0_111], %107 {strides = array<i32>} : memref<4x9x9x2xbf16, #tpu.memory_space<vmem>>, vector<1x8x7x2xbf16>,
    %108 = arith.addf %88, %91 : vector<7x8x2xf32>
    %cst_112 = arith.constant 2.500000e-01 : f32
    %109 = vector.broadcast %cst_112 : f32 to vector<7x8x2xf32>
    %110 = arith.mulf %108, %109 : vector<7x8x2xf32>
    %111 = arith.truncf %110 : vector<7x8x2xf32> to vector<7x8x2xbf16>
    %c1_113 = arith.constant 1 : index
    %c1_114 = arith.constant 1 : index
    %c0_115 = arith.constant 0 : index
    %c0_116 = arith.constant 0 : index
    %112 = vector.load %arg8[%c1_113, %c1_114, %c0_115, %c0_116] : memref<4x9x9x2xbf16, #tpu.memory_space<vmem>>, vector<1x7x8x2xbf16>
    %113 = vector.shape_cast %112 : vector<1x7x8x2xbf16> to vector<7x8x2xbf16>
    %114 = vector.shape_cast %111 : vector<7x8x2xbf16> to vector<1x7x8x2xbf16>
    tpu.vector_store %arg8[%c1_113, %c1_114, %c0_115, %c0_116], %114 {strides = array<i32>} : memref<4x9x9x2xbf16, #tpu.memory_space<vmem>>, vector<1x7x8x2xbf16>,
    %115 = vector.extract_strided_slice %91 {offsets = [0, 0, 0], sizes = [7, 7, 2], strides = [1, 1, 1]} : vector<7x8x2xf32> to vector<7x7x2xf32>
    %116 = vector.extract_strided_slice %88 {offsets = [0, 1, 0], sizes = [7, 7, 2], strides = [1, 1, 1]} : vector<7x8x2xf32> to vector<7x7x2xf32>
    %117 = arith.addf %115, %116 : vector<7x7x2xf32>
    %cst_117 = arith.constant 2.500000e-01 : f32
    %118 = vector.broadcast %cst_117 : f32 to vector<7x7x2xf32>
    %119 = arith.mulf %117, %118 : vector<7x7x2xf32>
    %120 = arith.truncf %119 : vector<7x7x2xf32> to vector<7x7x2xbf16>
    %c0_118 = arith.constant 0 : index
    %c1_119 = arith.constant 1 : index
    %c1_120 = arith.constant 1 : index
    %c0_121 = arith.constant 0 : index
    %121 = vector.load %arg8[%c0_118, %c1_119, %c1_120, %c0_121] : memref<4x9x9x2xbf16, #tpu.memory_space<vmem>>, vector<1x7x7x2xbf16>
    %122 = vector.shape_cast %121 : vector<1x7x7x2xbf16> to vector<7x7x2xbf16>
    %123 = vector.shape_cast %120 : vector<7x7x2xbf16> to vector<1x7x7x2xbf16>
    tpu.vector_store %arg8[%c0_118, %c1_119, %c1_120, %c0_121], %123 {strides = array<i32>} : memref<4x9x9x2xbf16, #tpu.memory_space<vmem>>, vector<1x7x7x2xbf16>,
    %c0_122 = arith.constant 0 : index
    %c0_123 = arith.constant 0 : index
    %c0_124 = arith.constant 0 : index
    %c0_125 = arith.constant 0 : index
    %124 = vector.load %arg7[%c0_122, %c0_123, %c0_124, %c0_125] : memref<4x9x9x2xbf16, #tpu.memory_space<vmem>>, vector<1x8x8x2xbf16>
    %125 = vector.shape_cast %124 : vector<1x8x8x2xbf16> to vector<8x8x2xbf16>
    %c0_126 = arith.constant 0 : index
    %c0_127 = arith.constant 0 : index
    %c0_128 = arith.constant 0 : index
    %126 = vector.load %arg9[%c0_126, %c0_127, %c0_128] : memref<8x8x18xbf16, #tpu.memory_space<vmem>>, vector<8x8x2xbf16>
    tpu.vector_store %arg9[%c0_126, %c0_127, %c0_128], %125 {strides = array<i32>} : memref<8x8x18xbf16, #tpu.memory_space<vmem>>, vector<8x8x2xbf16>,
    %c1_129 = arith.constant 1 : index
    %c0_130 = arith.constant 0 : index
    %c0_131 = arith.constant 0 : index
    %c0_132 = arith.constant 0 : index
    %127 = vector.load %arg7[%c1_129, %c0_130, %c0_131, %c0_132] : memref<4x9x9x2xbf16, #tpu.memory_space<vmem>>, vector<1x8x8x2xbf16>
    %128 = vector.shape_cast %127 : vector<1x8x8x2xbf16> to vector<8x8x2xbf16>
    %c0_133 = arith.constant 0 : index
    %c0_134 = arith.constant 0 : index
    %c2_135 = arith.constant 2 : index
    %129 = vector.load %arg9[%c0_133, %c0_134, %c2_135] : memref<8x8x18xbf16, #tpu.memory_space<vmem>>, vector<8x8x2xbf16>
    tpu.vector_store %arg9[%c0_133, %c0_134, %c2_135], %128 {strides = array<i32>} : memref<8x8x18xbf16, #tpu.memory_space<vmem>>, vector<8x8x2xbf16>,
    %c0_136 = arith.constant 0 : index
    %c0_137 = arith.constant 0 : index
    %c1_138 = arith.constant 1 : index
    %c0_139 = arith.constant 0 : index
    %130 = vector.load %arg7[%c0_136, %c0_137, %c1_138, %c0_139] : memref<4x9x9x2xbf16, #tpu.memory_space<vmem>>, vector<1x8x8x2xbf16>
    %131 = vector.shape_cast %130 : vector<1x8x8x2xbf16> to vector<8x8x2xbf16>
    %c0_140 = arith.constant 0 : index
    %c0_141 = arith.constant 0 : index
    %c4 = arith.constant 4 : index
    %132 = vector.load %arg9[%c0_140, %c0_141, %c4] : memref<8x8x18xbf16, #tpu.memory_space<vmem>>, vector<8x8x2xbf16>
    tpu.vector_store %arg9[%c0_140, %c0_141, %c4], %131 {strides = array<i32>} : memref<8x8x18xbf16, #tpu.memory_space<vmem>>, vector<8x8x2xbf16>,
    %c2_142 = arith.constant 2 : index
    %c0_143 = arith.constant 0 : index
    %c0_144 = arith.constant 0 : index
    %c0_145 = arith.constant 0 : index
    %133 = vector.load %arg7[%c2_142, %c0_143, %c0_144, %c0_145] : memref<4x9x9x2xbf16, #tpu.memory_space<vmem>>, vector<1x8x8x2xbf16>
    %134 = vector.shape_cast %133 : vector<1x8x8x2xbf16> to vector<8x8x2xbf16>
    %c0_146 = arith.constant 0 : index
    %c0_147 = arith.constant 0 : index
    %c6 = arith.constant 6 : index
    %135 = vector.load %arg9[%c0_146, %c0_147, %c6] : memref<8x8x18xbf16, #tpu.memory_space<vmem>>, vector<8x8x2xbf16>
    tpu.vector_store %arg9[%c0_146, %c0_147, %c6], %134 {strides = array<i32>} : memref<8x8x18xbf16, #tpu.memory_space<vmem>>, vector<8x8x2xbf16>,
    %c3_148 = arith.constant 3 : index
    %c0_149 = arith.constant 0 : index
    %c0_150 = arith.constant 0 : index
    %c0_151 = arith.constant 0 : index
    %136 = vector.load %arg7[%c3_148, %c0_149, %c0_150, %c0_151] : memref<4x9x9x2xbf16, #tpu.memory_space<vmem>>, vector<1x8x8x2xbf16>
    %137 = vector.shape_cast %136 : vector<1x8x8x2xbf16> to vector<8x8x2xbf16>
    %c0_152 = arith.constant 0 : index
    %c0_153 = arith.constant 0 : index
    %c8_154 = arith.constant 8 : index
    %138 = vector.load %arg9[%c0_152, %c0_153, %c8_154] : memref<8x8x18xbf16, #tpu.memory_space<vmem>>, vector<8x8x2xbf16>
    tpu.vector_store %arg9[%c0_152, %c0_153, %c8_154], %137 {strides = array<i32>} : memref<8x8x18xbf16, #tpu.memory_space<vmem>>, vector<8x8x2xbf16>,
    %c2_155 = arith.constant 2 : index
    %c0_156 = arith.constant 0 : index
    %c1_157 = arith.constant 1 : index
    %c0_158 = arith.constant 0 : index
    %139 = vector.load %arg7[%c2_155, %c0_156, %c1_157, %c0_158] : memref<4x9x9x2xbf16, #tpu.memory_space<vmem>>, vector<1x8x8x2xbf16>
    %140 = vector.shape_cast %139 : vector<1x8x8x2xbf16> to vector<8x8x2xbf16>
    %c0_159 = arith.constant 0 : index
    %c0_160 = arith.constant 0 : index
    %c10 = arith.constant 10 : index
    %141 = vector.load %arg9[%c0_159, %c0_160, %c10] : memref<8x8x18xbf16, #tpu.memory_space<vmem>>, vector<8x8x2xbf16>
    tpu.vector_store %arg9[%c0_159, %c0_160, %c10], %140 {strides = array<i32>} : memref<8x8x18xbf16, #tpu.memory_space<vmem>>, vector<8x8x2xbf16>,
    %c0_161 = arith.constant 0 : index
    %c1_162 = arith.constant 1 : index
    %c0_163 = arith.constant 0 : index
    %c0_164 = arith.constant 0 : index
    %142 = vector.load %arg7[%c0_161, %c1_162, %c0_163, %c0_164] : memref<4x9x9x2xbf16, #tpu.memory_space<vmem>>, vector<1x8x8x2xbf16>
    %143 = vector.shape_cast %142 : vector<1x8x8x2xbf16> to vector<8x8x2xbf16>
    %c0_165 = arith.constant 0 : index
    %c0_166 = arith.constant 0 : index
    %c12 = arith.constant 12 : index
    %144 = vector.load %arg9[%c0_165, %c0_166, %c12] : memref<8x8x18xbf16, #tpu.memory_space<vmem>>, vector<8x8x2xbf16>
    tpu.vector_store %arg9[%c0_165, %c0_166, %c12], %143 {strides = array<i32>} : memref<8x8x18xbf16, #tpu.memory_space<vmem>>, vector<8x8x2xbf16>,
    %c1_167 = arith.constant 1 : index
    %c1_168 = arith.constant 1 : index
    %c0_169 = arith.constant 0 : index
    %c0_170 = arith.constant 0 : index
    %145 = vector.load %arg7[%c1_167, %c1_168, %c0_169, %c0_170] : memref<4x9x9x2xbf16, #tpu.memory_space<vmem>>, vector<1x8x8x2xbf16>
    %146 = vector.shape_cast %145 : vector<1x8x8x2xbf16> to vector<8x8x2xbf16>
    %c0_171 = arith.constant 0 : index
    %c0_172 = arith.constant 0 : index
    %c14 = arith.constant 14 : index
    %147 = vector.load %arg9[%c0_171, %c0_172, %c14] : memref<8x8x18xbf16, #tpu.memory_space<vmem>>, vector<8x8x2xbf16>
    tpu.vector_store %arg9[%c0_171, %c0_172, %c14], %146 {strides = array<i32>} : memref<8x8x18xbf16, #tpu.memory_space<vmem>>, vector<8x8x2xbf16>,
    %c0_173 = arith.constant 0 : index
    %c1_174 = arith.constant 1 : index
    %c1_175 = arith.constant 1 : index
    %c0_176 = arith.constant 0 : index
    %148 = vector.load %arg7[%c0_173, %c1_174, %c1_175, %c0_176] : memref<4x9x9x2xbf16, #tpu.memory_space<vmem>>, vector<1x8x8x2xbf16>
    %149 = vector.shape_cast %148 : vector<1x8x8x2xbf16> to vector<8x8x2xbf16>
    %c0_177 = arith.constant 0 : index
    %c0_178 = arith.constant 0 : index
    %c16 = arith.constant 16 : index
    %150 = vector.load %arg9[%c0_177, %c0_178, %c16] : memref<8x8x18xbf16, #tpu.memory_space<vmem>>, vector<8x8x2xbf16>
    tpu.vector_store %arg9[%c0_177, %c0_178, %c16], %149 {strides = array<i32>} : memref<8x8x18xbf16, #tpu.memory_space<vmem>>, vector<8x8x2xbf16>,
    %c0_179 = arith.constant 0 : index
    %c0_180 = arith.constant 0 : index
    %c0_181 = arith.constant 0 : index
    %151 = vector.load %arg9[%c0_179, %c0_180, %c0_181] : memref<8x8x18xbf16, #tpu.memory_space<vmem>>, vector<8x8x18xbf16>
    %152 = vector.shape_cast %151 : vector<8x8x18xbf16> to vector<64x18xbf16>
    %cst_182 = arith.constant dense<0.000000e+00> : vector<64x4xf32>
    %153 = tpu.matmul %152, %16, %cst_182 {dimension_numbers = #tpu.dot_dimension_numbers<[1], [0], [0], [1], [0, 0, 1, 1], [], []>} : vector<64x18xbf16>, vector<18x4xbf16>, vector<64x4xf32> -> vector<64x4xf32>
    %c0_183 = arith.constant 0 : index
    %c0_184 = arith.constant 0 : index
    %c0_185 = arith.constant 0 : index
    %c0_186 = arith.constant 0 : index
    %154 = vector.load %arg8[%c0_183, %c0_184, %c0_185, %c0_186] : memref<4x9x9x2xbf16, #tpu.memory_space<vmem>>, vector<1x8x8x2xbf16>
    %155 = vector.shape_cast %154 : vector<1x8x8x2xbf16> to vector<8x8x2xbf16>
    %c1_187 = arith.constant 1 : index
    %c0_188 = arith.constant 0 : index
    %c0_189 = arith.constant 0 : index
    %c0_190 = arith.constant 0 : index
    %156 = vector.load %arg8[%c1_187, %c0_188, %c0_189, %c0_190] : memref<4x9x9x2xbf16, #tpu.memory_space<vmem>>, vector<1x8x8x2xbf16>
    %157 = vector.shape_cast %156 : vector<1x8x8x2xbf16> to vector<8x8x2xbf16>
    %158 = arith.maximumf %155, %157 : vector<8x8x2xbf16>
    %c0_191 = arith.constant 0 : index
    %c0_192 = arith.constant 0 : index
    %c1_193 = arith.constant 1 : index
    %c0_194 = arith.constant 0 : index
    %159 = vector.load %arg8[%c0_191, %c0_192, %c1_193, %c0_194] : memref<4x9x9x2xbf16, #tpu.memory_space<vmem>>, vector<1x8x8x2xbf16>
    %160 = vector.shape_cast %159 : vector<1x8x8x2xbf16> to vector<8x8x2xbf16>
    %161 = arith.maximumf %158, %160 : vector<8x8x2xbf16>
    %c2_195 = arith.constant 2 : index
    %c0_196 = arith.constant 0 : index
    %c0_197 = arith.constant 0 : index
    %c0_198 = arith.constant 0 : index
    %162 = vector.load %arg8[%c2_195, %c0_196, %c0_197, %c0_198] : memref<4x9x9x2xbf16, #tpu.memory_space<vmem>>, vector<1x8x8x2xbf16>
    %163 = vector.shape_cast %162 : vector<1x8x8x2xbf16> to vector<8x8x2xbf16>
    %164 = arith.maximumf %161, %163 : vector<8x8x2xbf16>
    %c3_199 = arith.constant 3 : index
    %c0_200 = arith.constant 0 : index
    %c0_201 = arith.constant 0 : index
    %c0_202 = arith.constant 0 : index
    %165 = vector.load %arg8[%c3_199, %c0_200, %c0_201, %c0_202] : memref<4x9x9x2xbf16, #tpu.memory_space<vmem>>, vector<1x8x8x2xbf16>
    %166 = vector.shape_cast %165 : vector<1x8x8x2xbf16> to vector<8x8x2xbf16>
    %167 = arith.maximumf %164, %166 : vector<8x8x2xbf16>
    %c2_203 = arith.constant 2 : index
    %c0_204 = arith.constant 0 : index
    %c1_205 = arith.constant 1 : index
    %c0_206 = arith.constant 0 : index
    %168 = vector.load %arg8[%c2_203, %c0_204, %c1_205, %c0_206] : memref<4x9x9x2xbf16, #tpu.memory_space<vmem>>, vector<1x8x8x2xbf16>
    %169 = vector.shape_cast %168 : vector<1x8x8x2xbf16> to vector<8x8x2xbf16>
    %170 = arith.maximumf %167, %169 : vector<8x8x2xbf16>
    %c0_207 = arith.constant 0 : index
    %c1_208 = arith.constant 1 : index
    %c0_209 = arith.constant 0 : index
    %c0_210 = arith.constant 0 : index
    %171 = vector.load %arg8[%c0_207, %c1_208, %c0_209, %c0_210] : memref<4x9x9x2xbf16, #tpu.memory_space<vmem>>, vector<1x8x8x2xbf16>
    %172 = vector.shape_cast %171 : vector<1x8x8x2xbf16> to vector<8x8x2xbf16>
    %173 = arith.maximumf %170, %172 : vector<8x8x2xbf16>
    %c1_211 = arith.constant 1 : index
    %c1_212 = arith.constant 1 : index
    %c0_213 = arith.constant 0 : index
    %c0_214 = arith.constant 0 : index
    %174 = vector.load %arg8[%c1_211, %c1_212, %c0_213, %c0_214] : memref<4x9x9x2xbf16, #tpu.memory_space<vmem>>, vector<1x8x8x2xbf16>
    %175 = vector.shape_cast %174 : vector<1x8x8x2xbf16> to vector<8x8x2xbf16>
    %176 = arith.maximumf %173, %175 : vector<8x8x2xbf16>
    %c0_215 = arith.constant 0 : index
    %c1_216 = arith.constant 1 : index
    %c1_217 = arith.constant 1 : index
    %c0_218 = arith.constant 0 : index
    %177 = vector.load %arg8[%c0_215, %c1_216, %c1_217, %c0_218] : memref<4x9x9x2xbf16, #tpu.memory_space<vmem>>, vector<1x8x8x2xbf16>
    %178 = vector.shape_cast %177 : vector<1x8x8x2xbf16> to vector<8x8x2xbf16>
    %179 = arith.maximumf %176, %178 : vector<8x8x2xbf16>
    %180 = vector.shape_cast %179 : vector<8x8x2xbf16> to vector<64x2xbf16>
    %cst_219 = arith.constant dense<0.000000e+00> : vector<64x4xf32>
    %181 = tpu.matmul %180, %17, %cst_219 {dimension_numbers = #tpu.dot_dimension_numbers<[1], [0], [0], [1], [0, 0, 1, 1], [], []>} : vector<64x2xbf16>, vector<2x4xbf16>, vector<64x4xf32> -> vector<64x4xf32>
    %182 = tpu.concatenate %153, %181 in 1 : vector<64x4xf32>, vector<64x4xf32> -> vector<64x8xf32>
    %183 = vector.broadcast %18 : vector<1x8xf32> to vector<64x8xf32>
    %184 = arith.mulf %182, %183 : vector<64x8xf32>
    %185 = vector.broadcast %19 : vector<1x8xf32> to vector<64x8xf32>
    %186 = arith.addf %184, %185 : vector<64x8xf32>
    %cst_220 = arith.constant 0.000000e+00 : f32
    %187 = vector.broadcast %cst_220 : f32 to vector<64x8xf32>
    %188 = arith.subf %187, %186 : vector<64x8xf32>
    %189 = math.exp %188 : vector<64x8xf32>
    %cst_221 = arith.constant 1.000000e+00 : f32
    %190 = vector.broadcast %cst_221 : f32 to vector<64x8xf32>
    %191 = arith.addf %190, %189 : vector<64x8xf32>
    %192 = tpu.reciprocal %191 {approx = true} : vector<64x8xf32> -> vector<64x8xf32>
    %193 = arith.mulf %186, %192 : vector<64x8xf32>
    %194 = arith.truncf %193 : vector<64x8xf32> to vector<64x8xbf16>
    %c0_222 = arith.constant 0 : index
    %c0_223 = arith.constant 0 : index
    %c0_224 = arith.constant 0 : index
    %195 = vector.load %arg6[%c0_222, %c0_223, %c0_224] : memref<1x64x8xbf16, #tpu.memory_space<vmem>>, vector<1x64x8xbf16>
    %196 = vector.shape_cast %195 : vector<1x64x8xbf16> to vector<64x8xbf16>
    %197 = vector.shape_cast %194 : vector<64x8xbf16> to vector<1x64x8xbf16>
    tpu.vector_store %arg6[%c0_222, %c0_223, %c0_224], %197 {strides = array<i32>} : memref<1x64x8xbf16, #tpu.memory_space<vmem>>, vector<1x64x8xbf16>,
    return
  }
  func.func @transform_0(%arg0: i32) -> (i32, i32, i32, i32, i32) {
    %c0_i32 = arith.constant 0 : i32
    %c0_i32_0 = arith.constant 0 : i32
    %c0_i32_1 = arith.constant 0 : i32
    %c0_i32_2 = arith.constant 0 : i32
    %c0_i32_3 = arith.constant 0 : i32
    return %arg0, %c0_i32, %c0_i32_0, %c0_i32_1, %c0_i32_2 : i32, i32, i32, i32, i32
  }
  func.func @transform_1(%arg0: i32) -> (i32, i32, i32, i32, i32) {
    %c0_i32 = arith.constant 0 : i32
    %c0_i32_0 = arith.constant 0 : i32
    %c0_i32_1 = arith.constant 0 : i32
    %c0_i32_2 = arith.constant 0 : i32
    %c0_i32_3 = arith.constant 0 : i32
    return %arg0, %c0_i32, %c0_i32_0, %c0_i32_1, %c0_i32_2 : i32, i32, i32, i32, i32
  }
  func.func @transform_2(%arg0: i32) -> (i32, i32) {
    %c0_i32 = arith.constant 0 : i32
    %c0_i32_0 = arith.constant 0 : i32
    %c0_i32_1 = arith.constant 0 : i32
    return %c0_i32, %c0_i32_0 : i32, i32
  }
  func.func @transform_3(%arg0: i32) -> (i32, i32) {
    %c0_i32 = arith.constant 0 : i32
    %c0_i32_0 = arith.constant 0 : i32
    %c0_i32_1 = arith.constant 0 : i32
    return %c0_i32, %c0_i32_0 : i32, i32
  }
  func.func @transform_4(%arg0: i32) -> (i32, i32) {
    %c0_i32 = arith.constant 0 : i32
    %c0_i32_0 = arith.constant 0 : i32
    %c0_i32_1 = arith.constant 0 : i32
    return %c0_i32, %c0_i32_0 : i32, i32
  }
  func.func @transform_5(%arg0: i32) -> (i32, i32, i32) {
    %c0_i32 = arith.constant 0 : i32
    %c0_i32_0 = arith.constant 0 : i32
    %c0_i32_1 = arith.constant 0 : i32
    return %arg0, %c0_i32, %c0_i32_0 : i32, i32, i32
  }
}

</mosaic_0001>

<llo_original>
// kernel: tpu_custom_call.1
$region0: #{tpu_custom_call.1}
  #allocation0 [shape = 'u32[]', space=smem, size = 0x4, offset = 0x4, fixed_abs, tag = 'smem constant byte address 0x4 - core index']
  #allocation1 [shape = 'u32[72,128]{1,0:T(1,128)}', space=vmem, size = 0x9000, scoped, tag = 'internal scratch']
  #allocation2 [shape = 'bf16[4,9,9,2]{3,2,1,0:T(8,128)(2,1)}', space=vmem, size = 0x24000, scoped, tag = 'scratch operand']
  #allocation3 [shape = 'bf16[4,9,9,2]{3,2,1,0:T(8,128)(2,1)}', space=vmem, size = 0x24000, scoped, tag = 'scratch operand']
  #allocation4 [shape = 'bf16[8,8,18]{2,1,0:T(8,128)(2,1)}', space=vmem, size = 0x4000, scoped, tag = 'scratch operand']
  %s0 = inlined_call_operand.vmem [shape: bf16[2,4,8,8,2], index: 0, kind: input, shape index: {}]
  %s1 = inlined_call_operand.vmem [shape: bf16[2,4,8,8,2], index: 1, kind: input, shape index: {}]
  %s2 = inlined_call_operand.vmem [shape: bf16[18,4], index: 2, kind: input, shape index: {}]
  %s3 = inlined_call_operand.vmem [shape: bf16[2,4], index: 3, kind: input, shape index: {}]
  %s4 = inlined_call_operand.vmem [shape: f32[2,8], index: 4, kind: input, shape index: {}]
  %s5 = inlined_call_operand.vmem [shape: bf16[2,64,8], index: 5, kind: output, shape index: {}]
  %s6 = sld [smem:[#allocation0]]
  $region53: #{tpu_custom_call.1} parent=0
    _
  %s8 = ssub.s32 1, %s6
  %s9 = scalar_select 0, %s8, %s6
  loop: start=0, step=1, limit=4
  $region2: #{tpu_custom_call.1} parent=0 // loop_pre_header
    _
  $region3: #{tpu_custom_call.1} parent=0 // loop_header
    %s11 = sphi 0, %s15
    %p12 = scmp.ge.s32.totalorder %s11, 4
    %s21 = sphi 0, %s23
    %s24 = sphi 0, %s21
    %s25 = sphi 0, %s24
    %s41 = sphi 0, %s25
    %s47 = sphi 0, %s49
    %s50 = sphi 0, %s47
    %s51 = sphi 0, %s50
    %s67 = sphi 0, %s51
    %s71 = sphi 0, %s71
    %s73 = sphi 0, %s71
    %s74 = sphi 0, %s73
    %s88 = sphi 0, %s74
    %s92 = sphi 0, %s92
    %s94 = sphi 0, %s92
    %s95 = sphi 0, %s94
    %s109 = sphi 0, %s95
    %s113 = sphi 0, %s113
    %s115 = sphi 0, %s113
    %s116 = sphi 0, %s115
    %s130 = sphi 0, %s116
    %s136 = sphi 0, %s138
    %s139 = sphi 0, %s136
    %s140 = sphi 0, %s139
    %s156 = sphi 0, %s140
  $region4: #{tpu_custom_call.1} parent=0 // loop_header_branch
    %14 = sbr.rel (%p12) target = $region8
  $region5: #{tpu_custom_call.1} parent=0 // loop_body
    %s16 = ssub.s32 %s11, 1
    %s17 = ssub.s32 %s11, 2
    %s18 = sadd.s32 %s11, 1
    %s19 = ssub.s32 %s11, %s18
    %p20 = scmp.eq.s32.totalorder %s19, 0
    %s22 = sadd.s32 %s21, 1
    %s23 = scalar_select %p20, %s21, %s22
    %p26 = pneg %p20
    %p27 = scmp.eq.s32.totalorder %s11, 1
    %p28 = por %p26, %p27
    %p29 = scmp.ne.s32.totalorder %s21, %s24
    %p30 = scmp.eq.s32.totalorder %s11, 0
    %p31 = por %p29, %p30
    %p32 = scmp.ne.s32.totalorder %s21, %s24
    %p33 = scmp.eq.s32.totalorder %s16, 1
    %p34 = por %p32, %p33
    %p35 = scmp.ne.s32.totalorder %s24, %s25
    %p36 = scmp.eq.s32.totalorder %s16, 0
    %p37 = por %p35, %p36
    %p38 = scmp.ne.s32.totalorder %s24, %s25
    %p39 = scmp.eq.s32.totalorder %s17, 1
    %p40 = por %p38, %p39
    %p42 = scmp.ne.s32.totalorder %s25, %s41
    %p43 = scmp.eq.s32.totalorder %s17, 0
    %p44 = por %p42, %p43
    %s45 = ssub.s32 %s11, %s18
    %p46 = scmp.eq.s32.totalorder %s45, 0
    %s48 = sadd.s32 %s47, 1
    %s49 = scalar_select %p46, %s47, %s48
    %p52 = pneg %p46
    %p53 = scmp.eq.s32.totalorder %s11, 1
    %p54 = por %p52, %p53
    %p55 = scmp.ne.s32.totalorder %s47, %s50
    %p56 = scmp.eq.s32.totalorder %s11, 0
    %p57 = por %p55, %p56
    %p58 = scmp.ne.s32.totalorder %s47, %s50
    %p59 = scmp.eq.s32.totalorder %s16, 1
    %p60 = por %p58, %p59
    %p61 = scmp.ne.s32.totalorder %s50, %s51
    %p62 = scmp.eq.s32.totalorder %s16, 0
    %p63 = por %p61, %p62
    %p64 = scmp.ne.s32.totalorder %s50, %s51
    %p65 = scmp.eq.s32.totalorder %s17, 1
    %p66 = por %p64, %p65
    %p68 = scmp.ne.s32.totalorder %s51, %s67
    %p69 = scmp.eq.s32.totalorder %s17, 0
    %p70 = por %p68, %p69
    %s72 = sadd.s32 %s71, 1
    %p75 = scmp.eq.s32.totalorder %s11, 1
    %p76 = scmp.ne.s32.totalorder %s71, %s73
    %p77 = scmp.eq.s32.totalorder %s11, 0
    %p78 = por %p76, %p77
    %p79 = scmp.ne.s32.totalorder %s71, %s73
    %p80 = scmp.eq.s32.totalorder %s16, 1
    %p81 = por %p79, %p80
    %p82 = scmp.ne.s32.totalorder %s73, %s74
    %p83 = scmp.eq.s32.totalorder %s16, 0
    %p84 = por %p82, %p83
    %p85 = scmp.ne.s32.totalorder %s73, %s74
    %p86 = scmp.eq.s32.totalorder %s17, 1
    %p87 = por %p85, %p86
    %p89 = scmp.ne.s32.totalorder %s74, %s88
    %p90 = scmp.eq.s32.totalorder %s17, 0
    %p91 = por %p89, %p90
    %s93 = sadd.s32 %s92, 1
    %p96 = scmp.eq.s32.totalorder %s11, 1
    %p97 = scmp.ne.s32.totalorder %s92, %s94
    %p98 = scmp.eq.s32.totalorder %s11, 0
    %p99 = por %p97, %p98
    %p100 = scmp.ne.s32.totalorder %s92, %s94
    %p101 = scmp.eq.s32.totalorder %s16, 1
    %p102 = por %p100, %p101
    %p103 = scmp.ne.s32.totalorder %s94, %s95
    %p104 = scmp.eq.s32.totalorder %s16, 0
    %p105 = por %p103, %p104
    %p106 = scmp.ne.s32.totalorder %s94, %s95
    %p107 = scmp.eq.s32.totalorder %s17, 1
    %p108 = por %p106, %p107
    %p110 = scmp.ne.s32.totalorder %s95, %s109
    %p111 = scmp.eq.s32.totalorder %s17, 0
    %p112 = por %p110, %p111
    %s114 = sadd.s32 %s113, 1
    %p117 = scmp.eq.s32.totalorder %s11, 1
    %p118 = scmp.ne.s32.totalorder %s113, %s115
    %p119 = scmp.eq.s32.totalorder %s11, 0
    %p120 = por %p118, %p119
    %p121 = scmp.ne.s32.totalorder %s113, %s115
    %p122 = scmp.eq.s32.totalorder %s16, 1
    %p123 = por %p121, %p122
    %p124 = scmp.ne.s32.totalorder %s115, %s116
    %p125 = scmp.eq.s32.totalorder %s16, 0
    %p126 = por %p124, %p125
    %p127 = scmp.ne.s32.totalorder %s115, %s116
    %p128 = scmp.eq.s32.totalorder %s17, 1
    %p129 = por %p127, %p128
    %p131 = scmp.ne.s32.totalorder %s116, %s130
    %p132 = scmp.eq.s32.totalorder %s17, 0
    %p133 = por %p131, %p132
    %s134 = ssub.s32 %s11, %s18
    %p135 = scmp.eq.s32.totalorder %s134, 0
    %s137 = sadd.s32 %s136, 1
    %s138 = scalar_select %p135, %s136, %s137
    %p141 = pneg %p135
    %p142 = scmp.eq.s32.totalorder %s11, 1
    %p143 = por %p141, %p142
    %p144 = scmp.ne.s32.totalorder %s136, %s139
    %p145 = scmp.eq.s32.totalorder %s11, 0
    %p146 = por %p144, %p145
    %p147 = scmp.ne.s32.totalorder %s136, %s139
    %p148 = scmp.eq.s32.totalorder %s16, 1
    %p149 = por %p147, %p148
    %p150 = scmp.ne.s32.totalorder %s139, %s140
    %p151 = scmp.eq.s32.totalorder %s16, 0
    %p152 = por %p150, %p151
    %p153 = scmp.ne.s32.totalorder %s139, %s140
    %p154 = scmp.eq.s32.totalorder %s17, 1
    %p155 = por %p153, %p154
    %p157 = scmp.ne.s32.totalorder %s140, %s156
    %p158 = scmp.eq.s32.totalorder %s17, 0
    %p159 = por %p157, %p158
    %p160 = scmp.le.s32.totalorder 1, %s11
    %p161 = scmp.lt.s32.totalorder %s11, 3
    %p162 = pnand %p160, %p161
    %p163 = pneg %p162
    // Predicated region
    $region9: #{tpu_custom_call.1} parent=5 // pred_check
      _
    $region10: #{tpu_custom_call.1} parent=5 // pred_check_branch
      %165 = sbr.rel (%p162) target = $region12
    $region11: #{tpu_custom_call.1} parent=5 // pred_region
      %s166 = ssub.s32 %s11, 1
      // Predicated region
      $region13: #{tpu_custom_call.1} parent=11 // pred_check
        %p167 = pneg %p84
      $region14: #{tpu_custom_call.1} parent=11 // pred_check_branch
        %169 = sbr.rel (%p167) target = $region16
      $region15: #{tpu_custom_call.1} parent=11 // pred_region
        _
      $region16: #{tpu_custom_call.1} parent=11 // pred_fallthru
        _
      // Predicated region
      $region17: #{tpu_custom_call.1} parent=11 // pred_check
        %p170 = pneg %p105
      $region18: #{tpu_custom_call.1} parent=11 // pred_check_branch
        %172 = sbr.rel (%p170) target = $region20
      $region19: #{tpu_custom_call.1} parent=11 // pred_region
        _
      $region20: #{tpu_custom_call.1} parent=11 // pred_fallthru
        _
      // Predicated region
      $region21: #{tpu_custom_call.1} parent=11 // pred_check
        %p173 = pneg %p126
      $region22: #{tpu_custom_call.1} parent=11 // pred_check_branch
        %175 = sbr.rel (%p173) target = $region24
      $region23: #{tpu_custom_call.1} parent=11 // pred_region
        _
      $region24: #{tpu_custom_call.1} parent=11 // pred_fallthru
        _
    $region12: #{tpu_custom_call.1} parent=5 // pred_fallthru
      _
    %p176 = scmp.lt.s32.totalorder %s11, 2
    // Predicated region
    $region25: #{tpu_custom_call.1} parent=5 // pred_check
      %p177 = pneg %p176
    $region26: #{tpu_custom_call.1} parent=5 // pred_check_branch
      %179 = sbr.rel (%p177) target = $region28
    $region27: #{tpu_custom_call.1} parent=5 // pred_region
      // Predicated region
      $region29: #{tpu_custom_call.1} parent=27 // pred_check
        %p180 = pneg %p31
      $region30: #{tpu_custom_call.1} parent=27 // pred_check_branch
        %182 = sbr.rel (%p180) target = $region32
      $region31: #{tpu_custom_call.1} parent=27 // pred_region
        %p183 = scmp.lt.s32.totalorder %s11, 1
        %s184 = scalar_select %p183, %s11, 1
        %s185 = smul.addr %s184, 32
        %s186 = smul.addr %s185, 4
        %s187 = scalar_lea.vmem %s0, %s186
      $region32: #{tpu_custom_call.1} parent=27 // pred_fallthru
        _
      // Predicated region
      $region33: #{tpu_custom_call.1} parent=27 // pred_check
        %p188 = pneg %p57
      $region34: #{tpu_custom_call.1} parent=27 // pred_check_branch
        %190 = sbr.rel (%p188) target = $region36
      $region35: #{tpu_custom_call.1} parent=27 // pred_region
        %p191 = scmp.lt.s32.totalorder %s11, 1
        %s192 = scalar_select %p191, %s11, 1
        %s193 = smul.addr %s192, 32
        %s194 = smul.addr %s193, 4
        %s195 = scalar_lea.vmem %s1, %s194
      $region36: #{tpu_custom_call.1} parent=27 // pred_fallthru
        _
    $region28: #{tpu_custom_call.1} parent=5 // pred_fallthru
      _
    %p196 = scmp.le.s32.totalorder 1, %s11
    %p197 = scmp.lt.s32.totalorder %s11, 3
    %p198 = pnand %p196, %p197
    %p199 = pneg %p198
    // Predicated region
    $region37: #{tpu_custom_call.1} parent=5 // pred_check
      _
    $region38: #{tpu_custom_call.1} parent=5 // pred_check_branch
      %201 = sbr.rel (%p198) target = $region40
    $region39: #{tpu_custom_call.1} parent=5 // pred_region
      %s202 = ssub.s32 %s11, 1
      %p203 = scmp.lt.s32.totalorder %s16, 1
      %s204 = scalar_select %p203, %s16, 1
      %s205 = smul.addr %s204, 32
      %s206 = smul.addr %s205, 4
      %s207 = scalar_lea.vmem %s0, %s206
      %p208 = pneg %p37
      %p209 = pneg %p34
      %p210 = scmp.lt.s32.totalorder %s16, 1
      %s211 = scalar_select %p210, %s16, 1
      %s212 = smul.addr %s211, 32
      %s213 = smul.addr %s212, 4
      %s214 = scalar_lea.vmem %s1, %s213
      %p215 = pneg %p63
      %p216 = pneg %p60
      %p217 = pneg %p84
      %p218 = pneg %p81
      %p219 = pneg %p105
      %p220 = pneg %p102
      %p221 = pneg %p126
      %p222 = pneg %p123
      %p223 = pneg %p152
      %p224 = pneg %p149
      %p225 = scmp.lt.s32.totalorder %s16, 1
      %s226 = scalar_select %p225, %s16, 1
      %s227 = smul.addr %s226, 8
      %s228 = smul.addr %s227, 4
      %s229 = scalar_lea.vmem %s5, %s228
      %p230 = scmp.lt.s32.totalorder %s16, 1
      %s231 = scalar_select %p230, %s16, 1
      %s232 = smul.addr %s231, 32
      %s233 = smul.addr %s232, 4
      %s234 = scalar_lea.vmem %s0, %s233
      %p235 = scmp.lt.s32.totalorder %s16, 1
      %s236 = scalar_select %p235, %s16, 1
      %s237 = smul.addr %s236, 32
      %s238 = smul.addr %s237, 4
      %s239 = scalar_lea.vmem %s1, %s238
      %p240 = scmp.lt.s32.totalorder %s16, 1
      %s241 = scalar_select %p240, %s16, 1
      %s242 = smul.addr %s241, 8
      %s243 = smul.addr %s242, 4
      %s244 = scalar_lea.vmem %s5, %s243
      %vm247 = vcmask 11264
      %248 = vst.msk [vmem:[#allocation2] sm:$0xf] %vm247, 0
      %vm249 = vcmask 8192
      %vm250 = vsmask.f32 256
      %vm251 = vmand %vm249, %vm250
      %v252 = vld [vmem:[#allocation2 + $0x4] sm:$0x1]
      %v253 = vsel %vm251, 0, %v252
      %254 = vst [vmem:[#allocation2 + $0x4] sm:$0x1] %v253
      %255 = vst.msk [vmem:[#allocation2 + $0x48] sm:$0xf] %vm247, 0
      %v256 = vld [vmem:[#allocation2 + $0x4c] sm:$0x1]
      %v257 = vsel %vm251, 0, %v256
      %258 = vst [vmem:[#allocation2 + $0x4c] sm:$0x1] %v257
      %259 = vst.msk [vmem:[#allocation2 + $0x90] sm:$0xf] %vm247, 0
      %v260 = vld [vmem:[#allocation2 + $0x94] sm:$0x1]
      %v261 = vsel %vm251, 0, %v260
      %262 = vst [vmem:[#allocation2 + $0x94] sm:$0x1] %v261
      %263 = vst.msk [vmem:[#allocation2 + $0xd8] sm:$0xf] %vm247, 0
      %v264 = vld [vmem:[#allocation2 + $0xdc] sm:$0x1]
      %v265 = vsel %vm251, 0, %v264
      %266 = vst [vmem:[#allocation2 + $0xdc] sm:$0x1] %v265
      %s267 = scalar_lea.vmem [#allocation2], 64
      %268 = vst.msk [vmem:[%s267] sm:$0xf] %vm247, 0
      %v269 = vld [vmem:[%s267 + $0x4] sm:$0x1]
      %v270 = vsel %vm251, 0, %v269
      %271 = vst [vmem:[%s267 + $0x4] sm:$0x1] %v270
      %272 = vst.msk [vmem:[%s267 + $0x48] sm:$0xf] %vm247, 0
      %v273 = vld [vmem:[%s267 + $0x4c] sm:$0x1]
      %v274 = vsel %vm251, 0, %v273
      %275 = vst [vmem:[%s267 + $0x4c] sm:$0x1] %v274
      %276 = vst.msk [vmem:[%s267 + $0x90] sm:$0xf] %vm247, 0
      %v277 = vld [vmem:[%s267 + $0x94] sm:$0x1]
      %v278 = vsel %vm251, 0, %v277
      %279 = vst [vmem:[%s267 + $0x94] sm:$0x1] %v278
      %280 = vst.msk [vmem:[%s267 + $0xd8] sm:$0xf] %vm247, 0
      %v281 = vld [vmem:[%s267 + $0xdc] sm:$0x1]
      %v282 = vsel %vm251, 0, %v281
      %283 = vst [vmem:[%s267 + $0xdc] sm:$0x1] %v282
      %v284 = vld [vmem:[#allocation2] sm:$0x1]
      %v285 = vsel %vm251, 0, %v284
      %286 = vst [vmem:[#allocation2] sm:$0x1] %v285
      %v287 = vld [vmem:[#allocation2 + $0x8] sm:$0x1]
      %v288 = vsel %vm251, 0, %v287
      %289 = vst [vmem:[#allocation2 + $0x8] sm:$0x1] %v288
      %v290 = vld [vmem:[#allocation2 + $0x10] sm:$0x1]
      %v291 = vsel %vm251, 0, %v290
      %292 = vst [vmem:[#allocation2 + $0x10] sm:$0x1] %v291
      %v293 = vld [vmem:[#allocation2 + $0x18] sm:$0x1]
      %v294 = vsel %vm251, 0, %v293
      %295 = vst [vmem:[#allocation2 + $0x18] sm:$0x1] %v294
      %v296 = vld [vmem:[#allocation2 + $0x20] sm:$0x1]
      %v297 = vsel %vm251, 0, %v296
      %298 = vst [vmem:[#allocation2 + $0x20] sm:$0x1] %v297
      %v299 = vld [vmem:[#allocation2 + $0x28] sm:$0x1]
      %v300 = vsel %vm251, 0, %v299
      %301 = vst [vmem:[#allocation2 + $0x28] sm:$0x1] %v300
      %v302 = vld [vmem:[#allocation2 + $0x30] sm:$0x1]
      %v303 = vsel %vm251, 0, %v302
      %304 = vst [vmem:[#allocation2 + $0x30] sm:$0x1] %v303
      %v305 = vld [vmem:[#allocation2 + $0x38] sm:$0x1]
      %v306 = vsel %vm251, 0, %v305
      %307 = vst [vmem:[#allocation2 + $0x38] sm:$0x1] %v306
      %v308 = vld [vmem:[#allocation2 + $0x40] sm:$0x1]
      %v309 = vsel %vm251, 0, %v308
      %310 = vst [vmem:[#allocation2 + $0x40] sm:$0x1] %v309
      %v311 = vld [vmem:[#allocation2 + $0x48] sm:$0x1]
      %v312 = vsel %vm251, 0, %v311
      %313 = vst [vmem:[#allocation2 + $0x48] sm:$0x1] %v312
      %v314 = vld [vmem:[#allocation2 + $0x50] sm:$0x1]
      %v315 = vsel %vm251, 0, %v314
      %316 = vst [vmem:[#allocation2 + $0x50] sm:$0x1] %v315
      %v317 = vld [vmem:[#allocation2 + $0x58] sm:$0x1]
      %v318 = vsel %vm251, 0, %v317
      %319 = vst [vmem:[#allocation2 + $0x58] sm:$0x1] %v318
      %v320 = vld [vmem:[#allocation2 + $0x60] sm:$0x1]
      %v321 = vsel %vm251, 0, %v320
      %322 = vst [vmem:[#allocation2 + $0x60] sm:$0x1] %v321
      %v323 = vld [vmem:[#allocation2 + $0x68] sm:$0x1]
      %v324 = vsel %vm251, 0, %v323
      %325 = vst [vmem:[#allocation2 + $0x68] sm:$0x1] %v324
      %v326 = vld [vmem:[#allocation2 + $0x70] sm:$0x1]
      %v327 = vsel %vm251, 0, %v326
      %328 = vst [vmem:[#allocation2 + $0x70] sm:$0x1] %v327
      %v329 = vld [vmem:[#allocation2 + $0x78] sm:$0x1]
      %v330 = vsel %vm251, 0, %v329
      %331 = vst [vmem:[#allocation2 + $0x78] sm:$0x1] %v330
      %v332 = vld [vmem:[#allocation2 + $0x80] sm:$0x1]
      %v333 = vsel %vm251, 0, %v332
      %334 = vst [vmem:[#allocation2 + $0x80] sm:$0x1] %v333
      %v335 = vld [vmem:[#allocation2 + $0x88] sm:$0x1]
      %v336 = vsel %vm251, 0, %v335
      %337 = vst [vmem:[#allocation2 + $0x88] sm:$0x1] %v336
      %v338 = vld [vmem:[#allocation2 + $0x90] sm:$0x1]
      %v339 = vsel %vm251, 0, %v338
      %340 = vst [vmem:[#allocation2 + $0x90] sm:$0x1] %v339
      %v341 = vld [vmem:[#allocation2 + $0x98] sm:$0x1]
      %v342 = vsel %vm251, 0, %v341
      %343 = vst [vmem:[#allocation2 + $0x98] sm:$0x1] %v342
      %v344 = vld [vmem:[#allocation2 + $0xa0] sm:$0x1]
      %v345 = vsel %vm251, 0, %v344
      %346 = vst [vmem:[#allocation2 + $0xa0] sm:$0x1] %v345
      %v347 = vld [vmem:[#allocation2 + $0xa8] sm:$0x1]
      %v348 = vsel %vm251, 0, %v347
      %349 = vst [vmem:[#allocation2 + $0xa8] sm:$0x1] %v348
      %v350 = vld [vmem:[#allocation2 + $0xb0] sm:$0x1]
      %v351 = vsel %vm251, 0, %v350
      %352 = vst [vmem:[#allocation2 + $0xb0] sm:$0x1] %v351
      %v353 = vld [vmem:[#allocation2 + $0xb8] sm:$0x1]
      %v354 = vsel %vm251, 0, %v353
      %355 = vst [vmem:[#allocation2 + $0xb8] sm:$0x1] %v354
      %v356 = vld [vmem:[#allocation2 + $0xc0] sm:$0x1]
      %v357 = vsel %vm251, 0, %v356
      %358 = vst [vmem:[#allocation2 + $0xc0] sm:$0x1] %v357
      %v359 = vld [vmem:[#allocation2 + $0xc8] sm:$0x1]
      %v360 = vsel %vm251, 0, %v359
      %361 = vst [vmem:[#allocation2 + $0xc8] sm:$0x1] %v360
      %v362 = vld [vmem:[#allocation2 + $0xd0] sm:$0x1]
      %v363 = vsel %vm251, 0, %v362
      %364 = vst [vmem:[#allocation2 + $0xd0] sm:$0x1] %v363
      %v365 = vld [vmem:[#allocation2 + $0xd8] sm:$0x1]
      %v366 = vsel %vm251, 0, %v365
      %367 = vst [vmem:[#allocation2 + $0xd8] sm:$0x1] %v366
      %v368 = vld [vmem:[#allocation2 + $0xe0] sm:$0x1]
      %v369 = vsel %vm251, 0, %v368
      %370 = vst [vmem:[#allocation2 + $0xe0] sm:$0x1] %v369
      %v371 = vld [vmem:[#allocation2 + $0xe8] sm:$0x1]
      %v372 = vsel %vm251, 0, %v371
      %373 = vst [vmem:[#allocation2 + $0xe8] sm:$0x1] %v372
      %v374 = vld [vmem:[#allocation2 + $0xf0] sm:$0x1]
      %v375 = vsel %vm251, 0, %v374
      %376 = vst [vmem:[#allocation2 + $0xf0] sm:$0x1] %v375
      %v377 = vld [vmem:[#allocation2 + $0xf8] sm:$0x1]
      %v378 = vsel %vm251, 0, %v377
      %379 = vst [vmem:[#allocation2 + $0xf8] sm:$0x1] %v378
      %v380 = vld [vmem:[#allocation2 + $0x100] sm:$0x1]
      %v381 = vsel %vm251, 0, %v380
      %382 = vst [vmem:[#allocation2 + $0x100] sm:$0x1] %v381
      %v383 = vld [vmem:[#allocation2 + $0x108] sm:$0x1]
      %v384 = vsel %vm251, 0, %v383
      %385 = vst [vmem:[#allocation2 + $0x108] sm:$0x1] %v384
      %v386 = vld [vmem:[#allocation2 + $0x110] sm:$0x1]
      %v387 = vsel %vm251, 0, %v386
      %388 = vst [vmem:[#allocation2 + $0x110] sm:$0x1] %v387
      %v389 = vld [vmem:[#allocation2 + $0x118] sm:$0x1]
      %v390 = vsel %vm251, 0, %v389
      %391 = vst [vmem:[#allocation2 + $0x118] sm:$0x1] %v390
      %v392 = vld [vmem:[#allocation2 + $0x4] sm:$0x1]
      %v393 = vsel %vm251, 0, %v392
      %394 = vst [vmem:[#allocation2 + $0x4] sm:$0x1] %v393
      %v395 = vld [vmem:[#allocation2 + $0xc] sm:$0x1]
      %v396 = vsel %vm251, 0, %v395
      %397 = vst [vmem:[#allocation2 + $0xc] sm:$0x1] %v396
      %v398 = vld [vmem:[#allocation2 + $0x14] sm:$0x1]
      %v399 = vsel %vm251, 0, %v398
      %400 = vst [vmem:[#allocation2 + $0x14] sm:$0x1] %v399
      %v401 = vld [vmem:[#allocation2 + $0x1c] sm:$0x1]
      %v402 = vsel %vm251, 0, %v401
      %403 = vst [vmem:[#allocation2 + $0x1c] sm:$0x1] %v402
      %v404 = vld [vmem:[#allocation2 + $0x24] sm:$0x1]
      %v405 = vsel %vm251, 0, %v404
      %406 = vst [vmem:[#allocation2 + $0x24] sm:$0x1] %v405
      %v407 = vld [vmem:[#allocation2 + $0x2c] sm:$0x1]
      %v408 = vsel %vm251, 0, %v407
      %409 = vst [vmem:[#allocation2 + $0x2c] sm:$0x1] %v408
      %v410 = vld [vmem:[#allocation2 + $0x34] sm:$0x1]
      %v411 = vsel %vm251, 0, %v410
      %412 = vst [vmem:[#allocation2 + $0x34] sm:$0x1] %v411
      %v413 = vld [vmem:[#allocation2 + $0x3c] sm:$0x1]
      %v414 = vsel %vm251, 0, %v413
      %415 = vst [vmem:[#allocation2 + $0x3c] sm:$0x1] %v414
      %v416 = vld [vmem:[#allocation2 + $0x44] sm:$0x1]
      %v417 = vsel %vm251, 0, %v416
      %418 = vst [vmem:[#allocation2 + $0x44] sm:$0x1] %v417
      %v419 = vld [vmem:[#allocation2 + $0x4c] sm:$0x1]
      %v420 = vsel %vm251, 0, %v419
      %421 = vst [vmem:[#allocation2 + $0x4c] sm:$0x1] %v420
      %v422 = vld [vmem:[#allocation2 + $0x54] sm:$0x1]
      %v423 = vsel %vm251, 0, %v422
      %424 = vst [vmem:[#allocation2 + $0x54] sm:$0x1] %v423
      %v425 = vld [vmem:[#allocation2 + $0x5c] sm:$0x1]
      %v426 = vsel %vm251, 0, %v425
      %427 = vst [vmem:[#allocation2 + $0x5c] sm:$0x1] %v426
      %v428 = vld [vmem:[#allocation2 + $0x64] sm:$0x1]
      %v429 = vsel %vm251, 0, %v428
      %430 = vst [vmem:[#allocation2 + $0x64] sm:$0x1] %v429
      %v431 = vld [vmem:[#allocation2 + $0x6c] sm:$0x1]
      %v432 = vsel %vm251, 0, %v431
      %433 = vst [vmem:[#allocation2 + $0x6c] sm:$0x1] %v432
      %v434 = vld [vmem:[#allocation2 + $0x74] sm:$0x1]
      %v435 = vsel %vm251, 0, %v434
      %436 = vst [vmem:[#allocation2 + $0x74] sm:$0x1] %v435
      %v437 = vld [vmem:[#allocation2 + $0x7c] sm:$0x1]
      %v438 = vsel %vm251, 0, %v437
      %439 = vst [vmem:[#allocation2 + $0x7c] sm:$0x1] %v438
      %v440 = vld [vmem:[#allocation2 + $0x84] sm:$0x1]
      %v441 = vsel %vm251, 0, %v440
      %442 = vst [vmem:[#allocation2 + $0x84] sm:$0x1] %v441
      %v443 = vld [vmem:[#allocation2 + $0x8c] sm:$0x1]
      %v444 = vsel %vm251, 0, %v443
      %445 = vst [vmem:[#allocation2 + $0x8c] sm:$0x1] %v444
      %v446 = vld [vmem:[#allocation2 + $0x94] sm:$0x1]
      %v447 = vsel %vm251, 0, %v446
      %448 = vst [vmem:[#allocation2 + $0x94] sm:$0x1] %v447
      %v449 = vld [vmem:[#allocation2 + $0x9c] sm:$0x1]
      %v450 = vsel %vm251, 0, %v449
      %451 = vst [vmem:[#allocation2 + $0x9c] sm:$0x1] %v450
      %v452 = vld [vmem:[#allocation2 + $0xa4] sm:$0x1]
      %v453 = vsel %vm251, 0, %v452
      %454 = vst [vmem:[#allocation2 + $0xa4] sm:$0x1] %v453
      %v455 = vld [vmem:[#allocation2 + $0xac] sm:$0x1]
      %v456 = vsel %vm251, 0, %v455
      %457 = vst [vmem:[#allocation2 + $0xac] sm:$0x1] %v456
      %v458 = vld [vmem:[#allocation2 + $0xb4] sm:$0x1]
      %v459 = vsel %vm251, 0, %v458
      %460 = vst [vmem:[#allocation2 + $0xb4] sm:$0x1] %v459
      %v461 = vld [vmem:[#allocation2 + $0xbc] sm:$0x1]
      %v462 = vsel %vm251, 0, %v461
      %463 = vst [vmem:[#allocation2 + $0xbc] sm:$0x1] %v462
      %v464 = vld [vmem:[#allocation2 + $0xc4] sm:$0x1]
      %v465 = vsel %vm251, 0, %v464
      %466 = vst [vmem:[#allocation2 + $0xc4] sm:$0x1] %v465
      %v467 = vld [vmem:[#allocation2 + $0xcc] sm:$0x1]
      %v468 = vsel %vm251, 0, %v467
      %469 = vst [vmem:[#allocation2 + $0xcc] sm:$0x1] %v468
      %v470 = vld [vmem:[#allocation2 + $0xd4] sm:$0x1]
      %v471 = vsel %vm251, 0, %v470
      %472 = vst [vmem:[#allocation2 + $0xd4] sm:$0x1] %v471
      %v473 = vld [vmem:[#allocation2 + $0xdc] sm:$0x1]
      %v474 = vsel %vm251, 0, %v473
      %475 = vst [vmem:[#allocation2 + $0xdc] sm:$0x1] %v474
      %v476 = vld [vmem:[#allocation2 + $0xe4] sm:$0x1]
      %v477 = vsel %vm251, 0, %v476
      %478 = vst [vmem:[#allocation2 + $0xe4] sm:$0x1] %v477
      %v479 = vld [vmem:[#allocation2 + $0xec] sm:$0x1]
      %v480 = vsel %vm251, 0, %v479
      %481 = vst [vmem:[#allocation2 + $0xec] sm:$0x1] %v480
      %v482 = vld [vmem:[#allocation2 + $0xf4] sm:$0x1]
      %v483 = vsel %vm251, 0, %v482
      %484 = vst [vmem:[#allocation2 + $0xf4] sm:$0x1] %v483
      %v485 = vld [vmem:[#allocation2 + $0xfc] sm:$0x1]
      %v486 = vsel %vm251, 0, %v485
      %487 = vst [vmem:[#allocation2 + $0xfc] sm:$0x1] %v486
      %v488 = vld [vmem:[#allocation2 + $0x104] sm:$0x1]
      %v489 = vsel %vm251, 0, %v488
      %490 = vst [vmem:[#allocation2 + $0x104] sm:$0x1] %v489
      %v491 = vld [vmem:[#allocation2 + $0x10c] sm:$0x1]
      %v492 = vsel %vm251, 0, %v491
      %493 = vst [vmem:[#allocation2 + $0x10c] sm:$0x1] %v492
      %v494 = vld [vmem:[#allocation2 + $0x114] sm:$0x1]
      %v495 = vsel %vm251, 0, %v494
      %496 = vst [vmem:[#allocation2 + $0x114] sm:$0x1] %v495
      %v497 = vld [vmem:[#allocation2 + $0x11c] sm:$0x1]
      %v498 = vsel %vm251, 0, %v497
      %499 = vst [vmem:[#allocation2 + $0x11c] sm:$0x1] %v498
      %500 = vst.msk [vmem:[#allocation3] sm:$0xf] %vm247, 4286644096
      %v501 = vld [vmem:[#allocation3 + $0x4] sm:$0x1]
      %v502 = vsel %vm251, 4286644096, %v501
      %503 = vst [vmem:[#allocation3 + $0x4] sm:$0x1] %v502
      %504 = vst.msk [vmem:[#allocation3 + $0x48] sm:$0xf] %vm247, 4286644096
      %v505 = vld [vmem:[#allocation3 + $0x4c] sm:$0x1]
      %v506 = vsel %vm251, 4286644096, %v505
      %507 = vst [vmem:[#allocation3 + $0x4c] sm:$0x1] %v506
      %508 = vst.msk [vmem:[#allocation3 + $0x90] sm:$0xf] %vm247, 4286644096
      %v509 = vld [vmem:[#allocation3 + $0x94] sm:$0x1]
      %v510 = vsel %vm251, 4286644096, %v509
      %511 = vst [vmem:[#allocation3 + $0x94] sm:$0x1] %v510
      %512 = vst.msk [vmem:[#allocation3 + $0xd8] sm:$0xf] %vm247, 4286644096
      %v513 = vld [vmem:[#allocation3 + $0xdc] sm:$0x1]
      %v514 = vsel %vm251, 4286644096, %v513
      %515 = vst [vmem:[#allocation3 + $0xdc] sm:$0x1] %v514
      %s516 = scalar_lea.vmem [#allocation3], 64
      %517 = vst.msk [vmem:[%s516] sm:$0xf] %vm247, 4286644096
      %v518 = vld [vmem:[%s516 + $0x4] sm:$0x1]
      %v519 = vsel %vm251, 4286644096, %v518
      %520 = vst [vmem:[%s516 + $0x4] sm:$0x1] %v519
      %521 = vst.msk [vmem:[%s516 + $0x48] sm:$0xf] %vm247, 4286644096
      %v522 = vld [vmem:[%s516 + $0x4c] sm:$0x1]
      %v523 = vsel %vm251, 4286644096, %v522
      %524 = vst [vmem:[%s516 + $0x4c] sm:$0x1] %v523
      %525 = vst.msk [vmem:[%s516 + $0x90] sm:$0xf] %vm247, 4286644096
      %v526 = vld [vmem:[%s516 + $0x94] sm:$0x1]
      %v527 = vsel %vm251, 4286644096, %v526
      %528 = vst [vmem:[%s516 + $0x94] sm:$0x1] %v527
      %529 = vst.msk [vmem:[%s516 + $0xd8] sm:$0xf] %vm247, 4286644096
      %v530 = vld [vmem:[%s516 + $0xdc] sm:$0x1]
      %v531 = vsel %vm251, 4286644096, %v530
      %532 = vst [vmem:[%s516 + $0xdc] sm:$0x1] %v531
      %v533 = vld [vmem:[#allocation3] sm:$0x1]
      %v534 = vsel %vm251, 4286644096, %v533
      %535 = vst [vmem:[#allocation3] sm:$0x1] %v534
      %v536 = vld [vmem:[#allocation3 + $0x8] sm:$0x1]
      %v537 = vsel %vm251, 4286644096, %v536
      %538 = vst [vmem:[#allocation3 + $0x8] sm:$0x1] %v537
      %v539 = vld [vmem:[#allocation3 + $0x10] sm:$0x1]
      %v540 = vsel %vm251, 4286644096, %v539
      %541 = vst [vmem:[#allocation3 + $0x10] sm:$0x1] %v540
      %v542 = vld [vmem:[#allocation3 + $0x18] sm:$0x1]
      %v543 = vsel %vm251, 4286644096, %v542
      %544 = vst [vmem:[#allocation3 + $0x18] sm:$0x1] %v543
      %v545 = vld [vmem:[#allocation3 + $0x20] sm:$0x1]
      %v546 = vsel %vm251, 4286644096, %v545
      %547 = vst [vmem:[#allocation3 + $0x20] sm:$0x1] %v546
      %v548 = vld [vmem:[#allocation3 + $0x28] sm:$0x1]
      %v549 = vsel %vm251, 4286644096, %v548
      %550 = vst [vmem:[#allocation3 + $0x28] sm:$0x1] %v549
      %v551 = vld [vmem:[#allocation3 + $0x30] sm:$0x1]
      %v552 = vsel %vm251, 4286644096, %v551
      %553 = vst [vmem:[#allocation3 + $0x30] sm:$0x1] %v552
      %v554 = vld [vmem:[#allocation3 + $0x38] sm:$0x1]
      %v555 = vsel %vm251, 4286644096, %v554
      %556 = vst [vmem:[#allocation3 + $0x38] sm:$0x1] %v555
      %v557 = vld [vmem:[#allocation3 + $0x40] sm:$0x1]
      %v558 = vsel %vm251, 4286644096, %v557
      %559 = vst [vmem:[#allocation3 + $0x40] sm:$0x1] %v558
      %v560 = vld [vmem:[#allocation3 + $0x48] sm:$0x1]
      %v561 = vsel %vm251, 4286644096, %v560
      %562 = vst [vmem:[#allocation3 + $0x48] sm:$0x1] %v561
      %v563 = vld [vmem:[#allocation3 + $0x50] sm:$0x1]
      %v564 = vsel %vm251, 4286644096, %v563
      %565 = vst [vmem:[#allocation3 + $0x50] sm:$0x1] %v564
      %v566 = vld [vmem:[#allocation3 + $0x58] sm:$0x1]
      %v567 = vsel %vm251, 4286644096, %v566
      %568 = vst [vmem:[#allocation3 + $0x58] sm:$0x1] %v567
      %v569 = vld [vmem:[#allocation3 + $0x60] sm:$0x1]
      %v570 = vsel %vm251, 4286644096, %v569
      %571 = vst [vmem:[#allocation3 + $0x60] sm:$0x1] %v570
      %v572 = vld [vmem:[#allocation3 + $0x68] sm:$0x1]
      %v573 = vsel %vm251, 4286644096, %v572
      %574 = vst [vmem:[#allocation3 + $0x68] sm:$0x1] %v573
      %v575 = vld [vmem:[#allocation3 + $0x70] sm:$0x1]
      %v576 = vsel %vm251, 4286644096, %v575
      %577 = vst [vmem:[#allocation3 + $0x70] sm:$0x1] %v576
      %v578 = vld [vmem:[#allocation3 + $0x78] sm:$0x1]
      %v579 = vsel %vm251, 4286644096, %v578
      %580 = vst [vmem:[#allocation3 + $0x78] sm:$0x1] %v579
      %v581 = vld [vmem:[#allocation3 + $0x80] sm:$0x1]
      %v582 = vsel %vm251, 4286644096, %v581
      %583 = vst [vmem:[#allocation3 + $0x80] sm:$0x1] %v582
      %v584 = vld [vmem:[#allocation3 + $0x88] sm:$0x1]
      %v585 = vsel %vm251, 4286644096, %v584
      %586 = vst [vmem:[#allocation3 + $0x88] sm:$0x1] %v585
      %v587 = vld [vmem:[#allocation3 + $0x90] sm:$0x1]
      %v588 = vsel %vm251, 4286644096, %v587
      %589 = vst [vmem:[#allocation3 + $0x90] sm:$0x1] %v588
      %v590 = vld [vmem:[#allocation3 + $0x98] sm:$0x1]
      %v591 = vsel %vm251, 4286644096, %v590
      %592 = vst [vmem:[#allocation3 + $0x98] sm:$0x1] %v591
      %v593 = vld [vmem:[#allocation3 + $0xa0] sm:$0x1]
      %v594 = vsel %vm251, 4286644096, %v593
      %595 = vst [vmem:[#allocation3 + $0xa0] sm:$0x1] %v594
      %v596 = vld [vmem:[#allocation3 + $0xa8] sm:$0x1]
      %v597 = vsel %vm251, 4286644096, %v596
      %598 = vst [vmem:[#allocation3 + $0xa8] sm:$0x1] %v597
      %v599 = vld [vmem:[#allocation3 + $0xb0] sm:$0x1]
      %v600 = vsel %vm251, 4286644096, %v599
      %601 = vst [vmem:[#allocation3 + $0xb0] sm:$0x1] %v600
      %v602 = vld [vmem:[#allocation3 + $0xb8] sm:$0x1]
      %v603 = vsel %vm251, 4286644096, %v602
      %604 = vst [vmem:[#allocation3 + $0xb8] sm:$0x1] %v603
      %v605 = vld [vmem:[#allocation3 + $0xc0] sm:$0x1]
      %v606 = vsel %vm251, 4286644096, %v605
      %607 = vst [vmem:[#allocation3 + $0xc0] sm:$0x1] %v606
      %v608 = vld [vmem:[#allocation3 + $0xc8] sm:$0x1]
      %v609 = vsel %vm251, 4286644096, %v608
      %610 = vst [vmem:[#allocation3 + $0xc8] sm:$0x1] %v609
      %v611 = vld [vmem:[#allocation3 + $0xd0] sm:$0x1]
      %v612 = vsel %vm251, 4286644096, %v611
      %613 = vst [vmem:[#allocation3 + $0xd0] sm:$0x1] %v612
      %v614 = vld [vmem:[#allocation3 + $0xd8] sm:$0x1]
      %v615 = vsel %vm251, 4286644096, %v614
      %616 = vst [vmem:[#allocation3 + $0xd8] sm:$0x1] %v615
      %v617 = vld [vmem:[#allocation3 + $0xe0] sm:$0x1]
      %v618 = vsel %vm251, 4286644096, %v617
      %619 = vst [vmem:[#allocation3 + $0xe0] sm:$0x1] %v618
      %v620 = vld [vmem:[#allocation3 + $0xe8] sm:$0x1]
      %v621 = vsel %vm251, 4286644096, %v620
      %622 = vst [vmem:[#allocation3 + $0xe8] sm:$0x1] %v621
      %v623 = vld [vmem:[#allocation3 + $0xf0] sm:$0x1]
      %v624 = vsel %vm251, 4286644096, %v623
      %625 = vst [vmem:[#allocation3 + $0xf0] sm:$0x1] %v624
      %v626 = vld [vmem:[#allocation3 + $0xf8] sm:$0x1]
      %v627 = vsel %vm251, 4286644096, %v626
      %628 = vst [vmem:[#allocation3 + $0xf8] sm:$0x1] %v627
      %v629 = vld [vmem:[#allocation3 + $0x100] sm:$0x1]
      %v630 = vsel %vm251, 4286644096, %v629
      %631 = vst [vmem:[#allocation3 + $0x100] sm:$0x1] %v630
      %v632 = vld [vmem:[#allocation3 + $0x108] sm:$0x1]
      %v633 = vsel %vm251, 4286644096, %v632
      %634 = vst [vmem:[#allocation3 + $0x108] sm:$0x1] %v633
      %v635 = vld [vmem:[#allocation3 + $0x110] sm:$0x1]
      %v636 = vsel %vm251, 4286644096, %v635
      %637 = vst [vmem:[#allocation3 + $0x110] sm:$0x1] %v636
      %v638 = vld [vmem:[#allocation3 + $0x118] sm:$0x1]
      %v639 = vsel %vm251, 4286644096, %v638
      %640 = vst [vmem:[#allocation3 + $0x118] sm:$0x1] %v639
      %v641 = vld [vmem:[#allocation3 + $0x4] sm:$0x1]
      %v642 = vsel %vm251, 4286644096, %v641
      %643 = vst [vmem:[#allocation3 + $0x4] sm:$0x1] %v642
      %v644 = vld [vmem:[#allocation3 + $0xc] sm:$0x1]
      %v645 = vsel %vm251, 4286644096, %v644
      %646 = vst [vmem:[#allocation3 + $0xc] sm:$0x1] %v645
      %v647 = vld [vmem:[#allocation3 + $0x14] sm:$0x1]
      %v648 = vsel %vm251, 4286644096, %v647
      %649 = vst [vmem:[#allocation3 + $0x14] sm:$0x1] %v648
      %v650 = vld [vmem:[#allocation3 + $0x1c] sm:$0x1]
      %v651 = vsel %vm251, 4286644096, %v650
      %652 = vst [vmem:[#allocation3 + $0x1c] sm:$0x1] %v651
      %v653 = vld [vmem:[#allocation3 + $0x24] sm:$0x1]
      %v654 = vsel %vm251, 4286644096, %v653
      %655 = vst [vmem:[#allocation3 + $0x24] sm:$0x1] %v654
      %v656 = vld [vmem:[#allocation3 + $0x2c] sm:$0x1]
      %v657 = vsel %vm251, 4286644096, %v656
      %658 = vst [vmem:[#allocation3 + $0x2c] sm:$0x1] %v657
      %v659 = vld [vmem:[#allocation3 + $0x34] sm:$0x1]
      %v660 = vsel %vm251, 4286644096, %v659
      %661 = vst [vmem:[#allocation3 + $0x34] sm:$0x1] %v660
      %v662 = vld [vmem:[#allocation3 + $0x3c] sm:$0x1]
      %v663 = vsel %vm251, 4286644096, %v662
      %664 = vst [vmem:[#allocation3 + $0x3c] sm:$0x1] %v663
      %v665 = vld [vmem:[#allocation3 + $0x44] sm:$0x1]
      %v666 = vsel %vm251, 4286644096, %v665
      %667 = vst [vmem:[#allocation3 + $0x44] sm:$0x1] %v666
      %v668 = vld [vmem:[#allocation3 + $0x4c] sm:$0x1]
      %v669 = vsel %vm251, 4286644096, %v668
      %670 = vst [vmem:[#allocation3 + $0x4c] sm:$0x1] %v669
      %v671 = vld [vmem:[#allocation3 + $0x54] sm:$0x1]
      %v672 = vsel %vm251, 4286644096, %v671
      %673 = vst [vmem:[#allocation3 + $0x54] sm:$0x1] %v672
      %v674 = vld [vmem:[#allocation3 + $0x5c] sm:$0x1]
      %v675 = vsel %vm251, 4286644096, %v674
      %676 = vst [vmem:[#allocation3 + $0x5c] sm:$0x1] %v675
      %v677 = vld [vmem:[#allocation3 + $0x64] sm:$0x1]
      %v678 = vsel %vm251, 4286644096, %v677
      %679 = vst [vmem:[#allocation3 + $0x64] sm:$0x1] %v678
      %v680 = vld [vmem:[#allocation3 + $0x6c] sm:$0x1]
      %v681 = vsel %vm251, 4286644096, %v680
      %682 = vst [vmem:[#allocation3 + $0x6c] sm:$0x1] %v681
      %v683 = vld [vmem:[#allocation3 + $0x74] sm:$0x1]
      %v684 = vsel %vm251, 4286644096, %v683
      %685 = vst [vmem:[#allocation3 + $0x74] sm:$0x1] %v684
      %v686 = vld [vmem:[#allocation3 + $0x7c] sm:$0x1]
      %v687 = vsel %vm251, 4286644096, %v686
      %688 = vst [vmem:[#allocation3 + $0x7c] sm:$0x1] %v687
      %v689 = vld [vmem:[#allocation3 + $0x84] sm:$0x1]
      %v690 = vsel %vm251, 4286644096, %v689
      %691 = vst [vmem:[#allocation3 + $0x84] sm:$0x1] %v690
      %v692 = vld [vmem:[#allocation3 + $0x8c] sm:$0x1]
      %v693 = vsel %vm251, 4286644096, %v692
      %694 = vst [vmem:[#allocation3 + $0x8c] sm:$0x1] %v693
      %v695 = vld [vmem:[#allocation3 + $0x94] sm:$0x1]
      %v696 = vsel %vm251, 4286644096, %v695
      %697 = vst [vmem:[#allocation3 + $0x94] sm:$0x1] %v696
      %v698 = vld [vmem:[#allocation3 + $0x9c] sm:$0x1]
      %v699 = vsel %vm251, 4286644096, %v698
      %700 = vst [vmem:[#allocation3 + $0x9c] sm:$0x1] %v699
      %v701 = vld [vmem:[#allocation3 + $0xa4] sm:$0x1]
      %v702 = vsel %vm251, 4286644096, %v701
      %703 = vst [vmem:[#allocation3 + $0xa4] sm:$0x1] %v702
      %v704 = vld [vmem:[#allocation3 + $0xac] sm:$0x1]
      %v705 = vsel %vm251, 4286644096, %v704
      %706 = vst [vmem:[#allocation3 + $0xac] sm:$0x1] %v705
      %v707 = vld [vmem:[#allocation3 + $0xb4] sm:$0x1]
      %v708 = vsel %vm251, 4286644096, %v707
      %709 = vst [vmem:[#allocation3 + $0xb4] sm:$0x1] %v708
      %v710 = vld [vmem:[#allocation3 + $0xbc] sm:$0x1]
      %v711 = vsel %vm251, 4286644096, %v710
      %712 = vst [vmem:[#allocation3 + $0xbc] sm:$0x1] %v711
      %v713 = vld [vmem:[#allocation3 + $0xc4] sm:$0x1]
      %v714 = vsel %vm251, 4286644096, %v713
      %715 = vst [vmem:[#allocation3 + $0xc4] sm:$0x1] %v714
      %v716 = vld [vmem:[#allocation3 + $0xcc] sm:$0x1]
      %v717 = vsel %vm251, 4286644096, %v716
      %718 = vst [vmem:[#allocation3 + $0xcc] sm:$0x1] %v717
      %v719 = vld [vmem:[#allocation3 + $0xd4] sm:$0x1]
      %v720 = vsel %vm251, 4286644096, %v719
      %721 = vst [vmem:[#allocation3 + $0xd4] sm:$0x1] %v720
      %v722 = vld [vmem:[#allocation3 + $0xdc] sm:$0x1]
      %v723 = vsel %vm251, 4286644096, %v722
      %724 = vst [vmem:[#allocation3 + $0xdc] sm:$0x1] %v723
      %v725 = vld [vmem:[#allocation3 + $0xe4] sm:$0x1]
      %v726 = vsel %vm251, 4286644096, %v725
      %727 = vst [vmem:[#allocation3 + $0xe4] sm:$0x1] %v726
      %v728 = vld [vmem:[#allocation3 + $0xec] sm:$0x1]
      %v729 = vsel %vm251, 4286644096, %v728
      %730 = vst [vmem:[#allocation3 + $0xec] sm:$0x1] %v729
      %v731 = vld [vmem:[#allocation3 + $0xf4] sm:$0x1]
      %v732 = vsel %vm251, 4286644096, %v731
      %733 = vst [vmem:[#allocation3 + $0xf4] sm:$0x1] %v732
      %v734 = vld [vmem:[#allocation3 + $0xfc] sm:$0x1]
      %v735 = vsel %vm251, 4286644096, %v734
      %736 = vst [vmem:[#allocation3 + $0xfc] sm:$0x1] %v735
      %v737 = vld [vmem:[#allocation3 + $0x104] sm:$0x1]
      %v738 = vsel %vm251, 4286644096, %v737
      %739 = vst [vmem:[#allocation3 + $0x104] sm:$0x1] %v738
      %v740 = vld [vmem:[#allocation3 + $0x10c] sm:$0x1]
      %v741 = vsel %vm251, 4286644096, %v740
      %742 = vst [vmem:[#allocation3 + $0x10c] sm:$0x1] %v741
      %v743 = vld [vmem:[#allocation3 + $0x114] sm:$0x1]
      %v744 = vsel %vm251, 4286644096, %v743
      %745 = vst [vmem:[#allocation3 + $0x114] sm:$0x1] %v744
      %v746 = vld [vmem:[#allocation3 + $0x11c] sm:$0x1]
      %v747 = vsel %vm251, 4286644096, %v746
      %748 = vst [vmem:[#allocation3 + $0x11c] sm:$0x1] %v747
      %v749 = vld [vmem:[%s2] sm:$0xf]
      %v750 = vld [vmem:[%s2 + $0x4] sm:$0xf]
      %v751 = vld [vmem:[%s2 + $0x8] sm:$0x1]
      %v752 = vld [vmem:[%s3] sm:$0x1]
      %v753 = vld [vmem:[%s4] sm:$0x1]
      %v754 = vld [vmem:[%s4 + $0x1] sm:$0x1]
      %v755 = vld [vmem:[%s234] sm:$0xf]
      %v756 = vld [vmem:[%s234 + $0x4] sm:$0xf]
      %v757 = vld [vmem:[%s234 + $0x8] sm:$0xf]
      %v758 = vld [vmem:[%s234 + $0xc] sm:$0xf]
      %v759 = vld [vmem:[%s234 + $0x10] sm:$0xf]
      %v760 = vld [vmem:[%s234 + $0x14] sm:$0xf]
      %v761 = vld [vmem:[%s234 + $0x18] sm:$0xf]
      %v762 = vld [vmem:[%s234 + $0x1c] sm:$0xf]
      %v763 = vunpack.c.l.bf16 %v755
      %v764 = vunpack.c.l.bf16 %v756
      %v765 = vunpack.c.l.bf16 %v757
      %v766 = vunpack.c.l.bf16 %v758
      %v767 = vunpack.c.l.bf16 %v759
      %v768 = vunpack.c.l.bf16 %v760
      %v769 = vunpack.c.l.bf16 %v761
      %v770 = vunpack.c.l.bf16 %v762
      %s771 = scalar_lea.vmem %s234, 32
      %v772 = vld [vmem:[%s771] sm:$0xf]
      %v773 = vld [vmem:[%s771 + $0x4] sm:$0xf]
      %v774 = vld [vmem:[%s771 + $0x8] sm:$0xf]
      %v775 = vld [vmem:[%s771 + $0xc] sm:$0xf]
      %v776 = vld [vmem:[%s771 + $0x10] sm:$0xf]
      %v777 = vld [vmem:[%s771 + $0x14] sm:$0xf]
      %v778 = vld [vmem:[%s771 + $0x18] sm:$0xf]
      %v779 = vld [vmem:[%s771 + $0x1c] sm:$0xf]
      %v780 = vunpack.c.l.bf16 %v772
      %v781 = vunpack.c.l.bf16 %v773
      %v782 = vunpack.c.l.bf16 %v774
      %v783 = vunpack.c.l.bf16 %v775
      %v784 = vunpack.c.l.bf16 %v776
      %v785 = vunpack.c.l.bf16 %v777
      %v786 = vunpack.c.l.bf16 %v778
      %v787 = vunpack.c.l.bf16 %v779
      %s788 = scalar_lea.vmem %s234, 64
      %v789 = vld [vmem:[%s788] sm:$0xf]
      %v790 = vld [vmem:[%s788 + $0x4] sm:$0xf]
      %v791 = vld [vmem:[%s788 + $0x8] sm:$0xf]
      %v792 = vld [vmem:[%s788 + $0xc] sm:$0xf]
      %v793 = vld [vmem:[%s788 + $0x10] sm:$0xf]
      %v794 = vld [vmem:[%s788 + $0x14] sm:$0xf]
      %v795 = vld [vmem:[%s788 + $0x18] sm:$0xf]
      %v796 = vld [vmem:[%s788 + $0x1c] sm:$0xf]
      %v797 = vunpack.c.l.bf16 %v789
      %v798 = vunpack.c.l.bf16 %v790
      %v799 = vunpack.c.l.bf16 %v791
      %v800 = vunpack.c.l.bf16 %v792
      %v801 = vunpack.c.l.bf16 %v793
      %v802 = vunpack.c.l.bf16 %v794
      %v803 = vunpack.c.l.bf16 %v795
      %v804 = vunpack.c.l.bf16 %v796
      %s805 = scalar_lea.vmem %s234, 96
      %v806 = vld [vmem:[%s805] sm:$0xf]
      %v807 = vld [vmem:[%s805 + $0x4] sm:$0xf]
      %v808 = vld [vmem:[%s805 + $0x8] sm:$0xf]
      %v809 = vld [vmem:[%s805 + $0xc] sm:$0xf]
      %v810 = vld [vmem:[%s805 + $0x10] sm:$0xf]
      %v811 = vld [vmem:[%s805 + $0x14] sm:$0xf]
      %v812 = vld [vmem:[%s805 + $0x18] sm:$0xf]
      %v813 = vld [vmem:[%s805 + $0x1c] sm:$0xf]
      %v814 = vunpack.c.l.bf16 %v806
      %v815 = vunpack.c.l.bf16 %v807
      %v816 = vunpack.c.l.bf16 %v808
      %v817 = vunpack.c.l.bf16 %v809
      %v818 = vunpack.c.l.bf16 %v810
      %v819 = vunpack.c.l.bf16 %v811
      %v820 = vunpack.c.l.bf16 %v812
      %v821 = vunpack.c.l.bf16 %v813
      %v822 = vadd.f32 %v763, %v797
      %v823 = vadd.f32 %v764, %v798
      %v824 = vadd.f32 %v765, %v799
      %v825 = vadd.f32 %v766, %v800
      %v826 = vadd.f32 %v767, %v801
      %v827 = vadd.f32 %v768, %v802
      %v828 = vadd.f32 %v769, %v803
      %v829 = vadd.f32 %v770, %v804
      %v830 = vadd.f32 %v780, %v814
      %v831 = vadd.f32 %v781, %v815
      %v832 = vadd.f32 %v782, %v816
      %v833 = vadd.f32 %v783, %v817
      %v834 = vadd.f32 %v784, %v818
      %v835 = vadd.f32 %v785, %v819
      %v836 = vadd.f32 %v786, %v820
      %v837 = vadd.f32 %v787, %v821
      %v838 = vadd.f32 %v797, %v764
      %v839 = vadd.f32 %v798, %v765
      %v840 = vadd.f32 %v799, %v766
      %v841 = vadd.f32 %v800, %v767
      %v842 = vadd.f32 %v801, %v768
      %v843 = vadd.f32 %v802, %v769
      %v844 = vadd.f32 %v803, %v770
      %v845 = vadd.f32 %v814, %v781
      %v846 = vadd.f32 %v815, %v782
      %v847 = vadd.f32 %v816, %v783
      %v848 = vadd.f32 %v817, %v784
      %v849 = vadd.f32 %v818, %v785
      %v850 = vadd.f32 %v819, %v786
      %v851 = vadd.f32 %v820, %v787
      %v852 = vadd.f32 %v822, %v830
      %v853 = vadd.f32 %v823, %v831
      %v854 = vadd.f32 %v824, %v832
      %v855 = vadd.f32 %v825, %v833
      %v856 = vadd.f32 %v826, %v834
      %v857 = vadd.f32 %v827, %v835
      %v858 = vadd.f32 %v828, %v836
      %v859 = vadd.f32 %v829, %v837
      %v860 = vmul.f32 %v852, 0.25
      %v861 = vmul.f32 %v853, 0.25
      %v862 = vmul.f32 %v854, 0.25
      %v863 = vmul.f32 %v855, 0.25
      %v864 = vmul.f32 %v856, 0.25
      %v865 = vmul.f32 %v857, 0.25
      %v866 = vmul.f32 %v858, 0.25
      %v867 = vmul.f32 %v859, 0.25
      %v868 = vpack.c.bf16 %v860, %v860
      %v869 = vpack.c.bf16 %v861, %v861
      %v870 = vpack.c.bf16 %v862, %v862
      %v871 = vpack.c.bf16 %v863, %v863
      %v872 = vpack.c.bf16 %v864, %v864
      %v873 = vpack.c.bf16 %v865, %v865
      %v874 = vpack.c.bf16 %v866, %v866
      %v875 = vpack.c.bf16 %v867, %v867
      %s876 = scalar_lea.vmem [#allocation2], 216
      %877 = vst.msk [vmem:[%s876] sm:$0xf] %vm247, %v868
      %878 = vst.msk [vmem:[%s876 + $0x8] sm:$0xf] %vm247, %v869
      %879 = vst.msk [vmem:[%s876 + $0x10] sm:$0xf] %vm247, %v870
      %880 = vst.msk [vmem:[%s876 + $0x18] sm:$0xf] %vm247, %v871
      %881 = vst.msk [vmem:[%s876 + $0x20] sm:$0xf] %vm247, %v872
      %882 = vst.msk [vmem:[%s876 + $0x28] sm:$0xf] %vm247, %v873
      %883 = vst.msk [vmem:[%s876 + $0x30] sm:$0xf] %vm247, %v874
      %884 = vst.msk [vmem:[%s876 + $0x38] sm:$0xf] %vm247, %v875
      %v893 = vrot.slane %v822, 1
      %v894 = vrot.slane %v823, 1
      %v895 = vrot.slane %v824, 1
      %v896 = vrot.slane %v825, 1
      %v897 = vrot.slane %v826, 1
      %v898 = vrot.slane %v827, 1
      %v899 = vrot.slane %v828, 1
      %v900 = vrot.slane %v829, 1
      %v909 = vadd.f32 %v830, %v893
      %v910 = vadd.f32 %v831, %v894
      %v911 = vadd.f32 %v832, %v895
      %v912 = vadd.f32 %v833, %v896
      %v913 = vadd.f32 %v834, %v897
      %v914 = vadd.f32 %v835, %v898
      %v915 = vadd.f32 %v836, %v899
      %v916 = vadd.f32 %v837, %v900
      %v917 = vmul.f32 %v909, 0.25
      %v918 = vmul.f32 %v910, 0.25
      %v919 = vmul.f32 %v911, 0.25
      %v920 = vmul.f32 %v912, 0.25
      %v921 = vmul.f32 %v913, 0.25
      %v922 = vmul.f32 %v914, 0.25
      %v923 = vmul.f32 %v915, 0.25
      %v924 = vmul.f32 %v916, 0.25
      %v925 = vpack.c.bf16 %v917, %v917
      %v926 = vpack.c.bf16 %v918, %v918
      %v927 = vpack.c.bf16 %v919, %v919
      %v928 = vpack.c.bf16 %v920, %v920
      %v929 = vpack.c.bf16 %v921, %v921
      %v930 = vpack.c.bf16 %v922, %v922
      %v931 = vpack.c.bf16 %v923, %v923
      %v932 = vpack.c.bf16 %v924, %v924
      %v934 = vshrl.u32 %v925, 16
      %v936 = vrot.slane %v934, 7
      %v937 = vshll.u32 %v925, 16
      %v939 = vor.u32 %v936, %v937
      %v941 = vshrl.u32 %v926, 16
      %v943 = vrot.slane %v941, 7
      %v944 = vshll.u32 %v926, 16
      %v946 = vor.u32 %v943, %v944
      %v948 = vshrl.u32 %v927, 16
      %v950 = vrot.slane %v948, 7
      %v951 = vshll.u32 %v927, 16
      %v953 = vor.u32 %v950, %v951
      %v955 = vshrl.u32 %v928, 16
      %v957 = vrot.slane %v955, 7
      %v958 = vshll.u32 %v928, 16
      %v960 = vor.u32 %v957, %v958
      %v962 = vshrl.u32 %v929, 16
      %v964 = vrot.slane %v962, 7
      %v965 = vshll.u32 %v929, 16
      %v967 = vor.u32 %v964, %v965
      %v969 = vshrl.u32 %v930, 16
      %v971 = vrot.slane %v969, 7
      %v972 = vshll.u32 %v930, 16
      %v974 = vor.u32 %v971, %v972
      %v976 = vshrl.u32 %v931, 16
      %v978 = vrot.slane %v976, 7
      %v979 = vshll.u32 %v931, 16
      %v981 = vor.u32 %v978, %v979
      %v983 = vshrl.u32 %v932, 16
      %v985 = vrot.slane %v983, 7
      %v986 = vshll.u32 %v932, 16
      %v988 = vor.u32 %v985, %v986
      %s997 = scalar_lea.vmem [#allocation2], 144
      %vm998 = vcmask 11264
      %vm999 = vsmask.f32 7938
      %vm1000 = vmand %vm998, %vm999
      %v1001 = vld [vmem:[%s997] sm:$0xf]
      %v1002 = vsel %vm1000, %v939, %v1001
      %1003 = vst [vmem:[%s997] sm:$0xf] %v1002
      %v1004 = vld [vmem:[%s997 + $0x8] sm:$0xf]
      %v1005 = vsel %vm1000, %v946, %v1004
      %1006 = vst [vmem:[%s997 + $0x8] sm:$0xf] %v1005
      %v1007 = vld [vmem:[%s997 + $0x10] sm:$0xf]
      %v1008 = vsel %vm1000, %v953, %v1007
      %1009 = vst [vmem:[%s997 + $0x10] sm:$0xf] %v1008
      %v1010 = vld [vmem:[%s997 + $0x18] sm:$0xf]
      %v1011 = vsel %vm1000, %v960, %v1010
      %1012 = vst [vmem:[%s997 + $0x18] sm:$0xf] %v1011
      %v1013 = vld [vmem:[%s997 + $0x20] sm:$0xf]
      %v1014 = vsel %vm1000, %v967, %v1013
      %1015 = vst [vmem:[%s997 + $0x20] sm:$0xf] %v1014
      %v1016 = vld [vmem:[%s997 + $0x28] sm:$0xf]
      %v1017 = vsel %vm1000, %v974, %v1016
      %1018 = vst [vmem:[%s997 + $0x28] sm:$0xf] %v1017
      %v1019 = vld [vmem:[%s997 + $0x30] sm:$0xf]
      %v1020 = vsel %vm1000, %v981, %v1019
      %1021 = vst [vmem:[%s997 + $0x30] sm:$0xf] %v1020
      %v1022 = vld [vmem:[%s997 + $0x38] sm:$0xf]
      %v1023 = vsel %vm1000, %v988, %v1022
      %1024 = vst [vmem:[%s997 + $0x38] sm:$0xf] %v1023
      %v1025 = vadd.f32 %v838, %v845
      %v1026 = vadd.f32 %v839, %v846
      %v1027 = vadd.f32 %v840, %v847
      %v1028 = vadd.f32 %v841, %v848
      %v1029 = vadd.f32 %v842, %v849
      %v1030 = vadd.f32 %v843, %v850
      %v1031 = vadd.f32 %v844, %v851
      %v1032 = vmul.f32 %v1025, 0.25
      %v1033 = vmul.f32 %v1026, 0.25
      %v1034 = vmul.f32 %v1027, 0.25
      %v1035 = vmul.f32 %v1028, 0.25
      %v1036 = vmul.f32 %v1029, 0.25
      %v1037 = vmul.f32 %v1030, 0.25
      %v1038 = vmul.f32 %v1031, 0.25
      %v1039 = vpack.c.bf16 %v1032, %v1032
      %v1040 = vpack.c.bf16 %v1033, %v1033
      %v1041 = vpack.c.bf16 %v1034, %v1034
      %v1042 = vpack.c.bf16 %v1035, %v1035
      %v1043 = vpack.c.bf16 %v1036, %v1036
      %v1044 = vpack.c.bf16 %v1037, %v1037
      %v1045 = vpack.c.bf16 %v1038, %v1038
      %s1046 = scalar_lea.vmem [#allocation2], 80
      %1047 = vst.msk [vmem:[%s1046] sm:$0xf] %vm247, %v1039
      %1048 = vst.msk [vmem:[%s1046 + $0x8] sm:$0xf] %vm247, %v1040
      %1049 = vst.msk [vmem:[%s1046 + $0x10] sm:$0xf] %vm247, %v1041
      %1050 = vst.msk [vmem:[%s1046 + $0x18] sm:$0xf] %vm247, %v1042
      %1051 = vst.msk [vmem:[%s1046 + $0x20] sm:$0xf] %vm247, %v1043
      %1052 = vst.msk [vmem:[%s1046 + $0x28] sm:$0xf] %vm247, %v1044
      %1053 = vst.msk [vmem:[%s1046 + $0x30] sm:$0xf] %vm247, %v1045
      %v1061 = vrot.slane %v838, 1
      %v1062 = vrot.slane %v839, 1
      %v1063 = vrot.slane %v840, 1
      %v1064 = vrot.slane %v841, 1
      %v1065 = vrot.slane %v842, 1
      %v1066 = vrot.slane %v843, 1
      %v1067 = vrot.slane %v844, 1
      %v1075 = vadd.f32 %v845, %v1061
      %v1076 = vadd.f32 %v846, %v1062
      %v1077 = vadd.f32 %v847, %v1063
      %v1078 = vadd.f32 %v848, %v1064
      %v1079 = vadd.f32 %v849, %v1065
      %v1080 = vadd.f32 %v850, %v1066
      %v1081 = vadd.f32 %v851, %v1067
      %v1082 = vmul.f32 %v1075, 0.25
      %v1083 = vmul.f32 %v1076, 0.25
      %v1084 = vmul.f32 %v1077, 0.25
      %v1085 = vmul.f32 %v1078, 0.25
      %v1086 = vmul.f32 %v1079, 0.25
      %v1087 = vmul.f32 %v1080, 0.25
      %v1088 = vmul.f32 %v1081, 0.25
      %v1089 = vpack.c.bf16 %v1082, %v1082
      %v1090 = vpack.c.bf16 %v1083, %v1083
      %v1091 = vpack.c.bf16 %v1084, %v1084
      %v1092 = vpack.c.bf16 %v1085, %v1085
      %v1093 = vpack.c.bf16 %v1086, %v1086
      %v1094 = vpack.c.bf16 %v1087, %v1087
      %v1095 = vpack.c.bf16 %v1088, %v1088
      %v1097 = vshrl.u32 %v1089, 16
      %v1099 = vrot.slane %v1097, 7
      %v1100 = vshll.u32 %v1089, 16
      %v1102 = vor.u32 %v1099, %v1100
      %v1104 = vshrl.u32 %v1090, 16
      %v1106 = vrot.slane %v1104, 7
      %v1107 = vshll.u32 %v1090, 16
      %v1109 = vor.u32 %v1106, %v1107
      %v1111 = vshrl.u32 %v1091, 16
      %v1113 = vrot.slane %v1111, 7
      %v1114 = vshll.u32 %v1091, 16
      %v1116 = vor.u32 %v1113, %v1114
      %v1118 = vshrl.u32 %v1092, 16
      %v1120 = vrot.slane %v1118, 7
      %v1121 = vshll.u32 %v1092, 16
      %v1123 = vor.u32 %v1120, %v1121
      %v1125 = vshrl.u32 %v1093, 16
      %v1127 = vrot.slane %v1125, 7
      %v1128 = vshll.u32 %v1093, 16
      %v1130 = vor.u32 %v1127, %v1128
      %v1132 = vshrl.u32 %v1094, 16
      %v1134 = vrot.slane %v1132, 7
      %v1135 = vshll.u32 %v1094, 16
      %v1137 = vor.u32 %v1134, %v1135
      %v1139 = vshrl.u32 %v1095, 16
      %v1141 = vrot.slane %v1139, 7
      %v1142 = vshll.u32 %v1095, 16
      %v1144 = vor.u32 %v1141, %v1142
      %s1152 = scalar_lea.vmem [#allocation2], 8
      %v1153 = vld [vmem:[%s1152] sm:$0xf]
      %v1154 = vsel %vm1000, %v1102, %v1153
      %1155 = vst [vmem:[%s1152] sm:$0xf] %v1154
      %v1156 = vld [vmem:[%s1152 + $0x8] sm:$0xf]
      %v1157 = vsel %vm1000, %v1109, %v1156
      %1158 = vst [vmem:[%s1152 + $0x8] sm:$0xf] %v1157
      %v1159 = vld [vmem:[%s1152 + $0x10] sm:$0xf]
      %v1160 = vsel %vm1000, %v1116, %v1159
      %1161 = vst [vmem:[%s1152 + $0x10] sm:$0xf] %v1160
      %v1162 = vld [vmem:[%s1152 + $0x18] sm:$0xf]
      %v1163 = vsel %vm1000, %v1123, %v1162
      %1164 = vst [vmem:[%s1152 + $0x18] sm:$0xf] %v1163
      %v1165 = vld [vmem:[%s1152 + $0x20] sm:$0xf]
      %v1166 = vsel %vm1000, %v1130, %v1165
      %1167 = vst [vmem:[%s1152 + $0x20] sm:$0xf] %v1166
      %v1168 = vld [vmem:[%s1152 + $0x28] sm:$0xf]
      %v1169 = vsel %vm1000, %v1137, %v1168
      %1170 = vst [vmem:[%s1152 + $0x28] sm:$0xf] %v1169
      %v1171 = vld [vmem:[%s1152 + $0x30] sm:$0xf]
      %v1172 = vsel %vm1000, %v1144, %v1171
      %1173 = vst [vmem:[%s1152 + $0x30] sm:$0xf] %v1172
      %v1174 = vld [vmem:[%s239] sm:$0xf]
      %v1175 = vld [vmem:[%s239 + $0x4] sm:$0xf]
      %v1176 = vld [vmem:[%s239 + $0x8] sm:$0xf]
      %v1177 = vld [vmem:[%s239 + $0xc] sm:$0xf]
      %v1178 = vld [vmem:[%s239 + $0x10] sm:$0xf]
      %v1179 = vld [vmem:[%s239 + $0x14] sm:$0xf]
      %v1180 = vld [vmem:[%s239 + $0x18] sm:$0xf]
      %v1181 = vld [vmem:[%s239 + $0x1c] sm:$0xf]
      %v1182 = vunpack.c.l.bf16 %v1174
      %v1183 = vunpack.c.l.bf16 %v1175
      %v1184 = vunpack.c.l.bf16 %v1176
      %v1185 = vunpack.c.l.bf16 %v1177
      %v1186 = vunpack.c.l.bf16 %v1178
      %v1187 = vunpack.c.l.bf16 %v1179
      %v1188 = vunpack.c.l.bf16 %v1180
      %v1189 = vunpack.c.l.bf16 %v1181
      %s1190 = scalar_lea.vmem %s239, 32
      %v1191 = vld [vmem:[%s1190] sm:$0xf]
      %v1192 = vld [vmem:[%s1190 + $0x4] sm:$0xf]
      %v1193 = vld [vmem:[%s1190 + $0x8] sm:$0xf]
      %v1194 = vld [vmem:[%s1190 + $0xc] sm:$0xf]
      %v1195 = vld [vmem:[%s1190 + $0x10] sm:$0xf]
      %v1196 = vld [vmem:[%s1190 + $0x14] sm:$0xf]
      %v1197 = vld [vmem:[%s1190 + $0x18] sm:$0xf]
      %v1198 = vld [vmem:[%s1190 + $0x1c] sm:$0xf]
      %v1199 = vunpack.c.l.bf16 %v1191
      %v1200 = vunpack.c.l.bf16 %v1192
      %v1201 = vunpack.c.l.bf16 %v1193
      %v1202 = vunpack.c.l.bf16 %v1194
      %v1203 = vunpack.c.l.bf16 %v1195
      %v1204 = vunpack.c.l.bf16 %v1196
      %v1205 = vunpack.c.l.bf16 %v1197
      %v1206 = vunpack.c.l.bf16 %v1198
      %s1207 = scalar_lea.vmem %s239, 64
      %v1208 = vld [vmem:[%s1207] sm:$0xf]
      %v1209 = vld [vmem:[%s1207 + $0x4] sm:$0xf]
      %v1210 = vld [vmem:[%s1207 + $0x8] sm:$0xf]
      %v1211 = vld [vmem:[%s1207 + $0xc] sm:$0xf]
      %v1212 = vld [vmem:[%s1207 + $0x10] sm:$0xf]
      %v1213 = vld [vmem:[%s1207 + $0x14] sm:$0xf]
      %v1214 = vld [vmem:[%s1207 + $0x18] sm:$0xf]
      %v1215 = vld [vmem:[%s1207 + $0x1c] sm:$0xf]
      %v1216 = vunpack.c.l.bf16 %v1208
      %v1217 = vunpack.c.l.bf16 %v1209
      %v1218 = vunpack.c.l.bf16 %v1210
      %v1219 = vunpack.c.l.bf16 %v1211
      %v1220 = vunpack.c.l.bf16 %v1212
      %v1221 = vunpack.c.l.bf16 %v1213
      %v1222 = vunpack.c.l.bf16 %v1214
      %v1223 = vunpack.c.l.bf16 %v1215
      %s1224 = scalar_lea.vmem %s239, 96
      %v1225 = vld [vmem:[%s1224] sm:$0xf]
      %v1226 = vld [vmem:[%s1224 + $0x4] sm:$0xf]
      %v1227 = vld [vmem:[%s1224 + $0x8] sm:$0xf]
      %v1228 = vld [vmem:[%s1224 + $0xc] sm:$0xf]
      %v1229 = vld [vmem:[%s1224 + $0x10] sm:$0xf]
      %v1230 = vld [vmem:[%s1224 + $0x14] sm:$0xf]
      %v1231 = vld [vmem:[%s1224 + $0x18] sm:$0xf]
      %v1232 = vld [vmem:[%s1224 + $0x1c] sm:$0xf]
      %v1233 = vunpack.c.l.bf16 %v1225
      %v1234 = vunpack.c.l.bf16 %v1226
      %v1235 = vunpack.c.l.bf16 %v1227
      %v1236 = vunpack.c.l.bf16 %v1228
      %v1237 = vunpack.c.l.bf16 %v1229
      %v1238 = vunpack.c.l.bf16 %v1230
      %v1239 = vunpack.c.l.bf16 %v1231
      %v1240 = vunpack.c.l.bf16 %v1232
      %v1241 = vadd.f32 %v1182, %v1216
      %v1242 = vadd.f32 %v1183, %v1217
      %v1243 = vadd.f32 %v1184, %v1218
      %v1244 = vadd.f32 %v1185, %v1219
      %v1245 = vadd.f32 %v1186, %v1220
      %v1246 = vadd.f32 %v1187, %v1221
      %v1247 = vadd.f32 %v1188, %v1222
      %v1248 = vadd.f32 %v1189, %v1223
      %v1249 = vadd.f32 %v1199, %v1233
      %v1250 = vadd.f32 %v1200, %v1234
      %v1251 = vadd.f32 %v1201, %v1235
      %v1252 = vadd.f32 %v1202, %v1236
      %v1253 = vadd.f32 %v1203, %v1237
      %v1254 = vadd.f32 %v1204, %v1238
      %v1255 = vadd.f32 %v1205, %v1239
      %v1256 = vadd.f32 %v1206, %v1240
      %v1257 = vadd.f32 %v1216, %v1183
      %v1258 = vadd.f32 %v1217, %v1184
      %v1259 = vadd.f32 %v1218, %v1185
      %v1260 = vadd.f32 %v1219, %v1186
      %v1261 = vadd.f32 %v1220, %v1187
      %v1262 = vadd.f32 %v1221, %v1188
      %v1263 = vadd.f32 %v1222, %v1189
      %v1264 = vadd.f32 %v1233, %v1200
      %v1265 = vadd.f32 %v1234, %v1201
      %v1266 = vadd.f32 %v1235, %v1202
      %v1267 = vadd.f32 %v1236, %v1203
      %v1268 = vadd.f32 %v1237, %v1204
      %v1269 = vadd.f32 %v1238, %v1205
      %v1270 = vadd.f32 %v1239, %v1206
      %v1271 = vadd.f32 %v1241, %v1249
      %v1272 = vadd.f32 %v1242, %v1250
      %v1273 = vadd.f32 %v1243, %v1251
      %v1274 = vadd.f32 %v1244, %v1252
      %v1275 = vadd.f32 %v1245, %v1253
      %v1276 = vadd.f32 %v1246, %v1254
      %v1277 = vadd.f32 %v1247, %v1255
      %v1278 = vadd.f32 %v1248, %v1256
      %v1279 = vmul.f32 %v1271, 0.25
      %v1280 = vmul.f32 %v1272, 0.25
      %v1281 = vmul.f32 %v1273, 0.25
      %v1282 = vmul.f32 %v1274, 0.25
      %v1283 = vmul.f32 %v1275, 0.25
      %v1284 = vmul.f32 %v1276, 0.25
      %v1285 = vmul.f32 %v1277, 0.25
      %v1286 = vmul.f32 %v1278, 0.25
      %v1287 = vpack.c.bf16 %v1279, %v1279
      %v1288 = vpack.c.bf16 %v1280, %v1280
      %v1289 = vpack.c.bf16 %v1281, %v1281
      %v1290 = vpack.c.bf16 %v1282, %v1282
      %v1291 = vpack.c.bf16 %v1283, %v1283
      %v1292 = vpack.c.bf16 %v1284, %v1284
      %v1293 = vpack.c.bf16 %v1285, %v1285
      %v1294 = vpack.c.bf16 %v1286, %v1286
      %s1295 = scalar_lea.vmem [#allocation3], 216
      %1296 = vst.msk [vmem:[%s1295] sm:$0xf] %vm247, %v1287
      %1297 = vst.msk [vmem:[%s1295 + $0x8] sm:$0xf] %vm247, %v1288
      %1298 = vst.msk [vmem:[%s1295 + $0x10] sm:$0xf] %vm247, %v1289
      %1299 = vst.msk [vmem:[%s1295 + $0x18] sm:$0xf] %vm247, %v1290
      %1300 = vst.msk [vmem:[%s1295 + $0x20] sm:$0xf] %vm247, %v1291
      %1301 = vst.msk [vmem:[%s1295 + $0x28] sm:$0xf] %vm247, %v1292
      %1302 = vst.msk [vmem:[%s1295 + $0x30] sm:$0xf] %vm247, %v1293
      %1303 = vst.msk [vmem:[%s1295 + $0x38] sm:$0xf] %vm247, %v1294
      %v1312 = vrot.slane %v1241, 1
      %v1313 = vrot.slane %v1242, 1
      %v1314 = vrot.slane %v1243, 1
      %v1315 = vrot.slane %v1244, 1
      %v1316 = vrot.slane %v1245, 1
      %v1317 = vrot.slane %v1246, 1
      %v1318 = vrot.slane %v1247, 1
      %v1319 = vrot.slane %v1248, 1
      %v1328 = vadd.f32 %v1249, %v1312
      %v1329 = vadd.f32 %v1250, %v1313
      %v1330 = vadd.f32 %v1251, %v1314
      %v1331 = vadd.f32 %v1252, %v1315
      %v1332 = vadd.f32 %v1253, %v1316
      %v1333 = vadd.f32 %v1254, %v1317
      %v1334 = vadd.f32 %v1255, %v1318
      %v1335 = vadd.f32 %v1256, %v1319
      %v1336 = vmul.f32 %v1328, 0.25
      %v1337 = vmul.f32 %v1329, 0.25
      %v1338 = vmul.f32 %v1330, 0.25
      %v1339 = vmul.f32 %v1331, 0.25
      %v1340 = vmul.f32 %v1332, 0.25
      %v1341 = vmul.f32 %v1333, 0.25
      %v1342 = vmul.f32 %v1334, 0.25
      %v1343 = vmul.f32 %v1335, 0.25
      %v1344 = vpack.c.bf16 %v1336, %v1336
      %v1345 = vpack.c.bf16 %v1337, %v1337
      %v1346 = vpack.c.bf16 %v1338, %v1338
      %v1347 = vpack.c.bf16 %v1339, %v1339
      %v1348 = vpack.c.bf16 %v1340, %v1340
      %v1349 = vpack.c.bf16 %v1341, %v1341
      %v1350 = vpack.c.bf16 %v1342, %v1342
      %v1351 = vpack.c.bf16 %v1343, %v1343
      %v1353 = vshrl.u32 %v1344, 16
      %v1355 = vrot.slane %v1353, 7
      %v1356 = vshll.u32 %v1344, 16
      %v1358 = vor.u32 %v1355, %v1356
      %v1360 = vshrl.u32 %v1345, 16
      %v1362 = vrot.slane %v1360, 7
      %v1363 = vshll.u32 %v1345, 16
      %v1365 = vor.u32 %v1362, %v1363
      %v1367 = vshrl.u32 %v1346, 16
      %v1369 = vrot.slane %v1367, 7
      %v1370 = vshll.u32 %v1346, 16
      %v1372 = vor.u32 %v1369, %v1370
      %v1374 = vshrl.u32 %v1347, 16
      %v1376 = vrot.slane %v1374, 7
      %v1377 = vshll.u32 %v1347, 16
      %v1379 = vor.u32 %v1376, %v1377
      %v1381 = vshrl.u32 %v1348, 16
      %v1383 = vrot.slane %v1381, 7
      %v1384 = vshll.u32 %v1348, 16
      %v1386 = vor.u32 %v1383, %v1384
      %v1388 = vshrl.u32 %v1349, 16
      %v1390 = vrot.slane %v1388, 7
      %v1391 = vshll.u32 %v1349, 16
      %v1393 = vor.u32 %v1390, %v1391
      %v1395 = vshrl.u32 %v1350, 16
      %v1397 = vrot.slane %v1395, 7
      %v1398 = vshll.u32 %v1350, 16
      %v1400 = vor.u32 %v1397, %v1398
      %v1402 = vshrl.u32 %v1351, 16
      %v1404 = vrot.slane %v1402, 7
      %v1405 = vshll.u32 %v1351, 16
      %v1407 = vor.u32 %v1404, %v1405
      %s1416 = scalar_lea.vmem [#allocation3], 144
      %v1417 = vld [vmem:[%s1416] sm:$0xf]
      %v1418 = vsel %vm1000, %v1358, %v1417
      %1419 = vst [vmem:[%s1416] sm:$0xf] %v1418
      %v1420 = vld [vmem:[%s1416 + $0x8] sm:$0xf]
      %v1421 = vsel %vm1000, %v1365, %v1420
      %1422 = vst [vmem:[%s1416 + $0x8] sm:$0xf] %v1421
      %v1423 = vld [vmem:[%s1416 + $0x10] sm:$0xf]
      %v1424 = vsel %vm1000, %v1372, %v1423
      %1425 = vst [vmem:[%s1416 + $0x10] sm:$0xf] %v1424
      %v1426 = vld [vmem:[%s1416 + $0x18] sm:$0xf]
      %v1427 = vsel %vm1000, %v1379, %v1426
      %1428 = vst [vmem:[%s1416 + $0x18] sm:$0xf] %v1427
      %v1429 = vld [vmem:[%s1416 + $0x20] sm:$0xf]
      %v1430 = vsel %vm1000, %v1386, %v1429
      %1431 = vst [vmem:[%s1416 + $0x20] sm:$0xf] %v1430
      %v1432 = vld [vmem:[%s1416 + $0x28] sm:$0xf]
      %v1433 = vsel %vm1000, %v1393, %v1432
      %1434 = vst [vmem:[%s1416 + $0x28] sm:$0xf] %v1433
      %v1435 = vld [vmem:[%s1416 + $0x30] sm:$0xf]
      %v1436 = vsel %vm1000, %v1400, %v1435
      %1437 = vst [vmem:[%s1416 + $0x30] sm:$0xf] %v1436
      %v1438 = vld [vmem:[%s1416 + $0x38] sm:$0xf]
      %v1439 = vsel %vm1000, %v1407, %v1438
      %1440 = vst [vmem:[%s1416 + $0x38] sm:$0xf] %v1439
      %v1441 = vadd.f32 %v1257, %v1264
      %v1442 = vadd.f32 %v1258, %v1265
      %v1443 = vadd.f32 %v1259, %v1266
      %v1444 = vadd.f32 %v1260, %v1267
      %v1445 = vadd.f32 %v1261, %v1268
      %v1446 = vadd.f32 %v1262, %v1269
      %v1447 = vadd.f32 %v1263, %v1270
      %v1448 = vmul.f32 %v1441, 0.25
      %v1449 = vmul.f32 %v1442, 0.25
      %v1450 = vmul.f32 %v1443, 0.25
      %v1451 = vmul.f32 %v1444, 0.25
      %v1452 = vmul.f32 %v1445, 0.25
      %v1453 = vmul.f32 %v1446, 0.25
      %v1454 = vmul.f32 %v1447, 0.25
      %v1455 = vpack.c.bf16 %v1448, %v1448
      %v1456 = vpack.c.bf16 %v1449, %v1449
      %v1457 = vpack.c.bf16 %v1450, %v1450
      %v1458 = vpack.c.bf16 %v1451, %v1451
      %v1459 = vpack.c.bf16 %v1452, %v1452
      %v1460 = vpack.c.bf16 %v1453, %v1453
      %v1461 = vpack.c.bf16 %v1454, %v1454
      %s1462 = scalar_lea.vmem [#allocation3], 80
      %1463 = vst.msk [vmem:[%s1462] sm:$0xf] %vm247, %v1455
      %1464 = vst.msk [vmem:[%s1462 + $0x8] sm:$0xf] %vm247, %v1456
      %1465 = vst.msk [vmem:[%s1462 + $0x10] sm:$0xf] %vm247, %v1457
      %1466 = vst.msk [vmem:[%s1462 + $0x18] sm:$0xf] %vm247, %v1458
      %1467 = vst.msk [vmem:[%s1462 + $0x20] sm:$0xf] %vm247, %v1459
      %1468 = vst.msk [vmem:[%s1462 + $0x28] sm:$0xf] %vm247, %v1460
      %1469 = vst.msk [vmem:[%s1462 + $0x30] sm:$0xf] %vm247, %v1461
      %v1477 = vrot.slane %v1257, 1
      %v1478 = vrot.slane %v1258, 1
      %v1479 = vrot.slane %v1259, 1
      %v1480 = vrot.slane %v1260, 1
      %v1481 = vrot.slane %v1261, 1
      %v1482 = vrot.slane %v1262, 1
      %v1483 = vrot.slane %v1263, 1
      %v1491 = vadd.f32 %v1264, %v1477
      %v1492 = vadd.f32 %v1265, %v1478
      %v1493 = vadd.f32 %v1266, %v1479
      %v1494 = vadd.f32 %v1267, %v1480
      %v1495 = vadd.f32 %v1268, %v1481
      %v1496 = vadd.f32 %v1269, %v1482
      %v1497 = vadd.f32 %v1270, %v1483
      %v1498 = vmul.f32 %v1491, 0.25
      %v1499 = vmul.f32 %v1492, 0.25
      %v1500 = vmul.f32 %v1493, 0.25
      %v1501 = vmul.f32 %v1494, 0.25
      %v1502 = vmul.f32 %v1495, 0.25
      %v1503 = vmul.f32 %v1496, 0.25
      %v1504 = vmul.f32 %v1497, 0.25
      %v1505 = vpack.c.bf16 %v1498, %v1498
      %v1506 = vpack.c.bf16 %v1499, %v1499
      %v1507 = vpack.c.bf16 %v1500, %v1500
      %v1508 = vpack.c.bf16 %v1501, %v1501
      %v1509 = vpack.c.bf16 %v1502, %v1502
      %v1510 = vpack.c.bf16 %v1503, %v1503
      %v1511 = vpack.c.bf16 %v1504, %v1504
      %v1513 = vshrl.u32 %v1505, 16
      %v1515 = vrot.slane %v1513, 7
      %v1516 = vshll.u32 %v1505, 16
      %v1518 = vor.u32 %v1515, %v1516
      %v1520 = vshrl.u32 %v1506, 16
      %v1522 = vrot.slane %v1520, 7
      %v1523 = vshll.u32 %v1506, 16
      %v1525 = vor.u32 %v1522, %v1523
      %v1527 = vshrl.u32 %v1507, 16
      %v1529 = vrot.slane %v1527, 7
      %v1530 = vshll.u32 %v1507, 16
      %v1532 = vor.u32 %v1529, %v1530
      %v1534 = vshrl.u32 %v1508, 16
      %v1536 = vrot.slane %v1534, 7
      %v1537 = vshll.u32 %v1508, 16
      %v1539 = vor.u32 %v1536, %v1537
      %v1541 = vshrl.u32 %v1509, 16
      %v1543 = vrot.slane %v1541, 7
      %v1544 = vshll.u32 %v1509, 16
      %v1546 = vor.u32 %v1543, %v1544
      %v1548 = vshrl.u32 %v1510, 16
      %v1550 = vrot.slane %v1548, 7
      %v1551 = vshll.u32 %v1510, 16
      %v1553 = vor.u32 %v1550, %v1551
      %v1555 = vshrl.u32 %v1511, 16
      %v1557 = vrot.slane %v1555, 7
      %v1558 = vshll.u32 %v1511, 16
      %v1560 = vor.u32 %v1557, %v1558
      %s1568 = scalar_lea.vmem [#allocation3], 8
      %v1569 = vld [vmem:[%s1568] sm:$0xf]
      %v1570 = vsel %vm1000, %v1518, %v1569
      %1571 = vst [vmem:[%s1568] sm:$0xf] %v1570
      %v1572 = vld [vmem:[%s1568 + $0x8] sm:$0xf]
      %v1573 = vsel %vm1000, %v1525, %v1572
      %1574 = vst [vmem:[%s1568 + $0x8] sm:$0xf] %v1573
      %v1575 = vld [vmem:[%s1568 + $0x10] sm:$0xf]
      %v1576 = vsel %vm1000, %v1532, %v1575
      %1577 = vst [vmem:[%s1568 + $0x10] sm:$0xf] %v1576
      %v1578 = vld [vmem:[%s1568 + $0x18] sm:$0xf]
      %v1579 = vsel %vm1000, %v1539, %v1578
      %1580 = vst [vmem:[%s1568 + $0x18] sm:$0xf] %v1579
      %v1581 = vld [vmem:[%s1568 + $0x20] sm:$0xf]
      %v1582 = vsel %vm1000, %v1546, %v1581
      %1583 = vst [vmem:[%s1568 + $0x20] sm:$0xf] %v1582
      %v1584 = vld [vmem:[%s1568 + $0x28] sm:$0xf]
      %v1585 = vsel %vm1000, %v1553, %v1584
      %1586 = vst [vmem:[%s1568 + $0x28] sm:$0xf] %v1585
      %v1587 = vld [vmem:[%s1568 + $0x30] sm:$0xf]
      %v1588 = vsel %vm1000, %v1560, %v1587
      %1589 = vst [vmem:[%s1568 + $0x30] sm:$0xf] %v1588
      %v1590 = vld [vmem:[#allocation2] sm:$0xf]
      %v1591 = vld [vmem:[#allocation2 + $0x8] sm:$0xf]
      %v1592 = vld [vmem:[#allocation2 + $0x10] sm:$0xf]
      %v1593 = vld [vmem:[#allocation2 + $0x18] sm:$0xf]
      %v1594 = vld [vmem:[#allocation2 + $0x20] sm:$0xf]
      %v1595 = vld [vmem:[#allocation2 + $0x28] sm:$0xf]
      %v1596 = vld [vmem:[#allocation2 + $0x30] sm:$0xf]
      %v1597 = vld [vmem:[#allocation2 + $0x38] sm:$0xf]
      %1598 = vst.msk [vmem:[#allocation4] sm:$0xf] %vm247, %v1590
      %1599 = vst.msk [vmem:[#allocation4 + $0x4] sm:$0xf] %vm247, %v1591
      %1600 = vst.msk [vmem:[#allocation4 + $0x8] sm:$0xf] %vm247, %v1592
      %1601 = vst.msk [vmem:[#allocation4 + $0xc] sm:$0xf] %vm247, %v1593
      %1602 = vst.msk [vmem:[#allocation4 + $0x10] sm:$0xf] %vm247, %v1594
      %1603 = vst.msk [vmem:[#allocation4 + $0x14] sm:$0xf] %vm247, %v1595
      %1604 = vst.msk [vmem:[#allocation4 + $0x18] sm:$0xf] %vm247, %v1596
      %1605 = vst.msk [vmem:[#allocation4 + $0x1c] sm:$0xf] %vm247, %v1597
      %s1606 = scalar_lea.vmem [#allocation2], 72
      %v1607 = vld [vmem:[%s1606] sm:$0xf]
      %v1608 = vld [vmem:[%s1606 + $0x8] sm:$0xf]
      %v1609 = vld [vmem:[%s1606 + $0x10] sm:$0xf]
      %v1610 = vld [vmem:[%s1606 + $0x18] sm:$0xf]
      %v1611 = vld [vmem:[%s1606 + $0x20] sm:$0xf]
      %v1612 = vld [vmem:[%s1606 + $0x28] sm:$0xf]
      %v1613 = vld [vmem:[%s1606 + $0x30] sm:$0xf]
      %v1614 = vld [vmem:[%s1606 + $0x38] sm:$0xf]
      %1623 = vrot.lane.b32.xlu0 %v1607, 2
      %v1624 = vpop.permute.xlu0 %1623
      %1625 = vrot.lane.b32.xlu0 %v1608, 2
      %v1626 = vpop.permute.xlu0 %1625
      %1627 = vrot.lane.b32.xlu0 %v1609, 2
      %v1628 = vpop.permute.xlu0 %1627
      %1629 = vrot.lane.b32.xlu0 %v1610, 2
      %v1630 = vpop.permute.xlu0 %1629
      %1631 = vrot.lane.b32.xlu0 %v1611, 2
      %v1632 = vpop.permute.xlu0 %1631
      %1633 = vrot.lane.b32.xlu0 %v1612, 2
      %v1634 = vpop.permute.xlu0 %1633
      %1635 = vrot.lane.b32.xlu0 %v1613, 2
      %v1636 = vpop.permute.xlu0 %1635
      %1637 = vrot.lane.b32.xlu0 %v1614, 2
      %v1638 = vpop.permute.xlu0 %1637
      %vm1647 = vcmask 27664
      %1648 = vst.msk [vmem:[#allocation4] sm:$0xf] %vm1647, %v1624
      %1649 = vst.msk [vmem:[#allocation4 + $0x4] sm:$0xf] %vm1647, %v1626
      %1650 = vst.msk [vmem:[#allocation4 + $0x8] sm:$0xf] %vm1647, %v1628
      %1651 = vst.msk [vmem:[#allocation4 + $0xc] sm:$0xf] %vm1647, %v1630
      %1652 = vst.msk [vmem:[#allocation4 + $0x10] sm:$0xf] %vm1647, %v1632
      %1653 = vst.msk [vmem:[#allocation4 + $0x14] sm:$0xf] %vm1647, %v1634
      %1654 = vst.msk [vmem:[#allocation4 + $0x18] sm:$0xf] %vm1647, %v1636
      %1655 = vst.msk [vmem:[#allocation4 + $0x1c] sm:$0xf] %vm1647, %v1638
      %v1656 = vld [vmem:[#allocation2] sm:$0xf]
      %v1657 = vld [vmem:[#allocation2 + $0x4] sm:$0x1]
      %v1658 = vld [vmem:[#allocation2 + $0x8] sm:$0xf]
      %v1659 = vld [vmem:[#allocation2 + $0xc] sm:$0x1]
      %v1660 = vld [vmem:[#allocation2 + $0x10] sm:$0xf]
      %v1661 = vld [vmem:[#allocation2 + $0x14] sm:$0x1]
      %v1662 = vld [vmem:[#allocation2 + $0x18] sm:$0xf]
      %v1663 = vld [vmem:[#allocation2 + $0x1c] sm:$0x1]
      %v1664 = vld [vmem:[#allocation2 + $0x20] sm:$0xf]
      %v1665 = vld [vmem:[#allocation2 + $0x24] sm:$0x1]
      %v1666 = vld [vmem:[#allocation2 + $0x28] sm:$0xf]
      %v1667 = vld [vmem:[#allocation2 + $0x2c] sm:$0x1]
      %v1668 = vld [vmem:[#allocation2 + $0x30] sm:$0xf]
      %v1669 = vld [vmem:[#allocation2 + $0x34] sm:$0x1]
      %v1670 = vld [vmem:[#allocation2 + $0x38] sm:$0xf]
      %v1671 = vld [vmem:[#allocation2 + $0x3c] sm:$0x1]
      %vm1672 = vsmask.f32 3328
      %vm1673 = vsmask.f32 7440
      %vm1674 = vmor %vm1672, %vm1673
      %v1676 = vshrl.u32 %v1656, 16
      %v1678 = vrot.slane %v1676, 4
      %v1679 = vshll.u32 %v1656, 16
      %v1681 = vrot.slane %v1679, 5
      %v1682 = vor.u32 %v1678, %v1681
      %v1683 = vrot.slane %v1682, 4
      %v1685 = vshll.u32 %v1657, 16
      %v1687 = vrot.slane %v1685, 5
      %v1688 = vsel %vm1674, %v1683, %v1687
      %v1690 = vshrl.u32 %v1658, 16
      %v1692 = vrot.slane %v1690, 4
      %v1693 = vshll.u32 %v1658, 16
      %v1695 = vrot.slane %v1693, 5
      %v1696 = vor.u32 %v1692, %v1695
      %v1697 = vrot.slane %v1696, 4
      %v1699 = vshll.u32 %v1659, 16
      %v1701 = vrot.slane %v1699, 5
      %v1702 = vsel %vm1674, %v1697, %v1701
      %v1704 = vshrl.u32 %v1660, 16
      %v1706 = vrot.slane %v1704, 4
      %v1707 = vshll.u32 %v1660, 16
      %v1709 = vrot.slane %v1707, 5
      %v1710 = vor.u32 %v1706, %v1709
      %v1711 = vrot.slane %v1710, 4
      %v1713 = vshll.u32 %v1661, 16
      %v1715 = vrot.slane %v1713, 5
      %v1716 = vsel %vm1674, %v1711, %v1715
      %v1718 = vshrl.u32 %v1662, 16
      %v1720 = vrot.slane %v1718, 4
      %v1721 = vshll.u32 %v1662, 16
      %v1723 = vrot.slane %v1721, 5
      %v1724 = vor.u32 %v1720, %v1723
      %v1725 = vrot.slane %v1724, 4
      %v1727 = vshll.u32 %v1663, 16
      %v1729 = vrot.slane %v1727, 5
      %v1730 = vsel %vm1674, %v1725, %v1729
      %v1732 = vshrl.u32 %v1664, 16
      %v1734 = vrot.slane %v1732, 4
      %v1735 = vshll.u32 %v1664, 16
      %v1737 = vrot.slane %v1735, 5
      %v1738 = vor.u32 %v1734, %v1737
      %v1739 = vrot.slane %v1738, 4
      %v1741 = vshll.u32 %v1665, 16
      %v1743 = vrot.slane %v1741, 5
      %v1744 = vsel %vm1674, %v1739, %v1743
      %v1746 = vshrl.u32 %v1666, 16
      %v1748 = vrot.slane %v1746, 4
      %v1749 = vshll.u32 %v1666, 16
      %v1751 = vrot.slane %v1749, 5
      %v1752 = vor.u32 %v1748, %v1751
      %v1753 = vrot.slane %v1752, 4
      %v1755 = vshll.u32 %v1667, 16
      %v1757 = vrot.slane %v1755, 5
      %v1758 = vsel %vm1674, %v1753, %v1757
      %v1760 = vshrl.u32 %v1668, 16
      %v1762 = vrot.slane %v1760, 4
      %v1763 = vshll.u32 %v1668, 16
      %v1765 = vrot.slane %v1763, 5
      %v1766 = vor.u32 %v1762, %v1765
      %v1767 = vrot.slane %v1766, 4
      %v1769 = vshll.u32 %v1669, 16
      %v1771 = vrot.slane %v1769, 5
      %v1772 = vsel %vm1674, %v1767, %v1771
      %v1774 = vshrl.u32 %v1670, 16
      %v1776 = vrot.slane %v1774, 4
      %v1777 = vshll.u32 %v1670, 16
      %v1779 = vrot.slane %v1777, 5
      %v1780 = vor.u32 %v1776, %v1779
      %v1781 = vrot.slane %v1780, 4
      %v1783 = vshll.u32 %v1671, 16
      %v1785 = vrot.slane %v1783, 5
      %v1786 = vsel %vm1674, %v1781, %v1785
      %1787 = vrot.lane.b32.xlu0 %v1688, 4
      %v1788 = vpop.permute.xlu0 %1787
      %1789 = vrot.lane.b32.xlu0 %v1702, 4
      %v1790 = vpop.permute.xlu0 %1789
      %1791 = vrot.lane.b32.xlu0 %v1716, 4
      %v1792 = vpop.permute.xlu0 %1791
      %1793 = vrot.lane.b32.xlu0 %v1730, 4
      %v1794 = vpop.permute.xlu0 %1793
      %1795 = vrot.lane.b32.xlu0 %v1744, 4
      %v1796 = vpop.permute.xlu0 %1795
      %1797 = vrot.lane.b32.xlu0 %v1758, 4
      %v1798 = vpop.permute.xlu0 %1797
      %1799 = vrot.lane.b32.xlu0 %v1772, 4
      %v1800 = vpop.permute.xlu0 %1799
      %1801 = vrot.lane.b32.xlu0 %v1786, 4
      %v1802 = vpop.permute.xlu0 %1801
      %vm1811 = vcmask 44064
      %1812 = vst.msk [vmem:[#allocation4] sm:$0xf] %vm1811, %v1788
      %1813 = vst.msk [vmem:[#allocation4 + $0x4] sm:$0xf] %vm1811, %v1790
      %1814 = vst.msk [vmem:[#allocation4 + $0x8] sm:$0xf] %vm1811, %v1792
      %1815 = vst.msk [vmem:[#allocation4 + $0xc] sm:$0xf] %vm1811, %v1794
      %1816 = vst.msk [vmem:[#allocation4 + $0x10] sm:$0xf] %vm1811, %v1796
      %1817 = vst.msk [vmem:[#allocation4 + $0x14] sm:$0xf] %vm1811, %v1798
      %1818 = vst.msk [vmem:[#allocation4 + $0x18] sm:$0xf] %vm1811, %v1800
      %1819 = vst.msk [vmem:[#allocation4 + $0x1c] sm:$0xf] %vm1811, %v1802
      %v1820 = vld [vmem:[%s997] sm:$0xf]
      %v1821 = vld [vmem:[%s997 + $0x8] sm:$0xf]
      %v1822 = vld [vmem:[%s997 + $0x10] sm:$0xf]
      %v1823 = vld [vmem:[%s997 + $0x18] sm:$0xf]
      %v1824 = vld [vmem:[%s997 + $0x20] sm:$0xf]
      %v1825 = vld [vmem:[%s997 + $0x28] sm:$0xf]
      %v1826 = vld [vmem:[%s997 + $0x30] sm:$0xf]
      %v1827 = vld [vmem:[%s997 + $0x38] sm:$0xf]
      %1836 = vrot.lane.b32.xlu0 %v1820, 6
      %v1837 = vpop.permute.xlu0 %1836
      %1838 = vrot.lane.b32.xlu0 %v1821, 6
      %v1839 = vpop.permute.xlu0 %1838
      %1840 = vrot.lane.b32.xlu0 %v1822, 6
      %v1841 = vpop.permute.xlu0 %1840
      %1842 = vrot.lane.b32.xlu0 %v1823, 6
      %v1843 = vpop.permute.xlu0 %1842
      %1844 = vrot.lane.b32.xlu0 %v1824, 6
      %v1845 = vpop.permute.xlu0 %1844
      %1846 = vrot.lane.b32.xlu0 %v1825, 6
      %v1847 = vpop.permute.xlu0 %1846
      %1848 = vrot.lane.b32.xlu0 %v1826, 6
      %v1849 = vpop.permute.xlu0 %1848
      %1850 = vrot.lane.b32.xlu0 %v1827, 6
      %v1851 = vpop.permute.xlu0 %1850
      %vm1860 = vcmask 60464
      %1861 = vst.msk [vmem:[#allocation4] sm:$0xf] %vm1860, %v1837
      %1862 = vst.msk [vmem:[#allocation4 + $0x4] sm:$0xf] %vm1860, %v1839
      %1863 = vst.msk [vmem:[#allocation4 + $0x8] sm:$0xf] %vm1860, %v1841
      %1864 = vst.msk [vmem:[#allocation4 + $0xc] sm:$0xf] %vm1860, %v1843
      %1865 = vst.msk [vmem:[#allocation4 + $0x10] sm:$0xf] %vm1860, %v1845
      %1866 = vst.msk [vmem:[#allocation4 + $0x14] sm:$0xf] %vm1860, %v1847
      %1867 = vst.msk [vmem:[#allocation4 + $0x18] sm:$0xf] %vm1860, %v1849
      %1868 = vst.msk [vmem:[#allocation4 + $0x1c] sm:$0xf] %vm1860, %v1851
      %v1869 = vld [vmem:[%s876] sm:$0xf]
      %v1870 = vld [vmem:[%s876 + $0x8] sm:$0xf]
      %v1871 = vld [vmem:[%s876 + $0x10] sm:$0xf]
      %v1872 = vld [vmem:[%s876 + $0x18] sm:$0xf]
      %v1873 = vld [vmem:[%s876 + $0x20] sm:$0xf]
      %v1874 = vld [vmem:[%s876 + $0x28] sm:$0xf]
      %v1875 = vld [vmem:[%s876 + $0x30] sm:$0xf]
      %v1876 = vld [vmem:[%s876 + $0x38] sm:$0xf]
      %1885 = vrot.lane.b32.xlu0 %v1869, 8
      %v1886 = vpop.permute.xlu0 %1885
      %1887 = vrot.lane.b32.xlu0 %v1870, 8
      %v1888 = vpop.permute.xlu0 %1887
      %1889 = vrot.lane.b32.xlu0 %v1871, 8
      %v1890 = vpop.permute.xlu0 %1889
      %1891 = vrot.lane.b32.xlu0 %v1872, 8
      %v1892 = vpop.permute.xlu0 %1891
      %1893 = vrot.lane.b32.xlu0 %v1873, 8
      %v1894 = vpop.permute.xlu0 %1893
      %1895 = vrot.lane.b32.xlu0 %v1874, 8
      %v1896 = vpop.permute.xlu0 %1895
      %1897 = vrot.lane.b32.xlu0 %v1875, 8
      %v1898 = vpop.permute.xlu0 %1897
      %1899 = vrot.lane.b32.xlu0 %v1876, 8
      %v1900 = vpop.permute.xlu0 %1899
      %vm1909 = vcmask 76864
      %1910 = vst.msk [vmem:[#allocation4] sm:$0xf] %vm1909, %v1886
      %1911 = vst.msk [vmem:[#allocation4 + $0x4] sm:$0xf] %vm1909, %v1888
      %1912 = vst.msk [vmem:[#allocation4 + $0x8] sm:$0xf] %vm1909, %v1890
      %1913 = vst.msk [vmem:[#allocation4 + $0xc] sm:$0xf] %vm1909, %v1892
      %1914 = vst.msk [vmem:[#allocation4 + $0x10] sm:$0xf] %vm1909, %v1894
      %1915 = vst.msk [vmem:[#allocation4 + $0x14] sm:$0xf] %vm1909, %v1896
      %1916 = vst.msk [vmem:[#allocation4 + $0x18] sm:$0xf] %vm1909, %v1898
      %1917 = vst.msk [vmem:[#allocation4 + $0x1c] sm:$0xf] %vm1909, %v1900
      %v1918 = vld [vmem:[%s997] sm:$0xf]
      %v1919 = vld [vmem:[%s997 + $0x4] sm:$0x1]
      %v1920 = vld [vmem:[%s997 + $0x8] sm:$0xf]
      %v1921 = vld [vmem:[%s997 + $0xc] sm:$0x1]
      %v1922 = vld [vmem:[%s997 + $0x10] sm:$0xf]
      %v1923 = vld [vmem:[%s997 + $0x14] sm:$0x1]
      %v1924 = vld [vmem:[%s997 + $0x18] sm:$0xf]
      %v1925 = vld [vmem:[%s997 + $0x1c] sm:$0x1]
      %v1926 = vld [vmem:[%s997 + $0x20] sm:$0xf]
      %v1927 = vld [vmem:[%s997 + $0x24] sm:$0x1]
      %v1928 = vld [vmem:[%s997 + $0x28] sm:$0xf]
      %v1929 = vld [vmem:[%s997 + $0x2c] sm:$0x1]
      %v1930 = vld [vmem:[%s997 + $0x30] sm:$0xf]
      %v1931 = vld [vmem:[%s997 + $0x34] sm:$0x1]
      %v1932 = vld [vmem:[%s997 + $0x38] sm:$0xf]
      %v1933 = vld [vmem:[%s997 + $0x3c] sm:$0x1]
      %v1935 = vshrl.u32 %v1918, 16
      %v1937 = vrot.slane %v1935, 4
      %v1938 = vshll.u32 %v1918, 16
      %v1940 = vrot.slane %v1938, 5
      %v1941 = vor.u32 %v1937, %v1940
      %v1942 = vrot.slane %v1941, 4
      %v1944 = vshll.u32 %v1919, 16
      %v1946 = vrot.slane %v1944, 5
      %v1947 = vsel %vm1674, %v1942, %v1946
      %v1949 = vshrl.u32 %v1920, 16
      %v1951 = vrot.slane %v1949, 4
      %v1952 = vshll.u32 %v1920, 16
      %v1954 = vrot.slane %v1952, 5
      %v1955 = vor.u32 %v1951, %v1954
      %v1956 = vrot.slane %v1955, 4
      %v1958 = vshll.u32 %v1921, 16
      %v1960 = vrot.slane %v1958, 5
      %v1961 = vsel %vm1674, %v1956, %v1960
      %v1963 = vshrl.u32 %v1922, 16
      %v1965 = vrot.slane %v1963, 4
      %v1966 = vshll.u32 %v1922, 16
      %v1968 = vrot.slane %v1966, 5
      %v1969 = vor.u32 %v1965, %v1968
      %v1970 = vrot.slane %v1969, 4
      %v1972 = vshll.u32 %v1923, 16
      %v1974 = vrot.slane %v1972, 5
      %v1975 = vsel %vm1674, %v1970, %v1974
      %v1977 = vshrl.u32 %v1924, 16
      %v1979 = vrot.slane %v1977, 4
      %v1980 = vshll.u32 %v1924, 16
      %v1982 = vrot.slane %v1980, 5
      %v1983 = vor.u32 %v1979, %v1982
      %v1984 = vrot.slane %v1983, 4
      %v1986 = vshll.u32 %v1925, 16
      %v1988 = vrot.slane %v1986, 5
      %v1989 = vsel %vm1674, %v1984, %v1988
      %v1991 = vshrl.u32 %v1926, 16
      %v1993 = vrot.slane %v1991, 4
      %v1994 = vshll.u32 %v1926, 16
      %v1996 = vrot.slane %v1994, 5
      %v1997 = vor.u32 %v1993, %v1996
      %v1998 = vrot.slane %v1997, 4
      %v2000 = vshll.u32 %v1927, 16
      %v2002 = vrot.slane %v2000, 5
      %v2003 = vsel %vm1674, %v1998, %v2002
      %v2005 = vshrl.u32 %v1928, 16
      %v2007 = vrot.slane %v2005, 4
      %v2008 = vshll.u32 %v1928, 16
      %v2010 = vrot.slane %v2008, 5
      %v2011 = vor.u32 %v2007, %v2010
      %v2012 = vrot.slane %v2011, 4
      %v2014 = vshll.u32 %v1929, 16
      %v2016 = vrot.slane %v2014, 5
      %v2017 = vsel %vm1674, %v2012, %v2016
      %v2019 = vshrl.u32 %v1930, 16
      %v2021 = vrot.slane %v2019, 4
      %v2022 = vshll.u32 %v1930, 16
      %v2024 = vrot.slane %v2022, 5
      %v2025 = vor.u32 %v2021, %v2024
      %v2026 = vrot.slane %v2025, 4
      %v2028 = vshll.u32 %v1931, 16
      %v2030 = vrot.slane %v2028, 5
      %v2031 = vsel %vm1674, %v2026, %v2030
      %v2033 = vshrl.u32 %v1932, 16
      %v2035 = vrot.slane %v2033, 4
      %v2036 = vshll.u32 %v1932, 16
      %v2038 = vrot.slane %v2036, 5
      %v2039 = vor.u32 %v2035, %v2038
      %v2040 = vrot.slane %v2039, 4
      %v2042 = vshll.u32 %v1933, 16
      %v2044 = vrot.slane %v2042, 5
      %v2045 = vsel %vm1674, %v2040, %v2044
      %2046 = vrot.lane.b32.xlu0 %v1947, 10
      %v2047 = vpop.permute.xlu0 %2046
      %2048 = vrot.lane.b32.xlu0 %v1961, 10
      %v2049 = vpop.permute.xlu0 %2048
      %2050 = vrot.lane.b32.xlu0 %v1975, 10
      %v2051 = vpop.permute.xlu0 %2050
      %2052 = vrot.lane.b32.xlu0 %v1989, 10
      %v2053 = vpop.permute.xlu0 %2052
      %2054 = vrot.lane.b32.xlu0 %v2003, 10
      %v2055 = vpop.permute.xlu0 %2054
      %2056 = vrot.lane.b32.xlu0 %v2017, 10
      %v2057 = vpop.permute.xlu0 %2056
      %2058 = vrot.lane.b32.xlu0 %v2031, 10
      %v2059 = vpop.permute.xlu0 %2058
      %2060 = vrot.lane.b32.xlu0 %v2045, 10
      %v2061 = vpop.permute.xlu0 %2060
      %vm2070 = vcmask 93264
      %2071 = vst.msk [vmem:[#allocation4] sm:$0xf] %vm2070, %v2047
      %2072 = vst.msk [vmem:[#allocation4 + $0x4] sm:$0xf] %vm2070, %v2049
      %2073 = vst.msk [vmem:[#allocation4 + $0x8] sm:$0xf] %vm2070, %v2051
      %2074 = vst.msk [vmem:[#allocation4 + $0xc] sm:$0xf] %vm2070, %v2053
      %2075 = vst.msk [vmem:[#allocation4 + $0x10] sm:$0xf] %vm2070, %v2055
      %2076 = vst.msk [vmem:[#allocation4 + $0x14] sm:$0xf] %vm2070, %v2057
      %2077 = vst.msk [vmem:[#allocation4 + $0x18] sm:$0xf] %vm2070, %v2059
      %2078 = vst.msk [vmem:[#allocation4 + $0x1c] sm:$0xf] %vm2070, %v2061
      %v2079 = vld [vmem:[%s1152] sm:$0xf]
      %v2080 = vld [vmem:[%s1152 + $0x8] sm:$0xf]
      %v2081 = vld [vmem:[%s1152 + $0x10] sm:$0xf]
      %v2082 = vld [vmem:[%s1152 + $0x18] sm:$0xf]
      %v2083 = vld [vmem:[%s1152 + $0x20] sm:$0xf]
      %v2084 = vld [vmem:[%s1152 + $0x28] sm:$0xf]
      %v2085 = vld [vmem:[%s1152 + $0x30] sm:$0xf]
      %v2086 = vld [vmem:[%s1152 + $0x38] sm:$0xf]
      %2095 = vrot.lane.b32.xlu0 %v2079, 12
      %v2096 = vpop.permute.xlu0 %2095
      %2097 = vrot.lane.b32.xlu0 %v2080, 12
      %v2098 = vpop.permute.xlu0 %2097
      %2099 = vrot.lane.b32.xlu0 %v2081, 12
      %v2100 = vpop.permute.xlu0 %2099
      %2101 = vrot.lane.b32.xlu0 %v2082, 12
      %v2102 = vpop.permute.xlu0 %2101
      %2103 = vrot.lane.b32.xlu0 %v2083, 12
      %v2104 = vpop.permute.xlu0 %2103
      %2105 = vrot.lane.b32.xlu0 %v2084, 12
      %v2106 = vpop.permute.xlu0 %2105
      %2107 = vrot.lane.b32.xlu0 %v2085, 12
      %v2108 = vpop.permute.xlu0 %2107
      %2109 = vrot.lane.b32.xlu0 %v2086, 12
      %v2110 = vpop.permute.xlu0 %2109
      %vm2119 = vcmask 109664
      %2120 = vst.msk [vmem:[#allocation4] sm:$0xf] %vm2119, %v2096
      %2121 = vst.msk [vmem:[#allocation4 + $0x4] sm:$0xf] %vm2119, %v2098
      %2122 = vst.msk [vmem:[#allocation4 + $0x8] sm:$0xf] %vm2119, %v2100
      %2123 = vst.msk [vmem:[#allocation4 + $0xc] sm:$0xf] %vm2119, %v2102
      %2124 = vst.msk [vmem:[#allocation4 + $0x10] sm:$0xf] %vm2119, %v2104
      %2125 = vst.msk [vmem:[#allocation4 + $0x14] sm:$0xf] %vm2119, %v2106
      %2126 = vst.msk [vmem:[#allocation4 + $0x18] sm:$0xf] %vm2119, %v2108
      %2127 = vst.msk [vmem:[#allocation4 + $0x1c] sm:$0xf] %vm2119, %v2110
      %v2128 = vld [vmem:[%s1046] sm:$0xf]
      %v2129 = vld [vmem:[%s1046 + $0x8] sm:$0xf]
      %v2130 = vld [vmem:[%s1046 + $0x10] sm:$0xf]
      %v2131 = vld [vmem:[%s1046 + $0x18] sm:$0xf]
      %v2132 = vld [vmem:[%s1046 + $0x20] sm:$0xf]
      %v2133 = vld [vmem:[%s1046 + $0x28] sm:$0xf]
      %v2134 = vld [vmem:[%s1046 + $0x30] sm:$0xf]
      %v2135 = vld [vmem:[%s1046 + $0x38] sm:$0xf]
      %2144 = vrot.lane.b32.xlu0 %v2128, 14
      %v2145 = vpop.permute.xlu0 %2144
      %2146 = vrot.lane.b32.xlu0 %v2129, 14
      %v2147 = vpop.permute.xlu0 %2146
      %2148 = vrot.lane.b32.xlu0 %v2130, 14
      %v2149 = vpop.permute.xlu0 %2148
      %2150 = vrot.lane.b32.xlu0 %v2131, 14
      %v2151 = vpop.permute.xlu0 %2150
      %2152 = vrot.lane.b32.xlu0 %v2132, 14
      %v2153 = vpop.permute.xlu0 %2152
      %2154 = vrot.lane.b32.xlu0 %v2133, 14
      %v2155 = vpop.permute.xlu0 %2154
      %2156 = vrot.lane.b32.xlu0 %v2134, 14
      %v2157 = vpop.permute.xlu0 %2156
      %2158 = vrot.lane.b32.xlu0 %v2135, 14
      %v2159 = vpop.permute.xlu0 %2158
      %vm2168 = vcmask 126064
      %2169 = vst.msk [vmem:[#allocation4] sm:$0xf] %vm2168, %v2145
      %2170 = vst.msk [vmem:[#allocation4 + $0x4] sm:$0xf] %vm2168, %v2147
      %2171 = vst.msk [vmem:[#allocation4 + $0x8] sm:$0xf] %vm2168, %v2149
      %2172 = vst.msk [vmem:[#allocation4 + $0xc] sm:$0xf] %vm2168, %v2151
      %2173 = vst.msk [vmem:[#allocation4 + $0x10] sm:$0xf] %vm2168, %v2153
      %2174 = vst.msk [vmem:[#allocation4 + $0x14] sm:$0xf] %vm2168, %v2155
      %2175 = vst.msk [vmem:[#allocation4 + $0x18] sm:$0xf] %vm2168, %v2157
      %2176 = vst.msk [vmem:[#allocation4 + $0x1c] sm:$0xf] %vm2168, %v2159
      %v2177 = vld [vmem:[%s1152] sm:$0xf]
      %v2178 = vld [vmem:[%s1152 + $0x4] sm:$0x1]
      %v2179 = vld [vmem:[%s1152 + $0x8] sm:$0xf]
      %v2180 = vld [vmem:[%s1152 + $0xc] sm:$0x1]
      %v2181 = vld [vmem:[%s1152 + $0x10] sm:$0xf]
      %v2182 = vld [vmem:[%s1152 + $0x14] sm:$0x1]
      %v2183 = vld [vmem:[%s1152 + $0x18] sm:$0xf]
      %v2184 = vld [vmem:[%s1152 + $0x1c] sm:$0x1]
      %v2185 = vld [vmem:[%s1152 + $0x20] sm:$0xf]
      %v2186 = vld [vmem:[%s1152 + $0x24] sm:$0x1]
      %v2187 = vld [vmem:[%s1152 + $0x28] sm:$0xf]
      %v2188 = vld [vmem:[%s1152 + $0x2c] sm:$0x1]
      %v2189 = vld [vmem:[%s1152 + $0x30] sm:$0xf]
      %v2190 = vld [vmem:[%s1152 + $0x34] sm:$0x1]
      %v2191 = vld [vmem:[%s1152 + $0x38] sm:$0xf]
      %v2192 = vld [vmem:[%s1152 + $0x3c] sm:$0x1]
      %v2194 = vshrl.u32 %v2177, 16
      %v2196 = vrot.slane %v2194, 4
      %v2197 = vshll.u32 %v2177, 16
      %v2199 = vrot.slane %v2197, 5
      %v2200 = vor.u32 %v2196, %v2199
      %v2201 = vrot.slane %v2200, 4
      %v2203 = vshll.u32 %v2178, 16
      %v2205 = vrot.slane %v2203, 5
      %v2206 = vsel %vm1674, %v2201, %v2205
      %v2208 = vshrl.u32 %v2179, 16
      %v2210 = vrot.slane %v2208, 4
      %v2211 = vshll.u32 %v2179, 16
      %v2213 = vrot.slane %v2211, 5
      %v2214 = vor.u32 %v2210, %v2213
      %v2215 = vrot.slane %v2214, 4
      %v2217 = vshll.u32 %v2180, 16
      %v2219 = vrot.slane %v2217, 5
      %v2220 = vsel %vm1674, %v2215, %v2219
      %v2222 = vshrl.u32 %v2181, 16
      %v2224 = vrot.slane %v2222, 4
      %v2225 = vshll.u32 %v2181, 16
      %v2227 = vrot.slane %v2225, 5
      %v2228 = vor.u32 %v2224, %v2227
      %v2229 = vrot.slane %v2228, 4
      %v2231 = vshll.u32 %v2182, 16
      %v2233 = vrot.slane %v2231, 5
      %v2234 = vsel %vm1674, %v2229, %v2233
      %v2236 = vshrl.u32 %v2183, 16
      %v2238 = vrot.slane %v2236, 4
      %v2239 = vshll.u32 %v2183, 16
      %v2241 = vrot.slane %v2239, 5
      %v2242 = vor.u32 %v2238, %v2241
      %v2243 = vrot.slane %v2242, 4
      %v2245 = vshll.u32 %v2184, 16
      %v2247 = vrot.slane %v2245, 5
      %v2248 = vsel %vm1674, %v2243, %v2247
      %v2250 = vshrl.u32 %v2185, 16
      %v2252 = vrot.slane %v2250, 4
      %v2253 = vshll.u32 %v2185, 16
      %v2255 = vrot.slane %v2253, 5
      %v2256 = vor.u32 %v2252, %v2255
      %v2257 = vrot.slane %v2256, 4
      %v2259 = vshll.u32 %v2186, 16
      %v2261 = vrot.slane %v2259, 5
      %v2262 = vsel %vm1674, %v2257, %v2261
      %v2264 = vshrl.u32 %v2187, 16
      %v2266 = vrot.slane %v2264, 4
      %v2267 = vshll.u32 %v2187, 16
      %v2269 = vrot.slane %v2267, 5
      %v2270 = vor.u32 %v2266, %v2269
      %v2271 = vrot.slane %v2270, 4
      %v2273 = vshll.u32 %v2188, 16
      %v2275 = vrot.slane %v2273, 5
      %v2276 = vsel %vm1674, %v2271, %v2275
      %v2278 = vshrl.u32 %v2189, 16
      %v2280 = vrot.slane %v2278, 4
      %v2281 = vshll.u32 %v2189, 16
      %v2283 = vrot.slane %v2281, 5
      %v2284 = vor.u32 %v2280, %v2283
      %v2285 = vrot.slane %v2284, 4
      %v2287 = vshll.u32 %v2190, 16
      %v2289 = vrot.slane %v2287, 5
      %v2290 = vsel %vm1674, %v2285, %v2289
      %v2292 = vshrl.u32 %v2191, 16
      %v2294 = vrot.slane %v2292, 4
      %v2295 = vshll.u32 %v2191, 16
      %v2297 = vrot.slane %v2295, 5
      %v2298 = vor.u32 %v2294, %v2297
      %v2299 = vrot.slane %v2298, 4
      %v2301 = vshll.u32 %v2192, 16
      %v2303 = vrot.slane %v2301, 5
      %v2304 = vsel %vm1674, %v2299, %v2303
      %2305 = vrot.lane.b32.xlu0 %v2206, 16
      %v2306 = vpop.permute.xlu0 %2305
      %2307 = vrot.lane.b32.xlu0 %v2220, 16
      %v2308 = vpop.permute.xlu0 %2307
      %2309 = vrot.lane.b32.xlu0 %v2234, 16
      %v2310 = vpop.permute.xlu0 %2309
      %2311 = vrot.lane.b32.xlu0 %v2248, 16
      %v2312 = vpop.permute.xlu0 %2311
      %2313 = vrot.lane.b32.xlu0 %v2262, 16
      %v2314 = vpop.permute.xlu0 %2313
      %2315 = vrot.lane.b32.xlu0 %v2276, 16
      %v2316 = vpop.permute.xlu0 %2315
      %2317 = vrot.lane.b32.xlu0 %v2290, 16
      %v2318 = vpop.permute.xlu0 %2317
      %2319 = vrot.lane.b32.xlu0 %v2304, 16
      %v2320 = vpop.permute.xlu0 %2319
      %vm2329 = vcmask 142464
      %2330 = vst.msk [vmem:[#allocation4] sm:$0xf] %vm2329, %v2306
      %2331 = vst.msk [vmem:[#allocation4 + $0x4] sm:$0xf] %vm2329, %v2308
      %2332 = vst.msk [vmem:[#allocation4 + $0x8] sm:$0xf] %vm2329, %v2310
      %2333 = vst.msk [vmem:[#allocation4 + $0xc] sm:$0xf] %vm2329, %v2312
      %2334 = vst.msk [vmem:[#allocation4 + $0x10] sm:$0xf] %vm2329, %v2314
      %2335 = vst.msk [vmem:[#allocation4 + $0x14] sm:$0xf] %vm2329, %v2316
      %2336 = vst.msk [vmem:[#allocation4 + $0x18] sm:$0xf] %vm2329, %v2318
      %2337 = vst.msk [vmem:[#allocation4 + $0x1c] sm:$0xf] %vm2329, %v2320
      %v2338 = vld [vmem:[#allocation4] sm:$0xf]
      %v2339 = vld [vmem:[#allocation4 + $0x4] sm:$0xf]
      %v2340 = vld [vmem:[#allocation4 + $0x8] sm:$0xf]
      %v2341 = vld [vmem:[#allocation4 + $0xc] sm:$0xf]
      %v2342 = vld [vmem:[#allocation4 + $0x10] sm:$0xf]
      %v2343 = vld [vmem:[#allocation4 + $0x14] sm:$0xf]
      %v2344 = vld [vmem:[#allocation4 + $0x18] sm:$0xf]
      %v2345 = vld [vmem:[#allocation4 + $0x1c] sm:$0xf]
      %v2354 = vunpack.c.l.b16 %v2338
      %v2355 = vunpack.c.l.b16 %v2339
      %v2356 = vunpack.c.l.b16 %v2340
      %v2357 = vunpack.c.l.b16 %v2341
      %v2358 = vunpack.c.l.b16 %v2342
      %v2359 = vunpack.c.l.b16 %v2343
      %v2360 = vunpack.c.l.b16 %v2344
      %v2361 = vunpack.c.l.b16 %v2345
      %v2362 = vpack.c.b16 %v2355, %v2354
      %v2363 = vpack.c.b16 %v2357, %v2356
      %v2364 = vpack.c.b16 %v2359, %v2358
      %v2365 = vpack.c.b16 %v2361, %v2360
      %v2369 = vunpack.c.l.b16 %v749
      %v2370 = vunpack.c.l.b16 %v750
      %v2371 = vunpack.c.l.b16 %v751
      %v2372 = vpack.c.b16 %v2370, %v2369
      %v2373 = vpack.c.b16 %v2371, %v2371
      %vm2375 = vcmask 146432
      %v2377 = vsel %vm2375, %v2362, 0
      %v2380 = vsel %vm2375, %v2363, 0
      %v2383 = vsel %vm2375, %v2364, 0
      %v2386 = vsel %vm2375, %v2365, 0
      %vm2388 = vcmask 1040384
      %v2390 = vsel %vm2388, %v2373, 0
      %2392 = vmatpush.bf16.msra.mxu0 0
      %2393 = vmatpush.bf16.msra.mxu0 0
      %2394 = vmatpush.bf16.msra.mxu0 0
      %2395 = vmatpush.bf16.msra.mxu0 0
      %2396 = vmatpush.bf16.msra.mxu0 0
      %2397 = vmatpush.bf16.msra.mxu0 0
      %2398 = vmatpush.bf16.msra.mxu0 %v2390
      %2399 = vmatpush.bf16.msra.mxu0 %v2372
      %2400 = vmatmul.bf16.gmra.mxu0 %v2377
      %v2401 = vpop.f32.mrf.mxu0
      %v2402 = vadd.f32 0.0, %v2401
      %v2403 = vpop.f32.mrf.mxu0
      %v2404 = vadd.f32 0.0, %v2403
      %2405 = vmatmul.bf16.gmra.mxu0 %v2380
      %v2406 = vpop.f32.mrf.mxu0
      %v2407 = vadd.f32 0.0, %v2406
      %v2408 = vpop.f32.mrf.mxu0
      %v2409 = vadd.f32 0.0, %v2408
      %2410 = vmatmul.bf16.gmra.mxu0 %v2383
      %v2411 = vpop.f32.mrf.mxu0
      %v2412 = vadd.f32 0.0, %v2411
      %v2413 = vpop.f32.mrf.mxu0
      %v2414 = vadd.f32 0.0, %v2413
      %2415 = vmatmul.bf16.gmra.mxu0 %v2386
      %v2416 = vpop.f32.mrf.mxu0
      %v2417 = vadd.f32 0.0, %v2416
      %v2418 = vpop.f32.mrf.mxu0
      %v2419 = vadd.f32 0.0, %v2418
      %2420 = vdwg.mxu0
      %v2421 = vld [vmem:[#allocation3] sm:$0xf]
      %v2422 = vld [vmem:[#allocation3 + $0x8] sm:$0xf]
      %v2423 = vld [vmem:[#allocation3 + $0x10] sm:$0xf]
      %v2424 = vld [vmem:[#allocation3 + $0x18] sm:$0xf]
      %v2425 = vld [vmem:[#allocation3 + $0x20] sm:$0xf]
      %v2426 = vld [vmem:[#allocation3 + $0x28] sm:$0xf]
      %v2427 = vld [vmem:[#allocation3 + $0x30] sm:$0xf]
      %v2428 = vld [vmem:[#allocation3 + $0x38] sm:$0xf]
      %s2429 = scalar_lea.vmem [#allocation3], 72
      %v2430 = vld [vmem:[%s2429] sm:$0xf]
      %v2431 = vld [vmem:[%s2429 + $0x8] sm:$0xf]
      %v2432 = vld [vmem:[%s2429 + $0x10] sm:$0xf]
      %v2433 = vld [vmem:[%s2429 + $0x18] sm:$0xf]
      %v2434 = vld [vmem:[%s2429 + $0x20] sm:$0xf]
      %v2435 = vld [vmem:[%s2429 + $0x28] sm:$0xf]
      %v2436 = vld [vmem:[%s2429 + $0x30] sm:$0xf]
      %v2437 = vld [vmem:[%s2429 + $0x38] sm:$0xf]
      %v2438 = vunpack.c.l.bf16 %v2421
      %v2439 = vunpack.c.l.bf16 %v2422
      %v2440 = vunpack.c.l.bf16 %v2423
      %v2441 = vunpack.c.l.bf16 %v2424
      %v2442 = vunpack.c.l.bf16 %v2425
      %v2443 = vunpack.c.l.bf16 %v2426
      %v2444 = vunpack.c.l.bf16 %v2427
      %v2445 = vunpack.c.l.bf16 %v2428
      %v2446 = vunpack.c.l.bf16 %v2430
      %v2447 = vunpack.c.l.bf16 %v2431
      %v2448 = vunpack.c.l.bf16 %v2432
      %v2449 = vunpack.c.l.bf16 %v2433
      %v2450 = vunpack.c.l.bf16 %v2434
      %v2451 = vunpack.c.l.bf16 %v2435
      %v2452 = vunpack.c.l.bf16 %v2436
      %v2453 = vunpack.c.l.bf16 %v2437
      %v2454 = vmax.f32 %v2438, %v2446
      %v2455 = vmax.f32 %v2439, %v2447
      %v2456 = vmax.f32 %v2440, %v2448
      %v2457 = vmax.f32 %v2441, %v2449
      %v2458 = vmax.f32 %v2442, %v2450
      %v2459 = vmax.f32 %v2443, %v2451
      %v2460 = vmax.f32 %v2444, %v2452
      %v2461 = vmax.f32 %v2445, %v2453
      %v2462 = vpack.c.bf16 %v2454, %v2454
      %v2463 = vpack.c.bf16 %v2455, %v2455
      %v2464 = vpack.c.bf16 %v2456, %v2456
      %v2465 = vpack.c.bf16 %v2457, %v2457
      %v2466 = vpack.c.bf16 %v2458, %v2458
      %v2467 = vpack.c.bf16 %v2459, %v2459
      %v2468 = vpack.c.bf16 %v2460, %v2460
      %v2469 = vpack.c.bf16 %v2461, %v2461
      %v2470 = vld [vmem:[#allocation3 + $0x4] sm:$0x1]
      %v2471 = vld [vmem:[#allocation3 + $0xc] sm:$0x1]
      %v2472 = vld [vmem:[#allocation3 + $0x14] sm:$0x1]
      %v2473 = vld [vmem:[#allocation3 + $0x1c] sm:$0x1]
      %v2474 = vld [vmem:[#allocation3 + $0x24] sm:$0x1]
      %v2475 = vld [vmem:[#allocation3 + $0x2c] sm:$0x1]
      %v2476 = vld [vmem:[#allocation3 + $0x34] sm:$0x1]
      %v2477 = vld [vmem:[#allocation3 + $0x3c] sm:$0x1]
      %v2478 = vunpack.c.l.bf16 %v2462
      %v2479 = vunpack.c.l.bf16 %v2463
      %v2480 = vunpack.c.l.bf16 %v2464
      %v2481 = vunpack.c.l.bf16 %v2465
      %v2482 = vunpack.c.l.bf16 %v2466
      %v2483 = vunpack.c.l.bf16 %v2467
      %v2484 = vunpack.c.l.bf16 %v2468
      %v2485 = vunpack.c.l.bf16 %v2469
      %v2486 = vunpack.c.l.bf16 %v2470
      %v2487 = vunpack.c.l.bf16 %v2471
      %v2488 = vunpack.c.l.bf16 %v2472
      %v2489 = vunpack.c.l.bf16 %v2473
      %v2490 = vunpack.c.l.bf16 %v2474
      %v2491 = vunpack.c.l.bf16 %v2475
      %v2492 = vunpack.c.l.bf16 %v2476
      %v2493 = vunpack.c.l.bf16 %v2477
      %vm2510 = vcmask 1046528
      %v2511 = vrot.slane %v2438, 1
      %v2512 = vrot.slane %v2486, 1
      %v2513 = vsel %vm2510, %v2511, %v2512
      %v2514 = vrot.slane %v2439, 1
      %v2515 = vrot.slane %v2487, 1
      %v2516 = vsel %vm2510, %v2514, %v2515
      %v2517 = vrot.slane %v2440, 1
      %v2518 = vrot.slane %v2488, 1
      %v2519 = vsel %vm2510, %v2517, %v2518
      %v2520 = vrot.slane %v2441, 1
      %v2521 = vrot.slane %v2489, 1
      %v2522 = vsel %vm2510, %v2520, %v2521
      %v2523 = vrot.slane %v2442, 1
      %v2524 = vrot.slane %v2490, 1
      %v2525 = vsel %vm2510, %v2523, %v2524
      %v2526 = vrot.slane %v2443, 1
      %v2527 = vrot.slane %v2491, 1
      %v2528 = vsel %vm2510, %v2526, %v2527
      %v2529 = vrot.slane %v2444, 1
      %v2530 = vrot.slane %v2492, 1
      %v2531 = vsel %vm2510, %v2529, %v2530
      %v2532 = vrot.slane %v2445, 1
      %v2533 = vrot.slane %v2493, 1
      %v2534 = vsel %vm2510, %v2532, %v2533
      %v2543 = vmax.f32 %v2478, %v2513
      %v2544 = vmax.f32 %v2479, %v2516
      %v2545 = vmax.f32 %v2480, %v2519
      %v2546 = vmax.f32 %v2481, %v2522
      %v2547 = vmax.f32 %v2482, %v2525
      %v2548 = vmax.f32 %v2483, %v2528
      %v2549 = vmax.f32 %v2484, %v2531
      %v2550 = vmax.f32 %v2485, %v2534
      %v2551 = vpack.c.bf16 %v2543, %v2543
      %v2552 = vpack.c.bf16 %v2544, %v2544
      %v2553 = vpack.c.bf16 %v2545, %v2545
      %v2554 = vpack.c.bf16 %v2546, %v2546
      %v2555 = vpack.c.bf16 %v2547, %v2547
      %v2556 = vpack.c.bf16 %v2548, %v2548
      %v2557 = vpack.c.bf16 %v2549, %v2549
      %v2558 = vpack.c.bf16 %v2550, %v2550
      %v2559 = vld [vmem:[%s1416] sm:$0xf]
      %v2560 = vld [vmem:[%s1416 + $0x8] sm:$0xf]
      %v2561 = vld [vmem:[%s1416 + $0x10] sm:$0xf]
      %v2562 = vld [vmem:[%s1416 + $0x18] sm:$0xf]
      %v2563 = vld [vmem:[%s1416 + $0x20] sm:$0xf]
      %v2564 = vld [vmem:[%s1416 + $0x28] sm:$0xf]
      %v2565 = vld [vmem:[%s1416 + $0x30] sm:$0xf]
      %v2566 = vld [vmem:[%s1416 + $0x38] sm:$0xf]
      %v2567 = vunpack.c.l.bf16 %v2551
      %v2568 = vunpack.c.l.bf16 %v2552
      %v2569 = vunpack.c.l.bf16 %v2553
      %v2570 = vunpack.c.l.bf16 %v2554
      %v2571 = vunpack.c.l.bf16 %v2555
      %v2572 = vunpack.c.l.bf16 %v2556
      %v2573 = vunpack.c.l.bf16 %v2557
      %v2574 = vunpack.c.l.bf16 %v2558
      %v2575 = vunpack.c.l.bf16 %v2559
      %v2576 = vunpack.c.l.bf16 %v2560
      %v2577 = vunpack.c.l.bf16 %v2561
      %v2578 = vunpack.c.l.bf16 %v2562
      %v2579 = vunpack.c.l.bf16 %v2563
      %v2580 = vunpack.c.l.bf16 %v2564
      %v2581 = vunpack.c.l.bf16 %v2565
      %v2582 = vunpack.c.l.bf16 %v2566
      %v2583 = vmax.f32 %v2567, %v2575
      %v2584 = vmax.f32 %v2568, %v2576
      %v2585 = vmax.f32 %v2569, %v2577
      %v2586 = vmax.f32 %v2570, %v2578
      %v2587 = vmax.f32 %v2571, %v2579
      %v2588 = vmax.f32 %v2572, %v2580
      %v2589 = vmax.f32 %v2573, %v2581
      %v2590 = vmax.f32 %v2574, %v2582
      %v2591 = vpack.c.bf16 %v2583, %v2583
      %v2592 = vpack.c.bf16 %v2584, %v2584
      %v2593 = vpack.c.bf16 %v2585, %v2585
      %v2594 = vpack.c.bf16 %v2586, %v2586
      %v2595 = vpack.c.bf16 %v2587, %v2587
      %v2596 = vpack.c.bf16 %v2588, %v2588
      %v2597 = vpack.c.bf16 %v2589, %v2589
      %v2598 = vpack.c.bf16 %v2590, %v2590
      %v2599 = vld [vmem:[%s1295] sm:$0xf]
      %v2600 = vld [vmem:[%s1295 + $0x8] sm:$0xf]
      %v2601 = vld [vmem:[%s1295 + $0x10] sm:$0xf]
      %v2602 = vld [vmem:[%s1295 + $0x18] sm:$0xf]
      %v2603 = vld [vmem:[%s1295 + $0x20] sm:$0xf]
      %v2604 = vld [vmem:[%s1295 + $0x28] sm:$0xf]
      %v2605 = vld [vmem:[%s1295 + $0x30] sm:$0xf]
      %v2606 = vld [vmem:[%s1295 + $0x38] sm:$0xf]
      %v2607 = vunpack.c.l.bf16 %v2591
      %v2608 = vunpack.c.l.bf16 %v2592
      %v2609 = vunpack.c.l.bf16 %v2593
      %v2610 = vunpack.c.l.bf16 %v2594
      %v2611 = vunpack.c.l.bf16 %v2595
      %v2612 = vunpack.c.l.bf16 %v2596
      %v2613 = vunpack.c.l.bf16 %v2597
      %v2614 = vunpack.c.l.bf16 %v2598
      %v2615 = vunpack.c.l.bf16 %v2599
      %v2616 = vunpack.c.l.bf16 %v2600
      %v2617 = vunpack.c.l.bf16 %v2601
      %v2618 = vunpack.c.l.bf16 %v2602
      %v2619 = vunpack.c.l.bf16 %v2603
      %v2620 = vunpack.c.l.bf16 %v2604
      %v2621 = vunpack.c.l.bf16 %v2605
      %v2622 = vunpack.c.l.bf16 %v2606
      %v2623 = vmax.f32 %v2607, %v2615
      %v2624 = vmax.f32 %v2608, %v2616
      %v2625 = vmax.f32 %v2609, %v2617
      %v2626 = vmax.f32 %v2610, %v2618
      %v2627 = vmax.f32 %v2611, %v2619
      %v2628 = vmax.f32 %v2612, %v2620
      %v2629 = vmax.f32 %v2613, %v2621
      %v2630 = vmax.f32 %v2614, %v2622
      %v2631 = vpack.c.bf16 %v2623, %v2623
      %v2632 = vpack.c.bf16 %v2624, %v2624
      %v2633 = vpack.c.bf16 %v2625, %v2625
      %v2634 = vpack.c.bf16 %v2626, %v2626
      %v2635 = vpack.c.bf16 %v2627, %v2627
      %v2636 = vpack.c.bf16 %v2628, %v2628
      %v2637 = vpack.c.bf16 %v2629, %v2629
      %v2638 = vpack.c.bf16 %v2630, %v2630
      %v2639 = vld [vmem:[%s1416 + $0x4] sm:$0x1]
      %v2640 = vld [vmem:[%s1416 + $0xc] sm:$0x1]
      %v2641 = vld [vmem:[%s1416 + $0x14] sm:$0x1]
      %v2642 = vld [vmem:[%s1416 + $0x1c] sm:$0x1]
      %v2643 = vld [vmem:[%s1416 + $0x24] sm:$0x1]
      %v2644 = vld [vmem:[%s1416 + $0x2c] sm:$0x1]
      %v2645 = vld [vmem:[%s1416 + $0x34] sm:$0x1]
      %v2646 = vld [vmem:[%s1416 + $0x3c] sm:$0x1]
      %v2647 = vunpack.c.l.bf16 %v2631
      %v2648 = vunpack.c.l.bf16 %v2632
      %v2649 = vunpack.c.l.bf16 %v2633
      %v2650 = vunpack.c.l.bf16 %v2634
      %v2651 = vunpack.c.l.bf16 %v2635
      %v2652 = vunpack.c.l.bf16 %v2636
      %v2653 = vunpack.c.l.bf16 %v2637
      %v2654 = vunpack.c.l.bf16 %v2638
      %v2655 = vunpack.c.l.bf16 %v2639
      %v2656 = vunpack.c.l.bf16 %v2640
      %v2657 = vunpack.c.l.bf16 %v2641
      %v2658 = vunpack.c.l.bf16 %v2642
      %v2659 = vunpack.c.l.bf16 %v2643
      %v2660 = vunpack.c.l.bf16 %v2644
      %v2661 = vunpack.c.l.bf16 %v2645
      %v2662 = vunpack.c.l.bf16 %v2646
      %v2679 = vrot.slane %v2575, 1
      %v2680 = vrot.slane %v2655, 1
      %v2681 = vsel %vm2510, %v2679, %v2680
      %v2682 = vrot.slane %v2576, 1
      %v2683 = vrot.slane %v2656, 1
      %v2684 = vsel %vm2510, %v2682, %v2683
      %v2685 = vrot.slane %v2577, 1
      %v2686 = vrot.slane %v2657, 1
      %v2687 = vsel %vm2510, %v2685, %v2686
      %v2688 = vrot.slane %v2578, 1
      %v2689 = vrot.slane %v2658, 1
      %v2690 = vsel %vm2510, %v2688, %v2689
      %v2691 = vrot.slane %v2579, 1
      %v2692 = vrot.slane %v2659, 1
      %v2693 = vsel %vm2510, %v2691, %v2692
      %v2694 = vrot.slane %v2580, 1
      %v2695 = vrot.slane %v2660, 1
      %v2696 = vsel %vm2510, %v2694, %v2695
      %v2697 = vrot.slane %v2581, 1
      %v2698 = vrot.slane %v2661, 1
      %v2699 = vsel %vm2510, %v2697, %v2698
      %v2700 = vrot.slane %v2582, 1
      %v2701 = vrot.slane %v2662, 1
      %v2702 = vsel %vm2510, %v2700, %v2701
      %v2711 = vmax.f32 %v2647, %v2681
      %v2712 = vmax.f32 %v2648, %v2684
      %v2713 = vmax.f32 %v2649, %v2687
      %v2714 = vmax.f32 %v2650, %v2690
      %v2715 = vmax.f32 %v2651, %v2693
      %v2716 = vmax.f32 %v2652, %v2696
      %v2717 = vmax.f32 %v2653, %v2699
      %v2718 = vmax.f32 %v2654, %v2702
      %v2719 = vpack.c.bf16 %v2711, %v2711
      %v2720 = vpack.c.bf16 %v2712, %v2712
      %v2721 = vpack.c.bf16 %v2713, %v2713
      %v2722 = vpack.c.bf16 %v2714, %v2714
      %v2723 = vpack.c.bf16 %v2715, %v2715
      %v2724 = vpack.c.bf16 %v2716, %v2716
      %v2725 = vpack.c.bf16 %v2717, %v2717
      %v2726 = vpack.c.bf16 %v2718, %v2718
      %v2727 = vld [vmem:[%s1568] sm:$0xf]
      %v2728 = vld [vmem:[%s1568 + $0x8] sm:$0xf]
      %v2729 = vld [vmem:[%s1568 + $0x10] sm:$0xf]
      %v2730 = vld [vmem:[%s1568 + $0x18] sm:$0xf]
      %v2731 = vld [vmem:[%s1568 + $0x20] sm:$0xf]
      %v2732 = vld [vmem:[%s1568 + $0x28] sm:$0xf]
      %v2733 = vld [vmem:[%s1568 + $0x30] sm:$0xf]
      %v2734 = vld [vmem:[%s1568 + $0x38] sm:$0xf]
      %v2735 = vunpack.c.l.bf16 %v2719
      %v2736 = vunpack.c.l.bf16 %v2720
      %v2737 = vunpack.c.l.bf16 %v2721
      %v2738 = vunpack.c.l.bf16 %v2722
      %v2739 = vunpack.c.l.bf16 %v2723
      %v2740 = vunpack.c.l.bf16 %v2724
      %v2741 = vunpack.c.l.bf16 %v2725
      %v2742 = vunpack.c.l.bf16 %v2726
      %v2743 = vunpack.c.l.bf16 %v2727
      %v2744 = vunpack.c.l.bf16 %v2728
      %v2745 = vunpack.c.l.bf16 %v2729
      %v2746 = vunpack.c.l.bf16 %v2730
      %v2747 = vunpack.c.l.bf16 %v2731
      %v2748 = vunpack.c.l.bf16 %v2732
      %v2749 = vunpack.c.l.bf16 %v2733
      %v2750 = vunpack.c.l.bf16 %v2734
      %v2751 = vmax.f32 %v2735, %v2743
      %v2752 = vmax.f32 %v2736, %v2744
      %v2753 = vmax.f32 %v2737, %v2745
      %v2754 = vmax.f32 %v2738, %v2746
      %v2755 = vmax.f32 %v2739, %v2747
      %v2756 = vmax.f32 %v2740, %v2748
      %v2757 = vmax.f32 %v2741, %v2749
      %v2758 = vmax.f32 %v2742, %v2750
      %v2759 = vpack.c.bf16 %v2751, %v2751
      %v2760 = vpack.c.bf16 %v2752, %v2752
      %v2761 = vpack.c.bf16 %v2753, %v2753
      %v2762 = vpack.c.bf16 %v2754, %v2754
      %v2763 = vpack.c.bf16 %v2755, %v2755
      %v2764 = vpack.c.bf16 %v2756, %v2756
      %v2765 = vpack.c.bf16 %v2757, %v2757
      %v2766 = vpack.c.bf16 %v2758, %v2758
      %v2767 = vld [vmem:[%s1462] sm:$0xf]
      %v2768 = vld [vmem:[%s1462 + $0x8] sm:$0xf]
      %v2769 = vld [vmem:[%s1462 + $0x10] sm:$0xf]
      %v2770 = vld [vmem:[%s1462 + $0x18] sm:$0xf]
      %v2771 = vld [vmem:[%s1462 + $0x20] sm:$0xf]
      %v2772 = vld [vmem:[%s1462 + $0x28] sm:$0xf]
      %v2773 = vld [vmem:[%s1462 + $0x30] sm:$0xf]
      %v2774 = vld [vmem:[%s1462 + $0x38] sm:$0xf]
      %v2775 = vunpack.c.l.bf16 %v2759
      %v2776 = vunpack.c.l.bf16 %v2760
      %v2777 = vunpack.c.l.bf16 %v2761
      %v2778 = vunpack.c.l.bf16 %v2762
      %v2779 = vunpack.c.l.bf16 %v2763
      %v2780 = vunpack.c.l.bf16 %v2764
      %v2781 = vunpack.c.l.bf16 %v2765
      %v2782 = vunpack.c.l.bf16 %v2766
      %v2783 = vunpack.c.l.bf16 %v2767
      %v2784 = vunpack.c.l.bf16 %v2768
      %v2785 = vunpack.c.l.bf16 %v2769
      %v2786 = vunpack.c.l.bf16 %v2770
      %v2787 = vunpack.c.l.bf16 %v2771
      %v2788 = vunpack.c.l.bf16 %v2772
      %v2789 = vunpack.c.l.bf16 %v2773
      %v2790 = vunpack.c.l.bf16 %v2774
      %v2791 = vmax.f32 %v2775, %v2783
      %v2792 = vmax.f32 %v2776, %v2784
      %v2793 = vmax.f32 %v2777, %v2785
      %v2794 = vmax.f32 %v2778, %v2786
      %v2795 = vmax.f32 %v2779, %v2787
      %v2796 = vmax.f32 %v2780, %v2788
      %v2797 = vmax.f32 %v2781, %v2789
      %v2798 = vmax.f32 %v2782, %v2790
      %v2799 = vpack.c.bf16 %v2791, %v2791
      %v2800 = vpack.c.bf16 %v2792, %v2792
      %v2801 = vpack.c.bf16 %v2793, %v2793
      %v2802 = vpack.c.bf16 %v2794, %v2794
      %v2803 = vpack.c.bf16 %v2795, %v2795
      %v2804 = vpack.c.bf16 %v2796, %v2796
      %v2805 = vpack.c.bf16 %v2797, %v2797
      %v2806 = vpack.c.bf16 %v2798, %v2798
      %v2807 = vld [vmem:[%s1568 + $0x4] sm:$0x1]
      %v2808 = vld [vmem:[%s1568 + $0xc] sm:$0x1]
      %v2809 = vld [vmem:[%s1568 + $0x14] sm:$0x1]
      %v2810 = vld [vmem:[%s1568 + $0x1c] sm:$0x1]
      %v2811 = vld [vmem:[%s1568 + $0x24] sm:$0x1]
      %v2812 = vld [vmem:[%s1568 + $0x2c] sm:$0x1]
      %v2813 = vld [vmem:[%s1568 + $0x34] sm:$0x1]
      %v2814 = vld [vmem:[%s1568 + $0x3c] sm:$0x1]
      %v2815 = vunpack.c.l.bf16 %v2799
      %v2816 = vunpack.c.l.bf16 %v2800
      %v2817 = vunpack.c.l.bf16 %v2801
      %v2818 = vunpack.c.l.bf16 %v2802
      %v2819 = vunpack.c.l.bf16 %v2803
      %v2820 = vunpack.c.l.bf16 %v2804
      %v2821 = vunpack.c.l.bf16 %v2805
      %v2822 = vunpack.c.l.bf16 %v2806
      %v2823 = vunpack.c.l.bf16 %v2807
      %v2824 = vunpack.c.l.bf16 %v2808
      %v2825 = vunpack.c.l.bf16 %v2809
      %v2826 = vunpack.c.l.bf16 %v2810
      %v2827 = vunpack.c.l.bf16 %v2811
      %v2828 = vunpack.c.l.bf16 %v2812
      %v2829 = vunpack.c.l.bf16 %v2813
      %v2830 = vunpack.c.l.bf16 %v2814
      %v2847 = vrot.slane %v2743, 1
      %v2848 = vrot.slane %v2823, 1
      %v2849 = vsel %vm2510, %v2847, %v2848
      %v2850 = vrot.slane %v2744, 1
      %v2851 = vrot.slane %v2824, 1
      %v2852 = vsel %vm2510, %v2850, %v2851
      %v2853 = vrot.slane %v2745, 1
      %v2854 = vrot.slane %v2825, 1
      %v2855 = vsel %vm2510, %v2853, %v2854
      %v2856 = vrot.slane %v2746, 1
      %v2857 = vrot.slane %v2826, 1
      %v2858 = vsel %vm2510, %v2856, %v2857
      %v2859 = vrot.slane %v2747, 1
      %v2860 = vrot.slane %v2827, 1
      %v2861 = vsel %vm2510, %v2859, %v2860
      %v2862 = vrot.slane %v2748, 1
      %v2863 = vrot.slane %v2828, 1
      %v2864 = vsel %vm2510, %v2862, %v2863
      %v2865 = vrot.slane %v2749, 1
      %v2866 = vrot.slane %v2829, 1
      %v2867 = vsel %vm2510, %v2865, %v2866
      %v2868 = vrot.slane %v2750, 1
      %v2869 = vrot.slane %v2830, 1
      %v2870 = vsel %vm2510, %v2868, %v2869
      %v2879 = vmax.f32 %v2815, %v2849
      %v2880 = vmax.f32 %v2816, %v2852
      %v2881 = vmax.f32 %v2817, %v2855
      %v2882 = vmax.f32 %v2818, %v2858
      %v2883 = vmax.f32 %v2819, %v2861
      %v2884 = vmax.f32 %v2820, %v2864
      %v2885 = vmax.f32 %v2821, %v2867
      %v2886 = vmax.f32 %v2822, %v2870
      %v2887 = vpack.c.bf16 %v2879, %v2879
      %v2888 = vpack.c.bf16 %v2880, %v2880
      %v2889 = vpack.c.bf16 %v2881, %v2881
      %v2890 = vpack.c.bf16 %v2882, %v2882
      %v2891 = vpack.c.bf16 %v2883, %v2883
      %v2892 = vpack.c.bf16 %v2884, %v2884
      %v2893 = vpack.c.bf16 %v2885, %v2885
      %v2894 = vpack.c.bf16 %v2886, %v2886
      %v2903 = vunpack.c.l.b16 %v2887
      %v2904 = vunpack.c.l.b16 %v2888
      %v2905 = vunpack.c.l.b16 %v2889
      %v2906 = vunpack.c.l.b16 %v2890
      %v2907 = vunpack.c.l.b16 %v2891
      %v2908 = vunpack.c.l.b16 %v2892
      %v2909 = vunpack.c.l.b16 %v2893
      %v2910 = vunpack.c.l.b16 %v2894
      %v2911 = vpack.c.b16 %v2904, %v2903
      %v2912 = vpack.c.b16 %v2906, %v2905
      %v2913 = vpack.c.b16 %v2908, %v2907
      %v2914 = vpack.c.b16 %v2910, %v2909
      %vm2915 = vcmask 15360
      %v2917 = vsel %vm2915, %v2911, 0
      %v2920 = vsel %vm2915, %v2912, 0
      %v2923 = vsel %vm2915, %v2913, 0
      %v2926 = vsel %vm2915, %v2914, 0
      %v2929 = vsel %vm2388, %v752, 0
      %2931 = vmatpush.bf16.msra.mxu0 0
      %2932 = vmatpush.bf16.msra.mxu0 0
      %2933 = vmatpush.bf16.msra.mxu0 0
      %2934 = vmatpush.bf16.msra.mxu0 0
      %2935 = vmatpush.bf16.msra.mxu0 0
      %2936 = vmatpush.bf16.msra.mxu0 0
      %2937 = vmatpush.bf16.msra.mxu0 0
      %2938 = vmatpush.bf16.msra.mxu0 %v2929
      %2939 = vmatmul.bf16.gmra.mxu0 %v2917
      %v2940 = vpop.f32.mrf.mxu0
      %v2941 = vadd.f32 0.0, %v2940
      %v2942 = vpop.f32.mrf.mxu0
      %v2943 = vadd.f32 0.0, %v2942
      %2944 = vmatmul.bf16.gmra.mxu0 %v2920
      %v2945 = vpop.f32.mrf.mxu0
      %v2946 = vadd.f32 0.0, %v2945
      %v2947 = vpop.f32.mrf.mxu0
      %v2948 = vadd.f32 0.0, %v2947
      %2949 = vmatmul.bf16.gmra.mxu0 %v2923
      %v2950 = vpop.f32.mrf.mxu0
      %v2951 = vadd.f32 0.0, %v2950
      %v2952 = vpop.f32.mrf.mxu0
      %v2953 = vadd.f32 0.0, %v2952
      %2954 = vmatmul.bf16.gmra.mxu0 %v2926
      %v2955 = vpop.f32.mrf.mxu0
      %v2956 = vadd.f32 0.0, %v2955
      %v2957 = vpop.f32.mrf.mxu0
      %v2958 = vadd.f32 0.0, %v2957
      %2959 = vdwg.mxu0
      %2968 = vrot.lane.b32.xlu0 %v2941, 4
      %v2969 = vpop.permute.xlu0 %2968
      %2970 = vrot.lane.b32.xlu0 %v2943, 4
      %v2971 = vpop.permute.xlu0 %2970
      %2972 = vrot.lane.b32.xlu0 %v2946, 4
      %v2973 = vpop.permute.xlu0 %2972
      %2974 = vrot.lane.b32.xlu0 %v2948, 4
      %v2975 = vpop.permute.xlu0 %2974
      %2976 = vrot.lane.b32.xlu0 %v2951, 4
      %v2977 = vpop.permute.xlu0 %2976
      %2978 = vrot.lane.b32.xlu0 %v2953, 4
      %v2979 = vpop.permute.xlu0 %2978
      %2980 = vrot.lane.b32.xlu0 %v2956, 4
      %v2981 = vpop.permute.xlu0 %2980
      %2982 = vrot.lane.b32.xlu0 %v2958, 4
      %v2983 = vpop.permute.xlu0 %2982
      %vm2992 = vcmask 31744
      %v2993 = vsel %vm2992, %v2402, %v2969
      %v2994 = vsel %vm2992, %v2404, %v2971
      %v2995 = vsel %vm2992, %v2407, %v2973
      %v2996 = vsel %vm2992, %v2409, %v2975
      %v2997 = vsel %vm2992, %v2412, %v2977
      %v2998 = vsel %vm2992, %v2414, %v2979
      %v2999 = vsel %vm2992, %v2417, %v2981
      %v3000 = vsel %vm2992, %v2419, %v2983
      %v3001 = vperm.slane %v753, 0
      %v3002 = vmul.f32 %v2993, %v3001
      %v3003 = vmul.f32 %v2994, %v3001
      %v3004 = vmul.f32 %v2995, %v3001
      %v3005 = vmul.f32 %v2996, %v3001
      %v3006 = vmul.f32 %v2997, %v3001
      %v3007 = vmul.f32 %v2998, %v3001
      %v3008 = vmul.f32 %v2999, %v3001
      %v3009 = vmul.f32 %v3000, %v3001
      %v3010 = vperm.slane %v754, 0
      %v3011 = vadd.f32 %v3002, %v3010
      %v3012 = vadd.f32 %v3003, %v3010
      %v3013 = vadd.f32 %v3004, %v3010
      %v3014 = vadd.f32 %v3005, %v3010
      %v3015 = vadd.f32 %v3006, %v3010
      %v3016 = vadd.f32 %v3007, %v3010
      %v3017 = vadd.f32 %v3008, %v3010
      %v3018 = vadd.f32 %v3009, %v3010
      %v3019 = vsub.f32 0.0, %v3011
      %v3020 = vsub.f32 0.0, %v3012
      %v3021 = vsub.f32 0.0, %v3013
      %v3022 = vsub.f32 0.0, %v3014
      %v3023 = vsub.f32 0.0, %v3015
      %v3024 = vsub.f32 0.0, %v3016
      %v3025 = vsub.f32 0.0, %v3017
      %v3026 = vsub.f32 0.0, %v3018
      %v3027 = vmul.f32 %v3019, 1.442695
      %v3028 = vpow.pop %v3027
      %v3029 = vmul.f32 %v3020, 1.442695
      %v3030 = vpow.pop %v3029
      %v3031 = vmul.f32 %v3021, 1.442695
      %v3032 = vpow.pop %v3031
      %v3033 = vmul.f32 %v3022, 1.442695
      %v3034 = vpow.pop %v3033
      %v3035 = vmul.f32 %v3023, 1.442695
      %v3036 = vpow.pop %v3035
      %v3037 = vmul.f32 %v3024, 1.442695
      %v3038 = vpow.pop %v3037
      %v3039 = vmul.f32 %v3025, 1.442695
      %v3040 = vpow.pop %v3039
      %v3041 = vmul.f32 %v3026, 1.442695
      %v3042 = vpow.pop %v3041
      %v3043 = vadd.f32 %v3028, 1.0
      %v3044 = vadd.f32 %v3030, 1.0
      %v3045 = vadd.f32 %v3032, 1.0
      %v3046 = vadd.f32 %v3034, 1.0
      %v3047 = vadd.f32 %v3036, 1.0
      %v3048 = vadd.f32 %v3038, 1.0
      %v3049 = vadd.f32 %v3040, 1.0
      %v3050 = vadd.f32 %v3042, 1.0
      %v3051 = vrcp.pop %v3043
      %v3052 = vrcp.pop %v3044
      %v3053 = vrcp.pop %v3045
      %v3054 = vrcp.pop %v3046
      %v3055 = vrcp.pop %v3047
      %v3056 = vrcp.pop %v3048
      %v3057 = vrcp.pop %v3049
      %v3058 = vrcp.pop %v3050
      %v3059 = vmul.f32 %v3011, %v3051
      %v3060 = vmul.f32 %v3012, %v3052
      %v3061 = vmul.f32 %v3013, %v3053
      %v3062 = vmul.f32 %v3014, %v3054
      %v3063 = vmul.f32 %v3015, %v3055
      %v3064 = vmul.f32 %v3016, %v3056
      %v3065 = vmul.f32 %v3017, %v3057
      %v3066 = vmul.f32 %v3018, %v3058
      %v3067 = vpack.c.bf16 %v3059, %v3059
      %v3068 = vpack.c.bf16 %v3060, %v3060
      %v3069 = vpack.c.bf16 %v3061, %v3061
      %v3070 = vpack.c.bf16 %v3062, %v3062
      %v3071 = vpack.c.bf16 %v3063, %v3063
      %v3072 = vpack.c.bf16 %v3064, %v3064
      %v3073 = vpack.c.bf16 %v3065, %v3065
      %v3074 = vpack.c.bf16 %v3066, %v3066
      %vm3075 = vcmask 60416
      %3076 = vst.msk [vmem:[%s244] sm:$0xf] %vm3075, %v3067
      %3077 = vst.msk [vmem:[%s244 + $0x4] sm:$0xf] %vm3075, %v3068
      %3078 = vst.msk [vmem:[%s244 + $0x8] sm:$0xf] %vm3075, %v3069
      %3079 = vst.msk [vmem:[%s244 + $0xc] sm:$0xf] %vm3075, %v3070
      %3080 = vst.msk [vmem:[%s244 + $0x10] sm:$0xf] %vm3075, %v3071
      %3081 = vst.msk [vmem:[%s244 + $0x14] sm:$0xf] %vm3075, %v3072
      %3082 = vst.msk [vmem:[%s244 + $0x18] sm:$0xf] %vm3075, %v3073
      %3083 = vst.msk [vmem:[%s244 + $0x1c] sm:$0xf] %vm3075, %v3074
      %p3084 = scmp.lt.s32.totalorder %s16, 1
      %s3085 = scalar_select %p3084, %s16, 1
      %s3086 = smul.addr %s3085, 8
      %s3087 = smul.addr %s3086, 4
      %s3088 = scalar_lea.vmem %s5, %s3087
      // Predicated region
      $region41: #{tpu_custom_call.1} parent=39 // pred_check
        %p3089 = pneg %p149
      $region42: #{tpu_custom_call.1} parent=39 // pred_check_branch
        %3091 = sbr.rel (%p3089) target = $region44
      $region43: #{tpu_custom_call.1} parent=39 // pred_region
        _
      $region44: #{tpu_custom_call.1} parent=39 // pred_fallthru
        _
    $region40: #{tpu_custom_call.1} parent=5 // pred_fallthru
      _
    %p3092 = scmp.le.s32.totalorder 2, %s11
    // Predicated region
    $region45: #{tpu_custom_call.1} parent=5 // pred_check
      %p3093 = pneg %p3092
    $region46: #{tpu_custom_call.1} parent=5 // pred_check_branch
      %3095 = sbr.rel (%p3093) target = $region48
    $region47: #{tpu_custom_call.1} parent=5 // pred_region
      %s3096 = ssub.s32 %s11, 2
      // Predicated region
      $region49: #{tpu_custom_call.1} parent=47 // pred_check
        %p3097 = pneg %p155
      $region50: #{tpu_custom_call.1} parent=47 // pred_check_branch
        %3099 = sbr.rel (%p3097) target = $region52
      $region51: #{tpu_custom_call.1} parent=47 // pred_region
        %p3100 = scmp.lt.s32.totalorder %s17, 1
        %s3101 = scalar_select %p3100, %s17, 1
        %s3102 = smul.addr %s3101, 8
        %s3103 = smul.addr %s3102, 4
        %s3104 = scalar_lea.vmem %s5, %s3103
      $region52: #{tpu_custom_call.1} parent=47 // pred_fallthru
        _
    $region48: #{tpu_custom_call.1} parent=5 // pred_fallthru
      _
  $region6: #{tpu_custom_call.1} parent=0 // loop_footer
    %s15 = sadd.s32 1, %s11
  $region7: #{tpu_custom_call.1} parent=0 // loop_footer_branch
    %10 = sbr.rel target = $region3
  $region8: #{tpu_custom_call.1} parent=0 // loop_exit
    _

</llo_original>
